<compile_context>
chip_gen: v6e
topology: v6e:2x2x1
jax: 0.10.0
libtpu: 0.0.40
codegen_flags: <defaults>
</compile_context>

<pallas_src>
import functools

import jax
import jax.numpy as jnp
from jax.experimental import pallas as pl
from jax.experimental.pallas import tpu as pltpu

LANE = 128
VMEM_LIMIT = 48 << 20  # <= v7x 64 MiB physical VMEM


def _rup(c, m=LANE):
    return ((c + m - 1) // m) * m


def _row_tile(H, W, target_rows=128):
    """Largest divisor of H such that tile*W ~ target_rows MXU rows."""
    t = max(1, min(H, target_rows // max(1, W)))
    while H % t:
        t -= 1
    return t


# ---------------------------------------------------------------------------
# Pallas kernels
# ---------------------------------------------------------------------------
def _conv3x3_kernel(x_ref, w_ref, b_ref, o_ref, *, relu):
    # x_ref: (H+2, W+2, Cin) bf16  -- spatially padded image, resident per batch elem
    # w_ref: (3, 3, Cin, Cout) bf16 ; b_ref: (1, Cout) f32 ; o_ref: (th, W, Cout) bf16
    th, W, Cout = o_ref.shape
    Cin = x_ref.shape[2]
    t = pl.program_id(1)
    h0 = pl.multiple_of(t * th, th)
    acc = jnp.zeros((th * W, Cout), jnp.float32)
    for dh in range(3):           # accumulate 9 shifted taps in-kernel (no im2col)
        for dw in range(3):
            xt = x_ref[pl.ds(h0 + dh, th), pl.ds(dw, W), :]
            xt = xt.reshape(th * W, Cin)
            acc = acc + jnp.dot(xt, w_ref[dh, dw],
                                preferred_element_type=jnp.float32)
    y = acc + b_ref[...]
    if relu:
        y = jnp.maximum(y, 0.0)
    o_ref[...] = y.reshape(th, W, Cout).astype(o_ref.dtype)


def _convt2x2_kernel(x_ref, w_ref, b_ref, o_ref):
    # x_ref: (th, W, Cin) bf16 ; w_ref: (2, Cin, 2*Cout) bf16 (kw folded into lanes)
    # b_ref: (1, 2*Cout) f32 ; o_ref: (th, 2, W, 2*Cout) bf16
    th, W, Cin = x_ref.shape
    C2 = o_ref.shape[3]
    x2d = x_ref[...].reshape(th * W, Cin)
    for kh in range(2):
        y = jnp.dot(x2d, w_ref[kh], preferred_element_type=jnp.float32) + b_ref[...]
        o_ref[:, kh, :, :] = y.reshape(th, W, C2).astype(o_ref.dtype)


# ---------------------------------------------------------------------------
# Pallas wrappers
# ---------------------------------------------------------------------------
def conv3x3(x, w, b, *, relu=True):
    """x: (N,H,W,Cin) bf16, w: (3,3,Cin,Cout) bf16, b: (Cout,) f32 -> (N,H,W,Cout) bf16."""
    N, H, W, Cin = x.shape
    Cout = w.shape[-1]
    xp = jnp.pad(x, ((0, 0), (1, 1), (1, 1), (0, 0)))        # spatial pad=1
    Hp, Wp = H + 2, W + 2
    th = _row_tile(H, W)
    return pl.pallas_call(
        functools.partial(_conv3x3_kernel, relu=relu),
        out_shape=jax.ShapeDtypeStruct((N, H, W, Cout), x.dtype),
        grid=(N, H // th),
        in_specs=[
            # full padded image of batch n, resident across the row-tile axis
            pl.BlockSpec((None, Hp, Wp, Cin), lambda n, t: (n, 0, 0, 0)),
            pl.BlockSpec((3, 3, Cin, Cout), lambda n, t: (0, 0, 0, 0)),
            pl.BlockSpec((1, Cout), lambda n, t: (0, 0)),
        ],
        out_specs=pl.BlockSpec((None, th, W, Cout), lambda n, t: (n, t, 0, 0)),
        compiler_params=pltpu.CompilerParams(
            dimension_semantics=("parallel", "parallel"),
            vmem_limit_bytes=VMEM_LIMIT,
        ),
    )(xp, w, b.reshape(1, Cout))


def conv_transpose2x2(x, wf, bf):
    """ConvTranspose2d(kernel=2, stride=2), bias, no activation.
    x: (N,H,W,Cin) bf16; wf: (2, Cin, 2*Cout) bf16; bf: (2*Cout,) f32
    -> (N, 2H, 2W, Cout) bf16."""
    N, H, W, Cin = x.shape
    C2 = wf.shape[-1]
    Cout = C2 // 2
    th = _row_tile(H, W)
    out = pl.pallas_call(
        _convt2x2_kernel,
        out_shape=jax.ShapeDtypeStruct((N, H, 2, W, C2), x.dtype),
        grid=(N, H // th),
        in_specs=[
            pl.BlockSpec((None, th, W, Cin), lambda n, t: (n, t, 0, 0)),
            pl.BlockSpec((2, Cin, C2), lambda n, t: (0, 0, 0)),
            pl.BlockSpec((1, C2), lambda n, t: (0, 0)),
        ],
        out_specs=pl.BlockSpec((None, th, 2, W, C2), lambda n, t: (n, t, 0, 0, 0)),
        compiler_params=pltpu.CompilerParams(
            dimension_semantics=("parallel", "parallel"),
            vmem_limit_bytes=VMEM_LIMIT,
        ),
    )(x, wf, bf.reshape(1, C2))
    # (N,H,2,W,2C) -> (N,H,2,W,2,C) -> (N,2H,2W,C): pure dim split/merge, no transpose.
    return out.reshape(N, H, 2, W, 2, Cout).reshape(N, 2 * H, 2 * W, Cout)


# ---------------------------------------------------------------------------
# UNetUpBlock forward
# ---------------------------------------------------------------------------
@functools.partial(jax.jit, static_argnames=("out_c",))
def unet_up_block_forward(kp, x1_nchw, x2_nchw, *, out_c):
    """UNetUpBlock.forward(x1, x2).  x1: (N, in_c, H, W) NCHW f32 -> (N, out_c, 2H, 2W).
    NOTE: the reference forward builds F.pad(up(x1)) and torch.cat([x2, .], dim=1) but
    then returns self.block(up(x1)); the concat is dead code, so x2 never affects the
    output and is intentionally not consumed here."""
    del x2_nchw
    Ci = kp["wt"].shape[1]                                    # lane-padded channel width
    x1 = jnp.transpose(x1_nchw, (0, 2, 3, 1)).astype(jnp.bfloat16)   # NCHW -> NHWC
    x1 = jnp.pad(x1, ((0, 0), (0, 0), (0, 0), (0, Ci - x1.shape[-1])))
    h = conv_transpose2x2(x1, kp["wt"], kp["bt"])             # (N, 2H, 2W, Ci)
    for (w, b) in kp["convs"]:                                # 3 x (Conv3x3 + ReLU)
        h = conv3x3(h, w, b, relu=True)
    h = h[..., :out_c].astype(jnp.float32)                    # drop lane padding
    return jnp.transpose(h, (0, 3, 1, 2))                     # NHWC -> NCHW


# ---------------------------------------------------------------------------
# Parameters (synthetic, deterministic) + kernel-layout prep
# ---------------------------------------------------------------------------
def make_params(key, in_c, out_c):
    """Synthetic UNetUpBlock parameters in (kh, kw, cin, cout) layout, f32."""
    counter = [0]

    def nrm(shape, scale):
        counter[0] += 1
        k = jax.random.fold_in(key, counter[0])
        return jax.random.normal(k, shape, dtype=jnp.float32) * scale

    p = {
        # ConvTranspose2d(in_c, in_c, kernel_size=2, stride=2)
        "wt": nrm((2, 2, in_c, in_c), (2.0 / (4 * in_c)) ** 0.5),
        "bt": nrm((in_c,), 0.01),
        "convs": [],
    }
    c = in_c
    for _ in range(3):  # RestoreNetBlock(in_c, out_c), n=3
        p["convs"].append((nrm((3, 3, c, out_c), (2.0 / (9 * c)) ** 0.5),
                           nrm((out_c,), 0.01)))
        c = out_c
    return p


def prep_kernel_params(p, in_c, out_c):
    """Zero-pad channels to multiples of 128 (lane-dense), fold the conv-transpose
    kw axis into output lanes, cast weights to bf16."""
    Ci = _rup(in_c)
    wt = jnp.zeros((2, 2, Ci, Ci), jnp.float32).at[:, :, :in_c, :in_c].set(p["wt"])
    bt = jnp.zeros((Ci,), jnp.float32).at[:in_c].set(p["bt"])
    kp = {
        # (kh, kw, ci, co) -> (kh, ci, kw*Ci + co)
        "wt": jnp.transpose(wt, (0, 2, 1, 3)).reshape(2, Ci, 2 * Ci).astype(jnp.bfloat16),
        "bt": jnp.tile(bt, 2),
        "convs": [],
    }
    cin, cin_p = in_c, Ci
    for (w, b) in p["convs"]:
        cout = w.shape[-1]
        cout_p = _rup(cout)
        wp = jnp.zeros((3, 3, cin_p, cout_p), jnp.float32).at[:, :, :cin, :cout].set(w)
        bp = jnp.zeros((cout_p,), jnp.float32).at[:cout].set(b)
        kp["convs"].append((wp.astype(jnp.bfloat16), bp))
        cin, cin_p = cout, cout_p
    return kp


# ---------------------------------------------------------------------------
# Pure-JAX f32 reference (same math as the PyTorch module) for a loose check
# ---------------------------------------------------------------------------
def reference_forward(p, x1_nchw):
    x = jnp.transpose(x1_nchw, (0, 2, 3, 1))                  # NHWC
    y = jnp.einsum("nhwc,ijcd->nhiwjd", x, p["wt"]) + p["bt"]
    N, H, _, W, _, C = y.shape
    y = y.reshape(N, 2 * H, 2 * W, C)                         # ConvTranspose2d(2,2)
    for (w, b) in p["convs"]:
        y = jax.lax.conv_general_dilated(
            y, w, window_strides=(1, 1), padding="SAME",
            dimension_numbers=("NHWC", "HWIO", "NHWC")) + b
        y = jnp.maximum(y, 0.0)
    return jnp.transpose(y, (0, 3, 1, 2))


if __name__ == "__main__":
    IN_C, OUT_C = 64, 32
    N, H, W = 2, 16, 16                       # x1 spatial; upsampled to 32x32
    key = jax.random.PRNGKey(0)
    k_x1, k_x2, k_p = jax.random.split(key, 3)
    x1 = jax.random.normal(k_x1, (N, IN_C, H, W), dtype=jnp.float32)
    x2 = jax.random.normal(k_x2, (N, OUT_C, 2 * H, 2 * W), dtype=jnp.float32)  # skip (unused)

    params = make_params(k_p, IN_C, OUT_C)
    kparams = prep_kernel_params(params, IN_C, OUT_C)

    out = unet_up_block_forward(kparams, x1, x2, out_c=OUT_C)
    out = jax.block_until_ready(out)

    assert out.shape == (N, OUT_C, 2 * H, 2 * W), out.shape
    assert bool(jnp.all(jnp.isfinite(out)))

    # Loose numerical check vs f32 XLA reference (kernel path uses bf16 MXU inputs).
    ref = jax.block_until_ready(reference_forward(params, x1))
    err = float(jnp.max(jnp.abs(out - ref)))
    scale = float(jnp.max(jnp.abs(ref))) + 1e-6
    assert err <= 0.1 * scale + 1e-2, (err, scale)

    print("KERNEL_OK")
</pallas_src>

<mosaic_0001>
module attributes {stable_mosaic.version = 11 : i64} {
  func.func @_convt2x2_kernel(%arg0: i32, %arg1: i32, %arg2: memref<1x8x16x128xbf16, #tpu.memory_space<vmem>>, %arg3: memref<2x128x256xbf16, #tpu.memory_space<vmem>>, %arg4: memref<1x256xf32, #tpu.memory_space<vmem>>, %arg5: memref<1x8x2x16x256xbf16, #tpu.memory_space<vmem>>) attributes {dimension_semantics = [#tpu.dimension_semantics<parallel>, #tpu.dimension_semantics<parallel>], iteration_bounds = array<i64: 2, 2>, scalar_prefetch = 0 : i64, scratch_operands = 0 : i64, tpu.core_type = #tpu.core_type<tc>, window_params = [{transform_indices = @transform_0, window_bounds = array<i64: 1, 8, 16, 128>}, {pipeline_mode = #tpu.pipeline_mode<synchronous>, transform_indices = @transform_1, window_bounds = array<i64: 2, 128, 256>}, {pipeline_mode = #tpu.pipeline_mode<synchronous>, transform_indices = @transform_2, window_bounds = array<i64: 1, 256>}, {transform_indices = @transform_3, window_bounds = array<i64: 1, 8, 2, 16, 256>}]} {
    %c0 = arith.constant 0 : index
    %c0_0 = arith.constant 0 : index
    %c0_1 = arith.constant 0 : index
    %c0_2 = arith.constant 0 : index
    %0 = vector.load %arg2[%c0, %c0_0, %c0_1, %c0_2] : memref<1x8x16x128xbf16, #tpu.memory_space<vmem>>, vector<1x8x16x128xbf16>
    %1 = vector.shape_cast %0 : vector<1x8x16x128xbf16> to vector<8x16x128xbf16>
    %2 = vector.shape_cast %1 : vector<8x16x128xbf16> to vector<128x128xbf16>
    %c0_3 = arith.constant 0 : index
    %c0_4 = arith.constant 0 : index
    %c0_5 = arith.constant 0 : index
    %3 = vector.load %arg3[%c0_3, %c0_4, %c0_5] : memref<2x128x256xbf16, #tpu.memory_space<vmem>>, vector<1x128x256xbf16>
    %4 = vector.shape_cast %3 : vector<1x128x256xbf16> to vector<128x256xbf16>
    %cst = arith.constant dense<0.000000e+00> : vector<128x256xf32>
    %5 = tpu.matmul %2, %4, %cst {dimension_numbers = #tpu.dot_dimension_numbers<[1], [0], [0], [1], [0, 0, 1, 1], [], []>} : vector<128x128xbf16>, vector<128x256xbf16>, vector<128x256xf32> -> vector<128x256xf32>
    %c0_6 = arith.constant 0 : index
    %c0_7 = arith.constant 0 : index
    %6 = vector.load %arg4[%c0_6, %c0_7] : memref<1x256xf32, #tpu.memory_space<vmem>>, vector<1x256xf32>
    %7 = vector.broadcast %6 : vector<1x256xf32> to vector<128x256xf32>
    %8 = arith.addf %5, %7 : vector<128x256xf32>
    %9 = vector.shape_cast %8 : vector<128x256xf32> to vector<8x16x256xf32>
    %10 = arith.truncf %9 : vector<8x16x256xf32> to vector<8x16x256xbf16>
    %c0_8 = arith.constant 0 : index
    %c0_9 = arith.constant 0 : index
    %c0_10 = arith.constant 0 : index
    %c0_11 = arith.constant 0 : index
    %c0_12 = arith.constant 0 : index
    %11 = vector.load %arg5[%c0_8, %c0_9, %c0_10, %c0_11, %c0_12] : memref<1x8x2x16x256xbf16, #tpu.memory_space<vmem>>, vector<1x8x1x16x256xbf16>
    %12 = vector.shape_cast %11 : vector<1x8x1x16x256xbf16> to vector<8x16x256xbf16>
    %13 = vector.shape_cast %10 : vector<8x16x256xbf16> to vector<1x8x1x16x256xbf16>
    tpu.vector_store %arg5[%c0_8, %c0_9, %c0_10, %c0_11, %c0_12], %13 {strides = array<i32>} : memref<1x8x2x16x256xbf16, #tpu.memory_space<vmem>>, vector<1x8x1x16x256xbf16>,
    %c1 = arith.constant 1 : index
    %c0_13 = arith.constant 0 : index
    %c0_14 = arith.constant 0 : index
    %14 = vector.load %arg3[%c1, %c0_13, %c0_14] : memref<2x128x256xbf16, #tpu.memory_space<vmem>>, vector<1x128x256xbf16>
    %15 = vector.shape_cast %14 : vector<1x128x256xbf16> to vector<128x256xbf16>
    %cst_15 = arith.constant dense<0.000000e+00> : vector<128x256xf32>
    %16 = tpu.matmul %2, %15, %cst_15 {dimension_numbers = #tpu.dot_dimension_numbers<[1], [0], [0], [1], [0, 0, 1, 1], [], []>} : vector<128x128xbf16>, vector<128x256xbf16>, vector<128x256xf32> -> vector<128x256xf32>
    %c0_16 = arith.constant 0 : index
    %c0_17 = arith.constant 0 : index
    %17 = vector.load %arg4[%c0_16, %c0_17] : memref<1x256xf32, #tpu.memory_space<vmem>>, vector<1x256xf32>
    %18 = vector.broadcast %17 : vector<1x256xf32> to vector<128x256xf32>
    %19 = arith.addf %16, %18 : vector<128x256xf32>
    %20 = vector.shape_cast %19 : vector<128x256xf32> to vector<8x16x256xf32>
    %21 = arith.truncf %20 : vector<8x16x256xf32> to vector<8x16x256xbf16>
    %c0_18 = arith.constant 0 : index
    %c0_19 = arith.constant 0 : index
    %c1_20 = arith.constant 1 : index
    %c0_21 = arith.constant 0 : index
    %c0_22 = arith.constant 0 : index
    %22 = vector.load %arg5[%c0_18, %c0_19, %c1_20, %c0_21, %c0_22] : memref<1x8x2x16x256xbf16, #tpu.memory_space<vmem>>, vector<1x8x1x16x256xbf16>
    %23 = vector.shape_cast %22 : vector<1x8x1x16x256xbf16> to vector<8x16x256xbf16>
    %24 = vector.shape_cast %21 : vector<8x16x256xbf16> to vector<1x8x1x16x256xbf16>
    tpu.vector_store %arg5[%c0_18, %c0_19, %c1_20, %c0_21, %c0_22], %24 {strides = array<i32>} : memref<1x8x2x16x256xbf16, #tpu.memory_space<vmem>>, vector<1x8x1x16x256xbf16>,
    return
  }
  func.func @transform_0(%arg0: i32, %arg1: i32) -> (i32, i32, i32, i32) {
    %c0_i32 = arith.constant 0 : i32
    %c0_i32_0 = arith.constant 0 : i32
    %c0_i32_1 = arith.constant 0 : i32
    return %arg0, %arg1, %c0_i32, %c0_i32_0 : i32, i32, i32, i32
  }
  func.func @transform_1(%arg0: i32, %arg1: i32) -> (i32, i32, i32) {
    %c0_i32 = arith.constant 0 : i32
    %c0_i32_0 = arith.constant 0 : i32
    %c0_i32_1 = arith.constant 0 : i32
    %c0_i32_2 = arith.constant 0 : i32
    return %c0_i32, %c0_i32_0, %c0_i32_1 : i32, i32, i32
  }
  func.func @transform_2(%arg0: i32, %arg1: i32) -> (i32, i32) {
    %c0_i32 = arith.constant 0 : i32
    %c0_i32_0 = arith.constant 0 : i32
    %c0_i32_1 = arith.constant 0 : i32
    return %c0_i32, %c0_i32_0 : i32, i32
  }
  func.func @transform_3(%arg0: i32, %arg1: i32) -> (i32, i32, i32, i32, i32) {
    %c0_i32 = arith.constant 0 : i32
    %c0_i32_0 = arith.constant 0 : i32
    %c0_i32_1 = arith.constant 0 : i32
    %c0_i32_2 = arith.constant 0 : i32
    return %arg0, %arg1, %c0_i32, %c0_i32_0, %c0_i32_1 : i32, i32, i32, i32, i32
  }
}

module attributes {stable_mosaic.version = 11 : i64} {
  func.func @_conv3x3_kernel(%arg0: i32, %arg1: i32, %arg2: memref<1x34x34x128xbf16, #tpu.memory_space<vmem>>, %arg3: memref<3x3x128x128xbf16, #tpu.memory_space<vmem>>, %arg4: memref<1x128xf32, #tpu.memory_space<vmem>>, %arg5: memref<1x4x32x128xbf16, #tpu.memory_space<vmem>>) attributes {dimension_semantics = [#tpu.dimension_semantics<parallel>, #tpu.dimension_semantics<parallel>], iteration_bounds = array<i64: 2, 8>, scalar_prefetch = 0 : i64, scratch_operands = 0 : i64, tpu.core_type = #tpu.core_type<tc>, window_params = [{transform_indices = @transform_0, window_bounds = array<i64: 1, 34, 34, 128>}, {pipeline_mode = #tpu.pipeline_mode<synchronous>, transform_indices = @transform_1, window_bounds = array<i64: 3, 3, 128, 128>}, {pipeline_mode = #tpu.pipeline_mode<synchronous>, transform_indices = @transform_2, window_bounds = array<i64: 1, 128>}, {transform_indices = @transform_3, window_bounds = array<i64: 1, 4, 32, 128>}]} {
    %c4_i32 = arith.constant 4 : i32
    %0 = arith.muli %arg1, %c4_i32 : i32
    %1 = tpu.assume_multiple %0, 4 : i32
    %cst = arith.constant 0.000000e+00 : f32
    %2 = vector.broadcast %cst : f32 to vector<128x128xf32>
    %c0_i32 = arith.constant 0 : i32
    %3 = arith.addi %1, %c0_i32 : i32
    %c0 = arith.constant 0 : index
    %4 = arith.index_cast %3 : i32 to index
    %c0_0 = arith.constant 0 : index
    %c0_1 = arith.constant 0 : index
    %5 = vector.load %arg2[%c0, %4, %c0_0, %c0_1] : memref<1x34x34x128xbf16, #tpu.memory_space<vmem>>, vector<1x4x32x128xbf16>
    %6 = vector.shape_cast %5 : vector<1x4x32x128xbf16> to vector<4x32x128xbf16>
    %7 = vector.shape_cast %6 : vector<4x32x128xbf16> to vector<128x128xbf16>
    %c0_2 = arith.constant 0 : index
    %c0_3 = arith.constant 0 : index
    %c0_4 = arith.constant 0 : index
    %c0_5 = arith.constant 0 : index
    %8 = vector.load %arg3[%c0_2, %c0_3, %c0_4, %c0_5] : memref<3x3x128x128xbf16, #tpu.memory_space<vmem>>, vector<1x1x128x128xbf16>
    %9 = vector.shape_cast %8 : vector<1x1x128x128xbf16> to vector<128x128xbf16>
    %cst_6 = arith.constant dense<0.000000e+00> : vector<128x128xf32>
    %10 = tpu.matmul %7, %9, %cst_6 {dimension_numbers = #tpu.dot_dimension_numbers<[1], [0], [0], [1], [0, 0, 1, 1], [], []>} : vector<128x128xbf16>, vector<128x128xbf16>, vector<128x128xf32> -> vector<128x128xf32>
    %11 = arith.addf %2, %10 : vector<128x128xf32>
    %c0_i32_7 = arith.constant 0 : i32
    %12 = arith.addi %1, %c0_i32_7 : i32
    %c0_8 = arith.constant 0 : index
    %13 = arith.index_cast %12 : i32 to index
    %c1 = arith.constant 1 : index
    %c0_9 = arith.constant 0 : index
    %14 = vector.load %arg2[%c0_8, %13, %c1, %c0_9] : memref<1x34x34x128xbf16, #tpu.memory_space<vmem>>, vector<1x4x32x128xbf16>
    %15 = vector.shape_cast %14 : vector<1x4x32x128xbf16> to vector<4x32x128xbf16>
    %16 = vector.shape_cast %15 : vector<4x32x128xbf16> to vector<128x128xbf16>
    %c0_10 = arith.constant 0 : index
    %c1_11 = arith.constant 1 : index
    %c0_12 = arith.constant 0 : index
    %c0_13 = arith.constant 0 : index
    %17 = vector.load %arg3[%c0_10, %c1_11, %c0_12, %c0_13] : memref<3x3x128x128xbf16, #tpu.memory_space<vmem>>, vector<1x1x128x128xbf16>
    %18 = vector.shape_cast %17 : vector<1x1x128x128xbf16> to vector<128x128xbf16>
    %cst_14 = arith.constant dense<0.000000e+00> : vector<128x128xf32>
    %19 = tpu.matmul %16, %18, %cst_14 {dimension_numbers = #tpu.dot_dimension_numbers<[1], [0], [0], [1], [0, 0, 1, 1], [], []>} : vector<128x128xbf16>, vector<128x128xbf16>, vector<128x128xf32> -> vector<128x128xf32>
    %20 = arith.addf %11, %19 : vector<128x128xf32>
    %c0_i32_15 = arith.constant 0 : i32
    %21 = arith.addi %1, %c0_i32_15 : i32
    %c0_16 = arith.constant 0 : index
    %22 = arith.index_cast %21 : i32 to index
    %c2 = arith.constant 2 : index
    %c0_17 = arith.constant 0 : index
    %23 = vector.load %arg2[%c0_16, %22, %c2, %c0_17] : memref<1x34x34x128xbf16, #tpu.memory_space<vmem>>, vector<1x4x32x128xbf16>
    %24 = vector.shape_cast %23 : vector<1x4x32x128xbf16> to vector<4x32x128xbf16>
    %25 = vector.shape_cast %24 : vector<4x32x128xbf16> to vector<128x128xbf16>
    %c0_18 = arith.constant 0 : index
    %c2_19 = arith.constant 2 : index
    %c0_20 = arith.constant 0 : index
    %c0_21 = arith.constant 0 : index
    %26 = vector.load %arg3[%c0_18, %c2_19, %c0_20, %c0_21] : memref<3x3x128x128xbf16, #tpu.memory_space<vmem>>, vector<1x1x128x128xbf16>
    %27 = vector.shape_cast %26 : vector<1x1x128x128xbf16> to vector<128x128xbf16>
    %cst_22 = arith.constant dense<0.000000e+00> : vector<128x128xf32>
    %28 = tpu.matmul %25, %27, %cst_22 {dimension_numbers = #tpu.dot_dimension_numbers<[1], [0], [0], [1], [0, 0, 1, 1], [], []>} : vector<128x128xbf16>, vector<128x128xbf16>, vector<128x128xf32> -> vector<128x128xf32>
    %29 = arith.addf %20, %28 : vector<128x128xf32>
    %c1_i32 = arith.constant 1 : i32
    %30 = arith.addi %1, %c1_i32 : i32
    %c0_23 = arith.constant 0 : index
    %31 = arith.index_cast %30 : i32 to index
    %c0_24 = arith.constant 0 : index
    %c0_25 = arith.constant 0 : index
    %32 = vector.load %arg2[%c0_23, %31, %c0_24, %c0_25] : memref<1x34x34x128xbf16, #tpu.memory_space<vmem>>, vector<1x4x32x128xbf16>
    %33 = vector.shape_cast %32 : vector<1x4x32x128xbf16> to vector<4x32x128xbf16>
    %34 = vector.shape_cast %33 : vector<4x32x128xbf16> to vector<128x128xbf16>
    %c1_26 = arith.constant 1 : index
    %c0_27 = arith.constant 0 : index
    %c0_28 = arith.constant 0 : index
    %c0_29 = arith.constant 0 : index
    %35 = vector.load %arg3[%c1_26, %c0_27, %c0_28, %c0_29] : memref<3x3x128x128xbf16, #tpu.memory_space<vmem>>, vector<1x1x128x128xbf16>
    %36 = vector.shape_cast %35 : vector<1x1x128x128xbf16> to vector<128x128xbf16>
    %cst_30 = arith.constant dense<0.000000e+00> : vector<128x128xf32>
    %37 = tpu.matmul %34, %36, %cst_30 {dimension_numbers = #tpu.dot_dimension_numbers<[1], [0], [0], [1], [0, 0, 1, 1], [], []>} : vector<128x128xbf16>, vector<128x128xbf16>, vector<128x128xf32> -> vector<128x128xf32>
    %38 = arith.addf %29, %37 : vector<128x128xf32>
    %c1_i32_31 = arith.constant 1 : i32
    %39 = arith.addi %1, %c1_i32_31 : i32
    %c0_32 = arith.constant 0 : index
    %40 = arith.index_cast %39 : i32 to index
    %c1_33 = arith.constant 1 : index
    %c0_34 = arith.constant 0 : index
    %41 = vector.load %arg2[%c0_32, %40, %c1_33, %c0_34] : memref<1x34x34x128xbf16, #tpu.memory_space<vmem>>, vector<1x4x32x128xbf16>
    %42 = vector.shape_cast %41 : vector<1x4x32x128xbf16> to vector<4x32x128xbf16>
    %43 = vector.shape_cast %42 : vector<4x32x128xbf16> to vector<128x128xbf16>
    %c1_35 = arith.constant 1 : index
    %c1_36 = arith.constant 1 : index
    %c0_37 = arith.constant 0 : index
    %c0_38 = arith.constant 0 : index
    %44 = vector.load %arg3[%c1_35, %c1_36, %c0_37, %c0_38] : memref<3x3x128x128xbf16, #tpu.memory_space<vmem>>, vector<1x1x128x128xbf16>
    %45 = vector.shape_cast %44 : vector<1x1x128x128xbf16> to vector<128x128xbf16>
    %cst_39 = arith.constant dense<0.000000e+00> : vector<128x128xf32>
    %46 = tpu.matmul %43, %45, %cst_39 {dimension_numbers = #tpu.dot_dimension_numbers<[1], [0], [0], [1], [0, 0, 1, 1], [], []>} : vector<128x128xbf16>, vector<128x128xbf16>, vector<128x128xf32> -> vector<128x128xf32>
    %47 = arith.addf %38, %46 : vector<128x128xf32>
    %c1_i32_40 = arith.constant 1 : i32
    %48 = arith.addi %1, %c1_i32_40 : i32
    %c0_41 = arith.constant 0 : index
    %49 = arith.index_cast %48 : i32 to index
    %c2_42 = arith.constant 2 : index
    %c0_43 = arith.constant 0 : index
    %50 = vector.load %arg2[%c0_41, %49, %c2_42, %c0_43] : memref<1x34x34x128xbf16, #tpu.memory_space<vmem>>, vector<1x4x32x128xbf16>
    %51 = vector.shape_cast %50 : vector<1x4x32x128xbf16> to vector<4x32x128xbf16>
    %52 = vector.shape_cast %51 : vector<4x32x128xbf16> to vector<128x128xbf16>
    %c1_44 = arith.constant 1 : index
    %c2_45 = arith.constant 2 : index
    %c0_46 = arith.constant 0 : index
    %c0_47 = arith.constant 0 : index
    %53 = vector.load %arg3[%c1_44, %c2_45, %c0_46, %c0_47] : memref<3x3x128x128xbf16, #tpu.memory_space<vmem>>, vector<1x1x128x128xbf16>
    %54 = vector.shape_cast %53 : vector<1x1x128x128xbf16> to vector<128x128xbf16>
    %cst_48 = arith.constant dense<0.000000e+00> : vector<128x128xf32>
    %55 = tpu.matmul %52, %54, %cst_48 {dimension_numbers = #tpu.dot_dimension_numbers<[1], [0], [0], [1], [0, 0, 1, 1], [], []>} : vector<128x128xbf16>, vector<128x128xbf16>, vector<128x128xf32> -> vector<128x128xf32>
    %56 = arith.addf %47, %55 : vector<128x128xf32>
    %c2_i32 = arith.constant 2 : i32
    %57 = arith.addi %1, %c2_i32 : i32
    %c0_49 = arith.constant 0 : index
    %58 = arith.index_cast %57 : i32 to index
    %c0_50 = arith.constant 0 : index
    %c0_51 = arith.constant 0 : index
    %59 = vector.load %arg2[%c0_49, %58, %c0_50, %c0_51] : memref<1x34x34x128xbf16, #tpu.memory_space<vmem>>, vector<1x4x32x128xbf16>
    %60 = vector.shape_cast %59 : vector<1x4x32x128xbf16> to vector<4x32x128xbf16>
    %61 = vector.shape_cast %60 : vector<4x32x128xbf16> to vector<128x128xbf16>
    %c2_52 = arith.constant 2 : index
    %c0_53 = arith.constant 0 : index
    %c0_54 = arith.constant 0 : index
    %c0_55 = arith.constant 0 : index
    %62 = vector.load %arg3[%c2_52, %c0_53, %c0_54, %c0_55] : memref<3x3x128x128xbf16, #tpu.memory_space<vmem>>, vector<1x1x128x128xbf16>
    %63 = vector.shape_cast %62 : vector<1x1x128x128xbf16> to vector<128x128xbf16>
    %cst_56 = arith.constant dense<0.000000e+00> : vector<128x128xf32>
    %64 = tpu.matmul %61, %63, %cst_56 {dimension_numbers = #tpu.dot_dimension_numbers<[1], [0], [0], [1], [0, 0, 1, 1], [], []>} : vector<128x128xbf16>, vector<128x128xbf16>, vector<128x128xf32> -> vector<128x128xf32>
    %65 = arith.addf %56, %64 : vector<128x128xf32>
    %c2_i32_57 = arith.constant 2 : i32
    %66 = arith.addi %1, %c2_i32_57 : i32
    %c0_58 = arith.constant 0 : index
    %67 = arith.index_cast %66 : i32 to index
    %c1_59 = arith.constant 1 : index
    %c0_60 = arith.constant 0 : index
    %68 = vector.load %arg2[%c0_58, %67, %c1_59, %c0_60] : memref<1x34x34x128xbf16, #tpu.memory_space<vmem>>, vector<1x4x32x128xbf16>
    %69 = vector.shape_cast %68 : vector<1x4x32x128xbf16> to vector<4x32x128xbf16>
    %70 = vector.shape_cast %69 : vector<4x32x128xbf16> to vector<128x128xbf16>
    %c2_61 = arith.constant 2 : index
    %c1_62 = arith.constant 1 : index
    %c0_63 = arith.constant 0 : index
    %c0_64 = arith.constant 0 : index
    %71 = vector.load %arg3[%c2_61, %c1_62, %c0_63, %c0_64] : memref<3x3x128x128xbf16, #tpu.memory_space<vmem>>, vector<1x1x128x128xbf16>
    %72 = vector.shape_cast %71 : vector<1x1x128x128xbf16> to vector<128x128xbf16>
    %cst_65 = arith.constant dense<0.000000e+00> : vector<128x128xf32>
    %73 = tpu.matmul %70, %72, %cst_65 {dimension_numbers = #tpu.dot_dimension_numbers<[1], [0], [0], [1], [0, 0, 1, 1], [], []>} : vector<128x128xbf16>, vector<128x128xbf16>, vector<128x128xf32> -> vector<128x128xf32>
    %74 = arith.addf %65, %73 : vector<128x128xf32>
    %c2_i32_66 = arith.constant 2 : i32
    %75 = arith.addi %1, %c2_i32_66 : i32
    %c0_67 = arith.constant 0 : index
    %76 = arith.index_cast %75 : i32 to index
    %c2_68 = arith.constant 2 : index
    %c0_69 = arith.constant 0 : index
    %77 = vector.load %arg2[%c0_67, %76, %c2_68, %c0_69] : memref<1x34x34x128xbf16, #tpu.memory_space<vmem>>, vector<1x4x32x128xbf16>
    %78 = vector.shape_cast %77 : vector<1x4x32x128xbf16> to vector<4x32x128xbf16>
    %79 = vector.shape_cast %78 : vector<4x32x128xbf16> to vector<128x128xbf16>
    %c2_70 = arith.constant 2 : index
    %c2_71 = arith.constant 2 : index
    %c0_72 = arith.constant 0 : index
    %c0_73 = arith.constant 0 : index
    %80 = vector.load %arg3[%c2_70, %c2_71, %c0_72, %c0_73] : memref<3x3x128x128xbf16, #tpu.memory_space<vmem>>, vector<1x1x128x128xbf16>
    %81 = vector.shape_cast %80 : vector<1x1x128x128xbf16> to vector<128x128xbf16>
    %cst_74 = arith.constant dense<0.000000e+00> : vector<128x128xf32>
    %82 = tpu.matmul %79, %81, %cst_74 {dimension_numbers = #tpu.dot_dimension_numbers<[1], [0], [0], [1], [0, 0, 1, 1], [], []>} : vector<128x128xbf16>, vector<128x128xbf16>, vector<128x128xf32> -> vector<128x128xf32>
    %83 = arith.addf %74, %82 : vector<128x128xf32>
    %c0_75 = arith.constant 0 : index
    %c0_76 = arith.constant 0 : index
    %84 = vector.load %arg4[%c0_75, %c0_76] : memref<1x128xf32, #tpu.memory_space<vmem>>, vector<1x128xf32>
    %85 = vector.broadcast %84 : vector<1x128xf32> to vector<128x128xf32>
    %86 = arith.addf %83, %85 : vector<128x128xf32>
    %cst_77 = arith.constant 0.000000e+00 : f32
    %87 = vector.broadcast %cst_77 : f32 to vector<128x128xf32>
    %88 = arith.maximumf %86, %87 : vector<128x128xf32>
    %89 = vector.shape_cast %88 : vector<128x128xf32> to vector<4x32x128xf32>
    %90 = arith.truncf %89 : vector<4x32x128xf32> to vector<4x32x128xbf16>
    %c0_78 = arith.constant 0 : index
    %c0_79 = arith.constant 0 : index
    %c0_80 = arith.constant 0 : index
    %c0_81 = arith.constant 0 : index
    %91 = vector.load %arg5[%c0_78, %c0_79, %c0_80, %c0_81] : memref<1x4x32x128xbf16, #tpu.memory_space<vmem>>, vector<1x4x32x128xbf16>
    %92 = vector.shape_cast %91 : vector<1x4x32x128xbf16> to vector<4x32x128xbf16>
    %93 = vector.shape_cast %90 : vector<4x32x128xbf16> to vector<1x4x32x128xbf16>
    tpu.vector_store %arg5[%c0_78, %c0_79, %c0_80, %c0_81], %93 {strides = array<i32>} : memref<1x4x32x128xbf16, #tpu.memory_space<vmem>>, vector<1x4x32x128xbf16>,
    return
  }
  func.func @transform_0(%arg0: i32, %arg1: i32) -> (i32, i32, i32, i32) {
    %c0_i32 = arith.constant 0 : i32
    %c0_i32_0 = arith.constant 0 : i32
    %c0_i32_1 = arith.constant 0 : i32
    %c0_i32_2 = arith.constant 0 : i32
    return %arg0, %c0_i32, %c0_i32_0, %c0_i32_1 : i32, i32, i32, i32
  }
  func.func @transform_1(%arg0: i32, %arg1: i32) -> (i32, i32, i32, i32) {
    %c0_i32 = arith.constant 0 : i32
    %c0_i32_0 = arith.constant 0 : i32
    %c0_i32_1 = arith.constant 0 : i32
    %c0_i32_2 = arith.constant 0 : i32
    %c0_i32_3 = arith.constant 0 : i32
    return %c0_i32, %c0_i32_0, %c0_i32_1, %c0_i32_2 : i32, i32, i32, i32
  }
  func.func @transform_2(%arg0: i32, %arg1: i32) -> (i32, i32) {
    %c0_i32 = arith.constant 0 : i32
    %c0_i32_0 = arith.constant 0 : i32
    %c0_i32_1 = arith.constant 0 : i32
    return %c0_i32, %c0_i32_0 : i32, i32
  }
  func.func @transform_3(%arg0: i32, %arg1: i32) -> (i32, i32, i32, i32) {
    %c0_i32 = arith.constant 0 : i32
    %c0_i32_0 = arith.constant 0 : i32
    %c0_i32_1 = arith.constant 0 : i32
    return %arg0, %arg1, %c0_i32, %c0_i32_0 : i32, i32, i32, i32
  }
}

</mosaic_0001>

<llo_original>
// kernel: unet_up_block_forward.4
$region0: #{unet_up_block_forward.4}
  #allocation0 [shape = 'u32[]', space=smem, size = 0x4, offset = 0x4, fixed_abs, tag = 'smem constant byte address 0x4 - core index']
  #allocation1 [shape = 'u32[144,128]{1,0:T(1,128)}', space=vmem, size = 0x12000, scoped, tag = 'internal scratch']
  %s0 = inlined_call_operand.vmem [shape: bf16[2,16,16,128], index: 0, kind: input, shape index: {}]
  %s1 = inlined_call_operand.vmem [shape: bf16[2,128,256], index: 1, kind: input, shape index: {}]
  %s2 = inlined_call_operand.vmem [shape: f32[1,256], index: 2, kind: input, shape index: {}]
  %s3 = inlined_call_operand.vmem [shape: bf16[2,16,2,16,256], index: 3, kind: output, shape index: {}]
  %s4 = sld [smem:[#allocation0]]
  $region45: #{unet_up_block_forward.4} parent=0
    _
  %s6 = ssub.s32 1, %s4
  %s7 = scalar_select 0, %s6, %s4
  loop: start=0, step=1, limit=6
  $region2: #{unet_up_block_forward.4} parent=0 // loop_pre_header
    _
  $region3: #{unet_up_block_forward.4} parent=0 // loop_header
    %s9 = sphi 0, %s13
    %p10 = scmp.ge.s32.totalorder %s9, 6
    %s16 = sphi 0, %s28
    %s17 = sphi 0, %s24
    %s18 = sphi 0, %s16
    %s19 = sphi 0, %s17
    %s20 = sphi 0, %s18
    %s21 = sphi 0, %s19
    %s33 = sphi 0, %s35
    %s36 = sphi 0, %s33
    %s37 = sphi 0, %s36
    %s53 = sphi 0, %s37
    %s57 = sphi 0, %s57
    %s59 = sphi 0, %s57
    %s60 = sphi 0, %s59
    %s74 = sphi 0, %s60
    %s78 = sphi 0, %s78
    %s80 = sphi 0, %s78
    %s81 = sphi 0, %s80
    %s95 = sphi 0, %s81
    %s103 = sphi 0, %s105
    %s106 = sphi 0, %s103
    %s107 = sphi 0, %s106
    %s123 = sphi 0, %s107
  $region4: #{unet_up_block_forward.4} parent=0 // loop_header_branch
    %12 = sbr.rel (%p10) target = $region8
  $region5: #{unet_up_block_forward.4} parent=0 // loop_body
    %s14 = ssub.s32 %s9, 1
    %s15 = ssub.s32 %s9, 2
    %s22 = sadd.s32 1, %s17
    %p23 = scmp.ge.s32.totalorder %s22, 2
    %s24 = scalar_select %p23, 0, %s22
    %s25 = sadd.s32 1, %s16
    %s26 = scalar_select %p23, %s25, %s16
    %p27 = scmp.ge.s32.totalorder %s26, 2
    %s28 = scalar_select %p27, 0, %s26
    %s29 = ssub.s32 %s16, %s28
    %s30 = ssub.s32 %s17, %s24
    %s31 = sor.u32 %s29, %s30
    %p32 = scmp.eq.s32.totalorder %s31, 0
    %s34 = sadd.s32 %s33, 1
    %s35 = scalar_select %p32, %s33, %s34
    %p38 = pneg %p32
    %p39 = scmp.eq.s32.totalorder %s9, 3
    %p40 = por %p38, %p39
    %p41 = scmp.ne.s32.totalorder %s33, %s36
    %p42 = scmp.eq.s32.totalorder %s9, 0
    %p43 = por %p41, %p42
    %p44 = scmp.ne.s32.totalorder %s33, %s36
    %p45 = scmp.eq.s32.totalorder %s14, 3
    %p46 = por %p44, %p45
    %p47 = scmp.ne.s32.totalorder %s36, %s37
    %p48 = scmp.eq.s32.totalorder %s14, 0
    %p49 = por %p47, %p48
    %p50 = scmp.ne.s32.totalorder %s36, %s37
    %p51 = scmp.eq.s32.totalorder %s15, 3
    %p52 = por %p50, %p51
    %p54 = scmp.ne.s32.totalorder %s37, %s53
    %p55 = scmp.eq.s32.totalorder %s15, 0
    %p56 = por %p54, %p55
    %s58 = sadd.s32 %s57, 1
    %p61 = scmp.eq.s32.totalorder %s9, 3
    %p62 = scmp.ne.s32.totalorder %s57, %s59
    %p63 = scmp.eq.s32.totalorder %s9, 0
    %p64 = por %p62, %p63
    %p65 = scmp.ne.s32.totalorder %s57, %s59
    %p66 = scmp.eq.s32.totalorder %s14, 3
    %p67 = por %p65, %p66
    %p68 = scmp.ne.s32.totalorder %s59, %s60
    %p69 = scmp.eq.s32.totalorder %s14, 0
    %p70 = por %p68, %p69
    %p71 = scmp.ne.s32.totalorder %s59, %s60
    %p72 = scmp.eq.s32.totalorder %s15, 3
    %p73 = por %p71, %p72
    %p75 = scmp.ne.s32.totalorder %s60, %s74
    %p76 = scmp.eq.s32.totalorder %s15, 0
    %p77 = por %p75, %p76
    %s79 = sadd.s32 %s78, 1
    %p82 = scmp.eq.s32.totalorder %s9, 3
    %p83 = scmp.ne.s32.totalorder %s78, %s80
    %p84 = scmp.eq.s32.totalorder %s9, 0
    %p85 = por %p83, %p84
    %p86 = scmp.ne.s32.totalorder %s78, %s80
    %p87 = scmp.eq.s32.totalorder %s14, 3
    %p88 = por %p86, %p87
    %p89 = scmp.ne.s32.totalorder %s80, %s81
    %p90 = scmp.eq.s32.totalorder %s14, 0
    %p91 = por %p89, %p90
    %p92 = scmp.ne.s32.totalorder %s80, %s81
    %p93 = scmp.eq.s32.totalorder %s15, 3
    %p94 = por %p92, %p93
    %p96 = scmp.ne.s32.totalorder %s81, %s95
    %p97 = scmp.eq.s32.totalorder %s15, 0
    %p98 = por %p96, %p97
    %s99 = ssub.s32 %s16, %s28
    %s100 = ssub.s32 %s17, %s24
    %s101 = sor.u32 %s99, %s100
    %p102 = scmp.eq.s32.totalorder %s101, 0
    %s104 = sadd.s32 %s103, 1
    %s105 = scalar_select %p102, %s103, %s104
    %p108 = pneg %p102
    %p109 = scmp.eq.s32.totalorder %s9, 3
    %p110 = por %p108, %p109
    %p111 = scmp.ne.s32.totalorder %s103, %s106
    %p112 = scmp.eq.s32.totalorder %s9, 0
    %p113 = por %p111, %p112
    %p114 = scmp.ne.s32.totalorder %s103, %s106
    %p115 = scmp.eq.s32.totalorder %s14, 3
    %p116 = por %p114, %p115
    %p117 = scmp.ne.s32.totalorder %s106, %s107
    %p118 = scmp.eq.s32.totalorder %s14, 0
    %p119 = por %p117, %p118
    %p120 = scmp.ne.s32.totalorder %s106, %s107
    %p121 = scmp.eq.s32.totalorder %s15, 3
    %p122 = por %p120, %p121
    %p124 = scmp.ne.s32.totalorder %s107, %s123
    %p125 = scmp.eq.s32.totalorder %s15, 0
    %p126 = por %p124, %p125
    %p127 = scmp.le.s32.totalorder 1, %s9
    %p128 = scmp.lt.s32.totalorder %s9, 5
    %p129 = pnand %p127, %p128
    %p130 = pneg %p129
    // Predicated region
    $region9: #{unet_up_block_forward.4} parent=5 // pred_check
      _
    $region10: #{unet_up_block_forward.4} parent=5 // pred_check_branch
      %132 = sbr.rel (%p129) target = $region12
    $region11: #{unet_up_block_forward.4} parent=5 // pred_region
      %s133 = ssub.s32 %s9, 1
      // Predicated region
      $region13: #{unet_up_block_forward.4} parent=11 // pred_check
        %p134 = pneg %p70
      $region14: #{unet_up_block_forward.4} parent=11 // pred_check_branch
        %136 = sbr.rel (%p134) target = $region16
      $region15: #{unet_up_block_forward.4} parent=11 // pred_region
        _
      $region16: #{unet_up_block_forward.4} parent=11 // pred_fallthru
        _
      // Predicated region
      $region17: #{unet_up_block_forward.4} parent=11 // pred_check
        %p137 = pneg %p91
      $region18: #{unet_up_block_forward.4} parent=11 // pred_check_branch
        %139 = sbr.rel (%p137) target = $region20
      $region19: #{unet_up_block_forward.4} parent=11 // pred_region
        _
      $region20: #{unet_up_block_forward.4} parent=11 // pred_fallthru
        _
    $region12: #{unet_up_block_forward.4} parent=5 // pred_fallthru
      _
    %p140 = scmp.lt.s32.totalorder %s9, 4
    // Predicated region
    $region21: #{unet_up_block_forward.4} parent=5 // pred_check
      %p141 = pneg %p140
    $region22: #{unet_up_block_forward.4} parent=5 // pred_check_branch
      %143 = sbr.rel (%p141) target = $region24
    $region23: #{unet_up_block_forward.4} parent=5 // pred_region
      // Predicated region
      $region25: #{unet_up_block_forward.4} parent=23 // pred_check
        %p144 = pneg %p43
      $region26: #{unet_up_block_forward.4} parent=23 // pred_check_branch
        %146 = sbr.rel (%p144) target = $region28
      $region27: #{unet_up_block_forward.4} parent=23 // pred_region
        %s147 = smul.u32 8, %s17
        %p148 = scmp.lt.s32.totalorder %s16, 1
        %s149 = scalar_select %p148, %s16, 1
        %p150 = scmp.lt.s32.totalorder %s147, 15
        %s151 = scalar_select %p150, %s147, 15
        %s152 = smul.addr %s151, 2
        %s153 = smul.addr %s149, 32
        %s154 = sadd.s32 %s152, %s153
        %s155 = smul.addr %s154, 4
        %s156 = scalar_lea.vmem %s0, %s155
        %s157 = smul.u32 8, %s17
      $region28: #{unet_up_block_forward.4} parent=23 // pred_fallthru
        _
    $region24: #{unet_up_block_forward.4} parent=5 // pred_fallthru
      _
    %p158 = scmp.le.s32.totalorder 1, %s9
    %p159 = scmp.lt.s32.totalorder %s9, 5
    %p160 = pnand %p158, %p159
    %p161 = pneg %p160
    // Predicated region
    $region29: #{unet_up_block_forward.4} parent=5 // pred_check
      _
    $region30: #{unet_up_block_forward.4} parent=5 // pred_check_branch
      %163 = sbr.rel (%p160) target = $region32
    $region31: #{unet_up_block_forward.4} parent=5 // pred_region
      %s164 = ssub.s32 %s9, 1
      %s165 = smul.u32 8, %s19
      %p166 = scmp.lt.s32.totalorder %s18, 1
      %s167 = scalar_select %p166, %s18, 1
      %p168 = scmp.lt.s32.totalorder %s165, 15
      %s169 = scalar_select %p168, %s165, 15
      %s170 = smul.addr %s169, 2
      %s171 = smul.addr %s167, 32
      %s172 = sadd.s32 %s170, %s171
      %s173 = smul.addr %s172, 4
      %s174 = scalar_lea.vmem %s0, %s173
      %p175 = pneg %p49
      %p176 = pneg %p46
      %p177 = pneg %p70
      %p178 = pneg %p67
      %p179 = pneg %p91
      %p180 = pneg %p88
      %p181 = pneg %p119
      %p182 = pneg %p116
      %s183 = smul.u32 8, %s19
      %p184 = scmp.lt.s32.totalorder %s18, 1
      %s185 = scalar_select %p184, %s18, 1
      %p186 = scmp.lt.s32.totalorder %s183, 15
      %s187 = scalar_select %p186, %s183, 15
      %s188 = smul.addr %s187, 8
      %s189 = smul.addr %s185, 128
      %s190 = sadd.s32 %s188, %s189
      %s191 = smul.addr %s190, 4
      %s192 = scalar_lea.vmem %s3, %s191
      %s193 = smul.u32 8, %s19
      %p194 = scmp.lt.s32.totalorder %s18, 1
      %s195 = scalar_select %p194, %s18, 1
      %p196 = scmp.lt.s32.totalorder %s193, 15
      %s197 = scalar_select %p196, %s193, 15
      %s198 = smul.addr %s197, 2
      %s199 = smul.addr %s195, 32
      %s200 = sadd.s32 %s198, %s199
      %s201 = smul.addr %s200, 4
      %s202 = scalar_lea.vmem %s0, %s201
      %s203 = smul.u32 8, %s19
      %s204 = smul.u32 8, %s19
      %p205 = scmp.lt.s32.totalorder %s18, 1
      %s206 = scalar_select %p205, %s18, 1
      %p207 = scmp.lt.s32.totalorder %s204, 15
      %s208 = scalar_select %p207, %s204, 15
      %s209 = smul.addr %s208, 8
      %s210 = smul.addr %s206, 128
      %s211 = sadd.s32 %s209, %s210
      %s212 = smul.addr %s211, 4
      %s213 = scalar_lea.vmem %s3, %s212
      %s214 = smul.u32 8, %s19
      %v216 = vld [vmem:[%s202] sm:$0xf]
      %v217 = vld [vmem:[%s202 + $0x4] sm:$0xf]
      %v218 = vld [vmem:[%s202 + $0x8] sm:$0xf]
      %v219 = vld [vmem:[%s202 + $0xc] sm:$0xf]
      %v220 = vld [vmem:[%s202 + $0x10] sm:$0xf]
      %v221 = vld [vmem:[%s202 + $0x14] sm:$0xf]
      %v222 = vld [vmem:[%s202 + $0x18] sm:$0xf]
      %v223 = vld [vmem:[%s202 + $0x1c] sm:$0xf]
      %v224 = vld [vmem:[%s202 + $0x20] sm:$0xf]
      %v225 = vld [vmem:[%s202 + $0x24] sm:$0xf]
      %v226 = vld [vmem:[%s202 + $0x28] sm:$0xf]
      %v227 = vld [vmem:[%s202 + $0x2c] sm:$0xf]
      %v228 = vld [vmem:[%s202 + $0x30] sm:$0xf]
      %v229 = vld [vmem:[%s202 + $0x34] sm:$0xf]
      %v230 = vld [vmem:[%s202 + $0x38] sm:$0xf]
      %v231 = vld [vmem:[%s202 + $0x3c] sm:$0xf]
      %v232 = vld [vmem:[%s1] sm:$0xff]
      %v233 = vld [vmem:[%s1 + $0x8] sm:$0xff]
      %v234 = vld [vmem:[%s1 + $0x10] sm:$0xff]
      %v235 = vld [vmem:[%s1 + $0x18] sm:$0xff]
      %v236 = vld [vmem:[%s1 + $0x20] sm:$0xff]
      %v237 = vld [vmem:[%s1 + $0x28] sm:$0xff]
      %v238 = vld [vmem:[%s1 + $0x30] sm:$0xff]
      %v239 = vld [vmem:[%s1 + $0x38] sm:$0xff]
      %v240 = vld [vmem:[%s1 + $0x40] sm:$0xff]
      %v241 = vld [vmem:[%s1 + $0x48] sm:$0xff]
      %v242 = vld [vmem:[%s1 + $0x50] sm:$0xff]
      %v243 = vld [vmem:[%s1 + $0x58] sm:$0xff]
      %v244 = vld [vmem:[%s1 + $0x60] sm:$0xff]
      %v245 = vld [vmem:[%s1 + $0x68] sm:$0xff]
      %v246 = vld [vmem:[%s1 + $0x70] sm:$0xff]
      %v247 = vld [vmem:[%s1 + $0x78] sm:$0xff]
      %v248 = vld [vmem:[%s2] sm:$0x3]
      %v250 = vlaneseq
      %v251 = vshrl.u32 %v250, 7
      %v252 = vsub.s32 0, %v251
      %v253 = vrot.slane %v248, %v252
      %v254 = vlaneseq
      %v255 = vshrl.u32 %v254, 7
      %v256 = vsub.s32 1, %v255
      %v257 = vrot.slane %v248, %v256
      %v276 = vunpack.c.l.b16 %v216
      %v277 = vunpack.c.l.b16 %v217
      %v278 = vunpack.c.l.b16 %v218
      %v279 = vunpack.c.l.b16 %v219
      %v280 = vunpack.c.l.b16 %v220
      %v281 = vunpack.c.l.b16 %v221
      %v282 = vunpack.c.l.b16 %v222
      %v283 = vunpack.c.l.b16 %v223
      %v284 = vunpack.c.l.b16 %v224
      %v285 = vunpack.c.l.b16 %v225
      %v286 = vunpack.c.l.b16 %v226
      %v287 = vunpack.c.l.b16 %v227
      %v288 = vunpack.c.l.b16 %v228
      %v289 = vunpack.c.l.b16 %v229
      %v290 = vunpack.c.l.b16 %v230
      %v291 = vunpack.c.l.b16 %v231
      %v292 = vpack.c.b16 %v277, %v276
      %v293 = vpack.c.b16 %v279, %v278
      %v294 = vpack.c.b16 %v281, %v280
      %v295 = vpack.c.b16 %v283, %v282
      %v296 = vpack.c.b16 %v285, %v284
      %v297 = vpack.c.b16 %v287, %v286
      %v298 = vpack.c.b16 %v289, %v288
      %v299 = vpack.c.b16 %v291, %v290
      %v324 = vunpack.c.l.b16 %v232
      %v325 = vunpack.c.h.b16 %v232
      %v326 = vunpack.c.l.b16 %v233
      %v327 = vunpack.c.h.b16 %v233
      %v328 = vunpack.c.l.b16 %v234
      %v329 = vunpack.c.h.b16 %v234
      %v330 = vunpack.c.l.b16 %v235
      %v331 = vunpack.c.h.b16 %v235
      %v332 = vunpack.c.l.b16 %v236
      %v333 = vunpack.c.h.b16 %v236
      %v334 = vunpack.c.l.b16 %v237
      %v335 = vunpack.c.h.b16 %v237
      %v336 = vunpack.c.l.b16 %v238
      %v337 = vunpack.c.h.b16 %v238
      %v338 = vunpack.c.l.b16 %v239
      %v339 = vunpack.c.h.b16 %v239
      %v340 = vunpack.c.l.b16 %v240
      %v341 = vunpack.c.h.b16 %v240
      %v342 = vunpack.c.l.b16 %v241
      %v343 = vunpack.c.h.b16 %v241
      %v344 = vunpack.c.l.b16 %v242
      %v345 = vunpack.c.h.b16 %v242
      %v346 = vunpack.c.l.b16 %v243
      %v347 = vunpack.c.h.b16 %v243
      %v348 = vunpack.c.l.b16 %v244
      %v349 = vunpack.c.h.b16 %v244
      %v350 = vunpack.c.l.b16 %v245
      %v351 = vunpack.c.h.b16 %v245
      %v352 = vunpack.c.l.b16 %v246
      %v353 = vunpack.c.h.b16 %v246
      %v354 = vunpack.c.l.b16 %v247
      %v355 = vunpack.c.h.b16 %v247
      %v356 = vpack.c.b16 %v326, %v324
      %v357 = vpack.c.b16 %v327, %v325
      %v358 = vpack.c.b16 %v330, %v328
      %v359 = vpack.c.b16 %v331, %v329
      %v360 = vpack.c.b16 %v334, %v332
      %v361 = vpack.c.b16 %v335, %v333
      %v362 = vpack.c.b16 %v338, %v336
      %v363 = vpack.c.b16 %v339, %v337
      %v364 = vpack.c.b16 %v342, %v340
      %v365 = vpack.c.b16 %v343, %v341
      %v366 = vpack.c.b16 %v346, %v344
      %v367 = vpack.c.b16 %v347, %v345
      %v368 = vpack.c.b16 %v350, %v348
      %v369 = vpack.c.b16 %v351, %v349
      %v370 = vpack.c.b16 %v354, %v352
      %v371 = vpack.c.b16 %v355, %v353
      %388 = vmatprep.subr.bf16.mxu0 %v371
      %389 = vmatpush1.bf16.msra.mxu0 %v370
      %390 = vmatprep.subr.bf16.mxu0 %v369
      %391 = vmatpush1.bf16.msra.mxu0 %v368
      %392 = vmatprep.subr.bf16.mxu0 %v367
      %393 = vmatpush1.bf16.msra.mxu0 %v366
      %394 = vmatprep.subr.bf16.mxu0 %v365
      %395 = vmatpush1.bf16.msra.mxu0 %v364
      %396 = vmatprep.subr.bf16.mxu0 %v363
      %397 = vmatpush1.bf16.msra.mxu0 %v362
      %398 = vmatprep.subr.bf16.mxu0 %v361
      %399 = vmatpush1.bf16.msra.mxu0 %v360
      %400 = vmatprep.subr.bf16.mxu0 %v359
      %401 = vmatpush1.bf16.msra.mxu0 %v358
      %402 = vmatprep.subr.bf16.mxu0 %v357
      %403 = vmatpush1.bf16.msra.mxu0 %v356
      %404 = vmatprep.subr.bf16.mxu0 0
      %405 = vmatpush2.bf16.msra.mxu0 0
      %406 = vmatprep.subr.bf16.mxu0 0
      %407 = vmatpush2.bf16.msra.mxu0 0
      %408 = vmatprep.subr.bf16.mxu0 0
      %409 = vmatpush2.bf16.msra.mxu0 0
      %410 = vmatprep.subr.bf16.mxu0 0
      %411 = vmatpush2.bf16.msra.mxu0 0
      %412 = vmatprep.subr.bf16.mxu0 0
      %413 = vmatpush2.bf16.msra.mxu0 0
      %414 = vmatprep.subr.bf16.mxu0 0
      %415 = vmatpush2.bf16.msra.mxu0 0
      %416 = vmatprep.subr.bf16.mxu0 0
      %417 = vmatpush2.bf16.msra.mxu0 0
      %418 = vmatprep.subr.bf16.mxu0 0
      %419 = vmatpush2.bf16.msra.mxu0 0
      %420 = vmatprep.mubr.bf16.mxu0 0
      %421 = vmatmul.mubr.bf16.gmra.mxu0 %v292
      %v422 = vpop.f32.mrf.mxu0
      %v423 = vadd.f32 %v253, %v422
      %v424 = vpop.f32.mrf.mxu0
      %v425 = vadd.f32 %v257, %v424
      %v426 = vpop.f32.mrf.mxu0
      %v427 = vadd.f32 %v253, %v426
      %v428 = vpop.f32.mrf.mxu0
      %v429 = vadd.f32 %v257, %v428
      %430 = vmatprep.mubr.bf16.mxu0 0
      %431 = vmatmul.mubr.bf16.gmra.mxu0 %v293
      %v432 = vpop.f32.mrf.mxu0
      %v433 = vadd.f32 %v253, %v432
      %v434 = vpop.f32.mrf.mxu0
      %v435 = vadd.f32 %v257, %v434
      %v436 = vpop.f32.mrf.mxu0
      %v437 = vadd.f32 %v253, %v436
      %v438 = vpop.f32.mrf.mxu0
      %v439 = vadd.f32 %v257, %v438
      %440 = vmatprep.mubr.bf16.mxu0 0
      %441 = vmatmul.mubr.bf16.gmra.mxu0 %v294
      %v442 = vpop.f32.mrf.mxu0
      %v443 = vadd.f32 %v253, %v442
      %v444 = vpop.f32.mrf.mxu0
      %v445 = vadd.f32 %v257, %v444
      %v446 = vpop.f32.mrf.mxu0
      %v447 = vadd.f32 %v253, %v446
      %v448 = vpop.f32.mrf.mxu0
      %v449 = vadd.f32 %v257, %v448
      %450 = vmatprep.mubr.bf16.mxu0 0
      %451 = vmatmul.mubr.bf16.gmra.mxu0 %v295
      %v452 = vpop.f32.mrf.mxu0
      %v453 = vadd.f32 %v253, %v452
      %v454 = vpop.f32.mrf.mxu0
      %v455 = vadd.f32 %v257, %v454
      %v456 = vpop.f32.mrf.mxu0
      %v457 = vadd.f32 %v253, %v456
      %v458 = vpop.f32.mrf.mxu0
      %v459 = vadd.f32 %v257, %v458
      %460 = vmatprep.mubr.bf16.mxu0 0
      %461 = vmatmul.mubr.bf16.gmra.mxu0 %v296
      %v462 = vpop.f32.mrf.mxu0
      %v463 = vadd.f32 %v253, %v462
      %v464 = vpop.f32.mrf.mxu0
      %v465 = vadd.f32 %v257, %v464
      %v466 = vpop.f32.mrf.mxu0
      %v467 = vadd.f32 %v253, %v466
      %v468 = vpop.f32.mrf.mxu0
      %v469 = vadd.f32 %v257, %v468
      %470 = vmatprep.mubr.bf16.mxu0 0
      %471 = vmatmul.mubr.bf16.gmra.mxu0 %v297
      %v472 = vpop.f32.mrf.mxu0
      %v473 = vadd.f32 %v253, %v472
      %v474 = vpop.f32.mrf.mxu0
      %v475 = vadd.f32 %v257, %v474
      %v476 = vpop.f32.mrf.mxu0
      %v477 = vadd.f32 %v253, %v476
      %v478 = vpop.f32.mrf.mxu0
      %v479 = vadd.f32 %v257, %v478
      %480 = vmatprep.mubr.bf16.mxu0 0
      %481 = vmatmul.mubr.bf16.gmra.mxu0 %v298
      %v482 = vpop.f32.mrf.mxu0
      %v483 = vadd.f32 %v253, %v482
      %v484 = vpop.f32.mrf.mxu0
      %v485 = vadd.f32 %v257, %v484
      %v486 = vpop.f32.mrf.mxu0
      %v487 = vadd.f32 %v253, %v486
      %v488 = vpop.f32.mrf.mxu0
      %v489 = vadd.f32 %v257, %v488
      %490 = vmatprep.mubr.bf16.mxu0 0
      %491 = vmatmul.mubr.bf16.gmra.mxu0 %v299
      %v492 = vpop.f32.mrf.mxu0
      %v493 = vadd.f32 %v253, %v492
      %v494 = vpop.f32.mrf.mxu0
      %v495 = vadd.f32 %v257, %v494
      %v496 = vpop.f32.mrf.mxu0
      %v497 = vadd.f32 %v253, %v496
      %v498 = vpop.f32.mrf.mxu0
      %v499 = vadd.f32 %v257, %v498
      %500 = vdwg.mxu0
      %v501 = vpack.c.bf16 %v427, %v423
      %v502 = vpack.c.bf16 %v429, %v425
      %v503 = vpack.c.bf16 %v437, %v433
      %v504 = vpack.c.bf16 %v439, %v435
      %v505 = vpack.c.bf16 %v447, %v443
      %v506 = vpack.c.bf16 %v449, %v445
      %v507 = vpack.c.bf16 %v457, %v453
      %v508 = vpack.c.bf16 %v459, %v455
      %v509 = vpack.c.bf16 %v467, %v463
      %v510 = vpack.c.bf16 %v469, %v465
      %v511 = vpack.c.bf16 %v477, %v473
      %v512 = vpack.c.bf16 %v479, %v475
      %v513 = vpack.c.bf16 %v487, %v483
      %v514 = vpack.c.bf16 %v489, %v485
      %v515 = vpack.c.bf16 %v497, %v493
      %v516 = vpack.c.bf16 %v499, %v495
      %v533 = vunpack.c.l.b16 %v501
      %v534 = vunpack.c.l.b16 %v502
      %v535 = vunpack.c.h.b16 %v501
      %v536 = vunpack.c.h.b16 %v502
      %v537 = vunpack.c.l.b16 %v503
      %v538 = vunpack.c.l.b16 %v504
      %v539 = vunpack.c.h.b16 %v503
      %v540 = vunpack.c.h.b16 %v504
      %v541 = vunpack.c.l.b16 %v505
      %v542 = vunpack.c.l.b16 %v506
      %v543 = vunpack.c.h.b16 %v505
      %v544 = vunpack.c.h.b16 %v506
      %v545 = vunpack.c.l.b16 %v507
      %v546 = vunpack.c.l.b16 %v508
      %v547 = vunpack.c.h.b16 %v507
      %v548 = vunpack.c.h.b16 %v508
      %v549 = vunpack.c.l.b16 %v509
      %v550 = vunpack.c.l.b16 %v510
      %v551 = vunpack.c.h.b16 %v509
      %v552 = vunpack.c.h.b16 %v510
      %v553 = vunpack.c.l.b16 %v511
      %v554 = vunpack.c.l.b16 %v512
      %v555 = vunpack.c.h.b16 %v511
      %v556 = vunpack.c.h.b16 %v512
      %v557 = vunpack.c.l.b16 %v513
      %v558 = vunpack.c.l.b16 %v514
      %v559 = vunpack.c.h.b16 %v513
      %v560 = vunpack.c.h.b16 %v514
      %v561 = vunpack.c.l.b16 %v515
      %v562 = vunpack.c.l.b16 %v516
      %v563 = vunpack.c.h.b16 %v515
      %v564 = vunpack.c.h.b16 %v516
      %v565 = vpack.c.b16 %v534, %v533
      %v566 = vpack.c.b16 %v536, %v535
      %v567 = vpack.c.b16 %v538, %v537
      %v568 = vpack.c.b16 %v540, %v539
      %v569 = vpack.c.b16 %v542, %v541
      %v570 = vpack.c.b16 %v544, %v543
      %v571 = vpack.c.b16 %v546, %v545
      %v572 = vpack.c.b16 %v548, %v547
      %v573 = vpack.c.b16 %v550, %v549
      %v574 = vpack.c.b16 %v552, %v551
      %v575 = vpack.c.b16 %v554, %v553
      %v576 = vpack.c.b16 %v556, %v555
      %v577 = vpack.c.b16 %v558, %v557
      %v578 = vpack.c.b16 %v560, %v559
      %v579 = vpack.c.b16 %v562, %v561
      %v580 = vpack.c.b16 %v564, %v563
      %597 = vst [vmem:[%s213] sm:$0xff] %v565
      %598 = vst [vmem:[%s213 + $0x8] sm:$0xff] %v566
      %599 = vst [vmem:[%s213 + $0x20] sm:$0xff] %v567
      %600 = vst [vmem:[%s213 + $0x28] sm:$0xff] %v568
      %601 = vst [vmem:[%s213 + $0x40] sm:$0xff] %v569
      %602 = vst [vmem:[%s213 + $0x48] sm:$0xff] %v570
      %603 = vst [vmem:[%s213 + $0x60] sm:$0xff] %v571
      %604 = vst [vmem:[%s213 + $0x68] sm:$0xff] %v572
      %605 = vst [vmem:[%s213 + $0x80] sm:$0xff] %v573
      %606 = vst [vmem:[%s213 + $0x88] sm:$0xff] %v574
      %607 = vst [vmem:[%s213 + $0xa0] sm:$0xff] %v575
      %608 = vst [vmem:[%s213 + $0xa8] sm:$0xff] %v576
      %609 = vst [vmem:[%s213 + $0xc0] sm:$0xff] %v577
      %610 = vst [vmem:[%s213 + $0xc8] sm:$0xff] %v578
      %611 = vst [vmem:[%s213 + $0xe0] sm:$0xff] %v579
      %612 = vst [vmem:[%s213 + $0xe8] sm:$0xff] %v580
      %s613 = scalar_lea.vmem %s1, 128
      %v614 = vld [vmem:[%s613] sm:$0xff]
      %v615 = vld [vmem:[%s613 + $0x8] sm:$0xff]
      %v616 = vld [vmem:[%s613 + $0x10] sm:$0xff]
      %v617 = vld [vmem:[%s613 + $0x18] sm:$0xff]
      %v618 = vld [vmem:[%s613 + $0x20] sm:$0xff]
      %v619 = vld [vmem:[%s613 + $0x28] sm:$0xff]
      %v620 = vld [vmem:[%s613 + $0x30] sm:$0xff]
      %v621 = vld [vmem:[%s613 + $0x38] sm:$0xff]
      %v622 = vld [vmem:[%s613 + $0x40] sm:$0xff]
      %v623 = vld [vmem:[%s613 + $0x48] sm:$0xff]
      %v624 = vld [vmem:[%s613 + $0x50] sm:$0xff]
      %v625 = vld [vmem:[%s613 + $0x58] sm:$0xff]
      %v626 = vld [vmem:[%s613 + $0x60] sm:$0xff]
      %v627 = vld [vmem:[%s613 + $0x68] sm:$0xff]
      %v628 = vld [vmem:[%s613 + $0x70] sm:$0xff]
      %v629 = vld [vmem:[%s613 + $0x78] sm:$0xff]
      %v630 = vld [vmem:[%s2] sm:$0x3]
      %v632 = vlaneseq
      %v633 = vshrl.u32 %v632, 7
      %v634 = vsub.s32 0, %v633
      %v635 = vrot.slane %v630, %v634
      %v636 = vlaneseq
      %v637 = vshrl.u32 %v636, 7
      %v638 = vsub.s32 1, %v637
      %v639 = vrot.slane %v630, %v638
      %v658 = vunpack.c.l.b16 %v614
      %v659 = vunpack.c.h.b16 %v614
      %v660 = vunpack.c.l.b16 %v615
      %v661 = vunpack.c.h.b16 %v615
      %v662 = vunpack.c.l.b16 %v616
      %v663 = vunpack.c.h.b16 %v616
      %v664 = vunpack.c.l.b16 %v617
      %v665 = vunpack.c.h.b16 %v617
      %v666 = vunpack.c.l.b16 %v618
      %v667 = vunpack.c.h.b16 %v618
      %v668 = vunpack.c.l.b16 %v619
      %v669 = vunpack.c.h.b16 %v619
      %v670 = vunpack.c.l.b16 %v620
      %v671 = vunpack.c.h.b16 %v620
      %v672 = vunpack.c.l.b16 %v621
      %v673 = vunpack.c.h.b16 %v621
      %v674 = vunpack.c.l.b16 %v622
      %v675 = vunpack.c.h.b16 %v622
      %v676 = vunpack.c.l.b16 %v623
      %v677 = vunpack.c.h.b16 %v623
      %v678 = vunpack.c.l.b16 %v624
      %v679 = vunpack.c.h.b16 %v624
      %v680 = vunpack.c.l.b16 %v625
      %v681 = vunpack.c.h.b16 %v625
      %v682 = vunpack.c.l.b16 %v626
      %v683 = vunpack.c.h.b16 %v626
      %v684 = vunpack.c.l.b16 %v627
      %v685 = vunpack.c.h.b16 %v627
      %v686 = vunpack.c.l.b16 %v628
      %v687 = vunpack.c.h.b16 %v628
      %v688 = vunpack.c.l.b16 %v629
      %v689 = vunpack.c.h.b16 %v629
      %v690 = vpack.c.b16 %v660, %v658
      %v691 = vpack.c.b16 %v661, %v659
      %v692 = vpack.c.b16 %v664, %v662
      %v693 = vpack.c.b16 %v665, %v663
      %v694 = vpack.c.b16 %v668, %v666
      %v695 = vpack.c.b16 %v669, %v667
      %v696 = vpack.c.b16 %v672, %v670
      %v697 = vpack.c.b16 %v673, %v671
      %v698 = vpack.c.b16 %v676, %v674
      %v699 = vpack.c.b16 %v677, %v675
      %v700 = vpack.c.b16 %v680, %v678
      %v701 = vpack.c.b16 %v681, %v679
      %v702 = vpack.c.b16 %v684, %v682
      %v703 = vpack.c.b16 %v685, %v683
      %v704 = vpack.c.b16 %v688, %v686
      %v705 = vpack.c.b16 %v689, %v687
      %722 = vmatprep.subr.bf16.mxu0 %v705
      %723 = vmatpush1.bf16.msra.mxu0 %v704
      %724 = vmatprep.subr.bf16.mxu0 %v703
      %725 = vmatpush1.bf16.msra.mxu0 %v702
      %726 = vmatprep.subr.bf16.mxu0 %v701
      %727 = vmatpush1.bf16.msra.mxu0 %v700
      %728 = vmatprep.subr.bf16.mxu0 %v699
      %729 = vmatpush1.bf16.msra.mxu0 %v698
      %730 = vmatprep.subr.bf16.mxu0 %v697
      %731 = vmatpush1.bf16.msra.mxu0 %v696
      %732 = vmatprep.subr.bf16.mxu0 %v695
      %733 = vmatpush1.bf16.msra.mxu0 %v694
      %734 = vmatprep.subr.bf16.mxu0 %v693
      %735 = vmatpush1.bf16.msra.mxu0 %v692
      %736 = vmatprep.subr.bf16.mxu0 %v691
      %737 = vmatpush1.bf16.msra.mxu0 %v690
      %738 = vmatprep.subr.bf16.mxu0 0
      %739 = vmatpush2.bf16.msra.mxu0 0
      %740 = vmatprep.subr.bf16.mxu0 0
      %741 = vmatpush2.bf16.msra.mxu0 0
      %742 = vmatprep.subr.bf16.mxu0 0
      %743 = vmatpush2.bf16.msra.mxu0 0
      %744 = vmatprep.subr.bf16.mxu0 0
      %745 = vmatpush2.bf16.msra.mxu0 0
      %746 = vmatprep.subr.bf16.mxu0 0
      %747 = vmatpush2.bf16.msra.mxu0 0
      %748 = vmatprep.subr.bf16.mxu0 0
      %749 = vmatpush2.bf16.msra.mxu0 0
      %750 = vmatprep.subr.bf16.mxu0 0
      %751 = vmatpush2.bf16.msra.mxu0 0
      %752 = vmatprep.subr.bf16.mxu0 0
      %753 = vmatpush2.bf16.msra.mxu0 0
      %754 = vmatprep.mubr.bf16.mxu0 0
      %755 = vmatmul.mubr.bf16.gmra.mxu0 %v292
      %v756 = vpop.f32.mrf.mxu0
      %v757 = vadd.f32 %v635, %v756
      %v758 = vpop.f32.mrf.mxu0
      %v759 = vadd.f32 %v639, %v758
      %v760 = vpop.f32.mrf.mxu0
      %v761 = vadd.f32 %v635, %v760
      %v762 = vpop.f32.mrf.mxu0
      %v763 = vadd.f32 %v639, %v762
      %764 = vmatprep.mubr.bf16.mxu0 0
      %765 = vmatmul.mubr.bf16.gmra.mxu0 %v293
      %v766 = vpop.f32.mrf.mxu0
      %v767 = vadd.f32 %v635, %v766
      %v768 = vpop.f32.mrf.mxu0
      %v769 = vadd.f32 %v639, %v768
      %v770 = vpop.f32.mrf.mxu0
      %v771 = vadd.f32 %v635, %v770
      %v772 = vpop.f32.mrf.mxu0
      %v773 = vadd.f32 %v639, %v772
      %774 = vmatprep.mubr.bf16.mxu0 0
      %775 = vmatmul.mubr.bf16.gmra.mxu0 %v294
      %v776 = vpop.f32.mrf.mxu0
      %v777 = vadd.f32 %v635, %v776
      %v778 = vpop.f32.mrf.mxu0
      %v779 = vadd.f32 %v639, %v778
      %v780 = vpop.f32.mrf.mxu0
      %v781 = vadd.f32 %v635, %v780
      %v782 = vpop.f32.mrf.mxu0
      %v783 = vadd.f32 %v639, %v782
      %784 = vmatprep.mubr.bf16.mxu0 0
      %785 = vmatmul.mubr.bf16.gmra.mxu0 %v295
      %v786 = vpop.f32.mrf.mxu0
      %v787 = vadd.f32 %v635, %v786
      %v788 = vpop.f32.mrf.mxu0
      %v789 = vadd.f32 %v639, %v788
      %v790 = vpop.f32.mrf.mxu0
      %v791 = vadd.f32 %v635, %v790
      %v792 = vpop.f32.mrf.mxu0
      %v793 = vadd.f32 %v639, %v792
      %794 = vmatprep.mubr.bf16.mxu0 0
      %795 = vmatmul.mubr.bf16.gmra.mxu0 %v296
      %v796 = vpop.f32.mrf.mxu0
      %v797 = vadd.f32 %v635, %v796
      %v798 = vpop.f32.mrf.mxu0
      %v799 = vadd.f32 %v639, %v798
      %v800 = vpop.f32.mrf.mxu0
      %v801 = vadd.f32 %v635, %v800
      %v802 = vpop.f32.mrf.mxu0
      %v803 = vadd.f32 %v639, %v802
      %804 = vmatprep.mubr.bf16.mxu0 0
      %805 = vmatmul.mubr.bf16.gmra.mxu0 %v297
      %v806 = vpop.f32.mrf.mxu0
      %v807 = vadd.f32 %v635, %v806
      %v808 = vpop.f32.mrf.mxu0
      %v809 = vadd.f32 %v639, %v808
      %v810 = vpop.f32.mrf.mxu0
      %v811 = vadd.f32 %v635, %v810
      %v812 = vpop.f32.mrf.mxu0
      %v813 = vadd.f32 %v639, %v812
      %814 = vmatprep.mubr.bf16.mxu0 0
      %815 = vmatmul.mubr.bf16.gmra.mxu0 %v298
      %v816 = vpop.f32.mrf.mxu0
      %v817 = vadd.f32 %v635, %v816
      %v818 = vpop.f32.mrf.mxu0
      %v819 = vadd.f32 %v639, %v818
      %v820 = vpop.f32.mrf.mxu0
      %v821 = vadd.f32 %v635, %v820
      %v822 = vpop.f32.mrf.mxu0
      %v823 = vadd.f32 %v639, %v822
      %824 = vmatprep.mubr.bf16.mxu0 0
      %825 = vmatmul.mubr.bf16.gmra.mxu0 %v299
      %v826 = vpop.f32.mrf.mxu0
      %v827 = vadd.f32 %v635, %v826
      %v828 = vpop.f32.mrf.mxu0
      %v829 = vadd.f32 %v639, %v828
      %v830 = vpop.f32.mrf.mxu0
      %v831 = vadd.f32 %v635, %v830
      %v832 = vpop.f32.mrf.mxu0
      %v833 = vadd.f32 %v639, %v832
      %834 = vdwg.mxu0
      %v835 = vpack.c.bf16 %v761, %v757
      %v836 = vpack.c.bf16 %v763, %v759
      %v837 = vpack.c.bf16 %v771, %v767
      %v838 = vpack.c.bf16 %v773, %v769
      %v839 = vpack.c.bf16 %v781, %v777
      %v840 = vpack.c.bf16 %v783, %v779
      %v841 = vpack.c.bf16 %v791, %v787
      %v842 = vpack.c.bf16 %v793, %v789
      %v843 = vpack.c.bf16 %v801, %v797
      %v844 = vpack.c.bf16 %v803, %v799
      %v845 = vpack.c.bf16 %v811, %v807
      %v846 = vpack.c.bf16 %v813, %v809
      %v847 = vpack.c.bf16 %v821, %v817
      %v848 = vpack.c.bf16 %v823, %v819
      %v849 = vpack.c.bf16 %v831, %v827
      %v850 = vpack.c.bf16 %v833, %v829
      %v867 = vunpack.c.l.b16 %v835
      %v868 = vunpack.c.l.b16 %v836
      %v869 = vunpack.c.h.b16 %v835
      %v870 = vunpack.c.h.b16 %v836
      %v871 = vunpack.c.l.b16 %v837
      %v872 = vunpack.c.l.b16 %v838
      %v873 = vunpack.c.h.b16 %v837
      %v874 = vunpack.c.h.b16 %v838
      %v875 = vunpack.c.l.b16 %v839
      %v876 = vunpack.c.l.b16 %v840
      %v877 = vunpack.c.h.b16 %v839
      %v878 = vunpack.c.h.b16 %v840
      %v879 = vunpack.c.l.b16 %v841
      %v880 = vunpack.c.l.b16 %v842
      %v881 = vunpack.c.h.b16 %v841
      %v882 = vunpack.c.h.b16 %v842
      %v883 = vunpack.c.l.b16 %v843
      %v884 = vunpack.c.l.b16 %v844
      %v885 = vunpack.c.h.b16 %v843
      %v886 = vunpack.c.h.b16 %v844
      %v887 = vunpack.c.l.b16 %v845
      %v888 = vunpack.c.l.b16 %v846
      %v889 = vunpack.c.h.b16 %v845
      %v890 = vunpack.c.h.b16 %v846
      %v891 = vunpack.c.l.b16 %v847
      %v892 = vunpack.c.l.b16 %v848
      %v893 = vunpack.c.h.b16 %v847
      %v894 = vunpack.c.h.b16 %v848
      %v895 = vunpack.c.l.b16 %v849
      %v896 = vunpack.c.l.b16 %v850
      %v897 = vunpack.c.h.b16 %v849
      %v898 = vunpack.c.h.b16 %v850
      %v899 = vpack.c.b16 %v868, %v867
      %v900 = vpack.c.b16 %v870, %v869
      %v901 = vpack.c.b16 %v872, %v871
      %v902 = vpack.c.b16 %v874, %v873
      %v903 = vpack.c.b16 %v876, %v875
      %v904 = vpack.c.b16 %v878, %v877
      %v905 = vpack.c.b16 %v880, %v879
      %v906 = vpack.c.b16 %v882, %v881
      %v907 = vpack.c.b16 %v884, %v883
      %v908 = vpack.c.b16 %v886, %v885
      %v909 = vpack.c.b16 %v888, %v887
      %v910 = vpack.c.b16 %v890, %v889
      %v911 = vpack.c.b16 %v892, %v891
      %v912 = vpack.c.b16 %v894, %v893
      %v913 = vpack.c.b16 %v896, %v895
      %v914 = vpack.c.b16 %v898, %v897
      %s931 = scalar_lea.vmem %s213, 16
      %932 = vst [vmem:[%s931] sm:$0xff] %v899
      %933 = vst [vmem:[%s931 + $0x8] sm:$0xff] %v900
      %934 = vst [vmem:[%s931 + $0x20] sm:$0xff] %v901
      %935 = vst [vmem:[%s931 + $0x28] sm:$0xff] %v902
      %936 = vst [vmem:[%s931 + $0x40] sm:$0xff] %v903
      %937 = vst [vmem:[%s931 + $0x48] sm:$0xff] %v904
      %938 = vst [vmem:[%s931 + $0x60] sm:$0xff] %v905
      %939 = vst [vmem:[%s931 + $0x68] sm:$0xff] %v906
      %940 = vst [vmem:[%s931 + $0x80] sm:$0xff] %v907
      %941 = vst [vmem:[%s931 + $0x88] sm:$0xff] %v908
      %942 = vst [vmem:[%s931 + $0xa0] sm:$0xff] %v909
      %943 = vst [vmem:[%s931 + $0xa8] sm:$0xff] %v910
      %944 = vst [vmem:[%s931 + $0xc0] sm:$0xff] %v911
      %945 = vst [vmem:[%s931 + $0xc8] sm:$0xff] %v912
      %946 = vst [vmem:[%s931 + $0xe0] sm:$0xff] %v913
      %947 = vst [vmem:[%s931 + $0xe8] sm:$0xff] %v914
      %s948 = smul.u32 8, %s19
      %p949 = scmp.lt.s32.totalorder %s18, 1
      %s950 = scalar_select %p949, %s18, 1
      %p951 = scmp.lt.s32.totalorder %s948, 15
      %s952 = scalar_select %p951, %s948, 15
      %s953 = smul.addr %s952, 8
      %s954 = smul.addr %s950, 128
      %s955 = sadd.s32 %s953, %s954
      %s956 = smul.addr %s955, 4
      %s957 = scalar_lea.vmem %s3, %s956
      // Predicated region
      $region33: #{unet_up_block_forward.4} parent=31 // pred_check
        %p958 = pneg %p116
      $region34: #{unet_up_block_forward.4} parent=31 // pred_check_branch
        %960 = sbr.rel (%p958) target = $region36
      $region35: #{unet_up_block_forward.4} parent=31 // pred_region
        %s961 = smul.u32 8, %s19
      $region36: #{unet_up_block_forward.4} parent=31 // pred_fallthru
        _
    $region32: #{unet_up_block_forward.4} parent=5 // pred_fallthru
      _
    %p962 = scmp.le.s32.totalorder 2, %s9
    // Predicated region
    $region37: #{unet_up_block_forward.4} parent=5 // pred_check
      %p963 = pneg %p962
    $region38: #{unet_up_block_forward.4} parent=5 // pred_check_branch
      %965 = sbr.rel (%p963) target = $region40
    $region39: #{unet_up_block_forward.4} parent=5 // pred_region
      %s966 = ssub.s32 %s9, 2
      // Predicated region
      $region41: #{unet_up_block_forward.4} parent=39 // pred_check
        %p967 = pneg %p122
      $region42: #{unet_up_block_forward.4} parent=39 // pred_check_branch
        %969 = sbr.rel (%p967) target = $region44
      $region43: #{unet_up_block_forward.4} parent=39 // pred_region
        %s970 = smul.u32 8, %s21
        %p971 = scmp.lt.s32.totalorder %s20, 1
        %s972 = scalar_select %p971, %s20, 1
        %p973 = scmp.lt.s32.totalorder %s970, 15
        %s974 = scalar_select %p973, %s970, 15
        %s975 = smul.addr %s974, 8
        %s976 = smul.addr %s972, 128
        %s977 = sadd.s32 %s975, %s976
        %s978 = smul.addr %s977, 4
        %s979 = scalar_lea.vmem %s3, %s978
      $region44: #{unet_up_block_forward.4} parent=39 // pred_fallthru
        _
    $region40: #{unet_up_block_forward.4} parent=5 // pred_fallthru
      _
  $region6: #{unet_up_block_forward.4} parent=0 // loop_footer
    %s13 = sadd.s32 1, %s9
  $region7: #{unet_up_block_forward.4} parent=0 // loop_footer_branch
    %8 = sbr.rel target = $region3
  $region8: #{unet_up_block_forward.4} parent=0 // loop_exit
    _

// kernel: unet_up_block_forward.5
$region0: #{unet_up_block_forward.5}
  #allocation0 [shape = 'u32[]', space=smem, size = 0x4, offset = 0x4, fixed_abs, tag = 'smem constant byte address 0x4 - core index']
  #allocation1 [shape = 'u32[144,128]{1,0:T(1,128)}', space=vmem, size = 0x12000, scoped, tag = 'internal scratch']
  %s0 = inlined_call_operand.vmem [shape: bf16[2,34,34,128], index: 0, kind: input, shape index: {}]
  %s1 = inlined_call_operand.vmem [shape: bf16[3,3,128,128], index: 1, kind: input, shape index: {}]
  %s2 = inlined_call_operand.vmem [shape: f32[1,128], index: 2, kind: input, shape index: {}]
  %s3 = inlined_call_operand.vmem [shape: bf16[2,32,32,128], index: 3, kind: output, shape index: {}]
  %s4 = sld [smem:[#allocation0]]
  $region45: #{unet_up_block_forward.5} parent=0
    _
  %s6 = ssub.s32 1, %s4
  %s7 = scalar_select 0, %s6, %s4
  loop: start=0, step=1, limit=18
  $region2: #{unet_up_block_forward.5} parent=0 // loop_pre_header
    _
  $region3: #{unet_up_block_forward.5} parent=0 // loop_header
    %s9 = sphi 0, %s13
    %p10 = scmp.ge.s32.totalorder %s9, 18
    %s16 = sphi 0, %s28
    %s17 = sphi 0, %s24
    %s18 = sphi 0, %s16
    %s19 = sphi 0, %s17
    %s20 = sphi 0, %s18
    %s21 = sphi 0, %s19
    %s31 = sphi 0, %s33
    %s34 = sphi 0, %s31
    %s35 = sphi 0, %s34
    %s51 = sphi 0, %s35
    %s55 = sphi 0, %s55
    %s57 = sphi 0, %s55
    %s58 = sphi 0, %s57
    %s72 = sphi 0, %s58
    %s76 = sphi 0, %s76
    %s78 = sphi 0, %s76
    %s79 = sphi 0, %s78
    %s93 = sphi 0, %s79
    %s101 = sphi 0, %s103
    %s104 = sphi 0, %s101
    %s105 = sphi 0, %s104
    %s121 = sphi 0, %s105
  $region4: #{unet_up_block_forward.5} parent=0 // loop_header_branch
    %12 = sbr.rel (%p10) target = $region8
  $region5: #{unet_up_block_forward.5} parent=0 // loop_body
    %s14 = ssub.s32 %s9, 1
    %s15 = ssub.s32 %s9, 2
    %s22 = sadd.s32 1, %s17
    %p23 = scmp.ge.s32.totalorder %s22, 8
    %s24 = scalar_select %p23, 0, %s22
    %s25 = sadd.s32 1, %s16
    %s26 = scalar_select %p23, %s25, %s16
    %p27 = scmp.ge.s32.totalorder %s26, 2
    %s28 = scalar_select %p27, 0, %s26
    %s29 = ssub.s32 %s16, %s28
    %p30 = scmp.eq.s32.totalorder %s29, 0
    %s32 = sadd.s32 %s31, 1
    %s33 = scalar_select %p30, %s31, %s32
    %p36 = pneg %p30
    %p37 = scmp.eq.s32.totalorder %s9, 15
    %p38 = por %p36, %p37
    %p39 = scmp.ne.s32.totalorder %s31, %s34
    %p40 = scmp.eq.s32.totalorder %s9, 0
    %p41 = por %p39, %p40
    %p42 = scmp.ne.s32.totalorder %s31, %s34
    %p43 = scmp.eq.s32.totalorder %s14, 15
    %p44 = por %p42, %p43
    %p45 = scmp.ne.s32.totalorder %s34, %s35
    %p46 = scmp.eq.s32.totalorder %s14, 0
    %p47 = por %p45, %p46
    %p48 = scmp.ne.s32.totalorder %s34, %s35
    %p49 = scmp.eq.s32.totalorder %s15, 15
    %p50 = por %p48, %p49
    %p52 = scmp.ne.s32.totalorder %s35, %s51
    %p53 = scmp.eq.s32.totalorder %s15, 0
    %p54 = por %p52, %p53
    %s56 = sadd.s32 %s55, 1
    %p59 = scmp.eq.s32.totalorder %s9, 15
    %p60 = scmp.ne.s32.totalorder %s55, %s57
    %p61 = scmp.eq.s32.totalorder %s9, 0
    %p62 = por %p60, %p61
    %p63 = scmp.ne.s32.totalorder %s55, %s57
    %p64 = scmp.eq.s32.totalorder %s14, 15
    %p65 = por %p63, %p64
    %p66 = scmp.ne.s32.totalorder %s57, %s58
    %p67 = scmp.eq.s32.totalorder %s14, 0
    %p68 = por %p66, %p67
    %p69 = scmp.ne.s32.totalorder %s57, %s58
    %p70 = scmp.eq.s32.totalorder %s15, 15
    %p71 = por %p69, %p70
    %p73 = scmp.ne.s32.totalorder %s58, %s72
    %p74 = scmp.eq.s32.totalorder %s15, 0
    %p75 = por %p73, %p74
    %s77 = sadd.s32 %s76, 1
    %p80 = scmp.eq.s32.totalorder %s9, 15
    %p81 = scmp.ne.s32.totalorder %s76, %s78
    %p82 = scmp.eq.s32.totalorder %s9, 0
    %p83 = por %p81, %p82
    %p84 = scmp.ne.s32.totalorder %s76, %s78
    %p85 = scmp.eq.s32.totalorder %s14, 15
    %p86 = por %p84, %p85
    %p87 = scmp.ne.s32.totalorder %s78, %s79
    %p88 = scmp.eq.s32.totalorder %s14, 0
    %p89 = por %p87, %p88
    %p90 = scmp.ne.s32.totalorder %s78, %s79
    %p91 = scmp.eq.s32.totalorder %s15, 15
    %p92 = por %p90, %p91
    %p94 = scmp.ne.s32.totalorder %s79, %s93
    %p95 = scmp.eq.s32.totalorder %s15, 0
    %p96 = por %p94, %p95
    %s97 = ssub.s32 %s16, %s28
    %s98 = ssub.s32 %s17, %s24
    %s99 = sor.u32 %s97, %s98
    %p100 = scmp.eq.s32.totalorder %s99, 0
    %s102 = sadd.s32 %s101, 1
    %s103 = scalar_select %p100, %s101, %s102
    %p106 = pneg %p100
    %p107 = scmp.eq.s32.totalorder %s9, 15
    %p108 = por %p106, %p107
    %p109 = scmp.ne.s32.totalorder %s101, %s104
    %p110 = scmp.eq.s32.totalorder %s9, 0
    %p111 = por %p109, %p110
    %p112 = scmp.ne.s32.totalorder %s101, %s104
    %p113 = scmp.eq.s32.totalorder %s14, 15
    %p114 = por %p112, %p113
    %p115 = scmp.ne.s32.totalorder %s104, %s105
    %p116 = scmp.eq.s32.totalorder %s14, 0
    %p117 = por %p115, %p116
    %p118 = scmp.ne.s32.totalorder %s104, %s105
    %p119 = scmp.eq.s32.totalorder %s15, 15
    %p120 = por %p118, %p119
    %p122 = scmp.ne.s32.totalorder %s105, %s121
    %p123 = scmp.eq.s32.totalorder %s15, 0
    %p124 = por %p122, %p123
    %p125 = scmp.le.s32.totalorder 1, %s9
    %p126 = scmp.lt.s32.totalorder %s9, 17
    %p127 = pnand %p125, %p126
    %p128 = pneg %p127
    // Predicated region
    $region9: #{unet_up_block_forward.5} parent=5 // pred_check
      _
    $region10: #{unet_up_block_forward.5} parent=5 // pred_check_branch
      %130 = sbr.rel (%p127) target = $region12
    $region11: #{unet_up_block_forward.5} parent=5 // pred_region
      %s131 = ssub.s32 %s9, 1
      // Predicated region
      $region13: #{unet_up_block_forward.5} parent=11 // pred_check
        %p132 = pneg %p68
      $region14: #{unet_up_block_forward.5} parent=11 // pred_check_branch
        %134 = sbr.rel (%p132) target = $region16
      $region15: #{unet_up_block_forward.5} parent=11 // pred_region
        _
      $region16: #{unet_up_block_forward.5} parent=11 // pred_fallthru
        _
      // Predicated region
      $region17: #{unet_up_block_forward.5} parent=11 // pred_check
        %p135 = pneg %p89
      $region18: #{unet_up_block_forward.5} parent=11 // pred_check_branch
        %137 = sbr.rel (%p135) target = $region20
      $region19: #{unet_up_block_forward.5} parent=11 // pred_region
        _
      $region20: #{unet_up_block_forward.5} parent=11 // pred_fallthru
        _
    $region12: #{unet_up_block_forward.5} parent=5 // pred_fallthru
      _
    %p138 = scmp.lt.s32.totalorder %s9, 16
    // Predicated region
    $region21: #{unet_up_block_forward.5} parent=5 // pred_check
      %p139 = pneg %p138
    $region22: #{unet_up_block_forward.5} parent=5 // pred_check_branch
      %141 = sbr.rel (%p139) target = $region24
    $region23: #{unet_up_block_forward.5} parent=5 // pred_region
      // Predicated region
      $region25: #{unet_up_block_forward.5} parent=23 // pred_check
        %p142 = pneg %p41
      $region26: #{unet_up_block_forward.5} parent=23 // pred_check_branch
        %144 = sbr.rel (%p142) target = $region28
      $region27: #{unet_up_block_forward.5} parent=23 // pred_region
        %p145 = scmp.lt.s32.totalorder %s16, 1
        %s146 = scalar_select %p145, %s16, 1
        %s147 = smul.addr %s146, 170
        %s148 = smul.addr %s147, 4
        %s149 = scalar_lea.vmem %s0, %s148
      $region28: #{unet_up_block_forward.5} parent=23 // pred_fallthru
        _
    $region24: #{unet_up_block_forward.5} parent=5 // pred_fallthru
      _
    %p150 = scmp.le.s32.totalorder 1, %s9
    %p151 = scmp.lt.s32.totalorder %s9, 17
    %p152 = pnand %p150, %p151
    %p153 = pneg %p152
    // Predicated region
    $region29: #{unet_up_block_forward.5} parent=5 // pred_check
      _
    $region30: #{unet_up_block_forward.5} parent=5 // pred_check_branch
      %155 = sbr.rel (%p152) target = $region32
    $region31: #{unet_up_block_forward.5} parent=5 // pred_region
      %s156 = ssub.s32 %s9, 1
      %p157 = scmp.lt.s32.totalorder %s18, 1
      %s158 = scalar_select %p157, %s18, 1
      %s159 = smul.addr %s158, 170
      %s160 = smul.addr %s159, 4
      %s161 = scalar_lea.vmem %s0, %s160
      %p162 = pneg %p47
      %p163 = pneg %p44
      %p164 = pneg %p68
      %p165 = pneg %p65
      %p166 = pneg %p89
      %p167 = pneg %p86
      %p168 = pneg %p117
      %p169 = pneg %p114
      %s170 = smul.u32 4, %s19
      %p171 = scmp.lt.s32.totalorder %s18, 1
      %s172 = scalar_select %p171, %s18, 1
      %p173 = scmp.lt.s32.totalorder %s170, 31
      %s174 = scalar_select %p173, %s170, 31
      %s175 = smul.addr %s174, 4
      %s176 = smul.addr %s172, 128
      %s177 = sadd.s32 %s175, %s176
      %s178 = smul.addr %s177, 4
      %s179 = scalar_lea.vmem %s3, %s178
      %p180 = scmp.lt.s32.totalorder %s18, 1
      %s181 = scalar_select %p180, %s18, 1
      %s182 = smul.addr %s181, 170
      %s183 = smul.addr %s182, 4
      %s184 = scalar_lea.vmem %s0, %s183
      %s185 = smul.u32 4, %s19
      %p186 = scmp.lt.s32.totalorder %s18, 1
      %s187 = scalar_select %p186, %s18, 1
      %p188 = scmp.lt.s32.totalorder %s185, 31
      %s189 = scalar_select %p188, %s185, 31
      %s190 = smul.addr %s189, 4
      %s191 = smul.addr %s187, 128
      %s192 = sadd.s32 %s190, %s191
      %s193 = smul.addr %s192, 4
      %s194 = scalar_lea.vmem %s3, %s193
      %s195 = smul.u32 4, %s19
      %s197 = smul.u32 %s19, 4
      %s198 = smul.u32 %s197, 5
      %s199 = smul.addr %s198, 4
      %s200 = scalar_lea.vmem %s184, %s199
      %v201 = vld [vmem:[%s200] sm:$0xf]
      %v202 = vld [vmem:[%s200 + $0x4] sm:$0xf]
      %v203 = vld [vmem:[%s200 + $0x8] sm:$0xf]
      %v204 = vld [vmem:[%s200 + $0xc] sm:$0xf]
      %v205 = vld [vmem:[%s200 + $0x14] sm:$0xf]
      %v206 = vld [vmem:[%s200 + $0x18] sm:$0xf]
      %v207 = vld [vmem:[%s200 + $0x1c] sm:$0xf]
      %v208 = vld [vmem:[%s200 + $0x20] sm:$0xf]
      %v209 = vld [vmem:[%s200 + $0x28] sm:$0xf]
      %v210 = vld [vmem:[%s200 + $0x2c] sm:$0xf]
      %v211 = vld [vmem:[%s200 + $0x30] sm:$0xf]
      %v212 = vld [vmem:[%s200 + $0x34] sm:$0xf]
      %v213 = vld [vmem:[%s200 + $0x3c] sm:$0xf]
      %v214 = vld [vmem:[%s200 + $0x40] sm:$0xf]
      %v215 = vld [vmem:[%s200 + $0x44] sm:$0xf]
      %v216 = vld [vmem:[%s200 + $0x48] sm:$0xf]
      %v217 = vld [vmem:[%s1] sm:$0xf]
      %v218 = vld [vmem:[%s1 + $0x4] sm:$0xf]
      %v219 = vld [vmem:[%s1 + $0x8] sm:$0xf]
      %v220 = vld [vmem:[%s1 + $0xc] sm:$0xf]
      %v221 = vld [vmem:[%s1 + $0x10] sm:$0xf]
      %v222 = vld [vmem:[%s1 + $0x14] sm:$0xf]
      %v223 = vld [vmem:[%s1 + $0x18] sm:$0xf]
      %v224 = vld [vmem:[%s1 + $0x1c] sm:$0xf]
      %v225 = vld [vmem:[%s1 + $0x20] sm:$0xf]
      %v226 = vld [vmem:[%s1 + $0x24] sm:$0xf]
      %v227 = vld [vmem:[%s1 + $0x28] sm:$0xf]
      %v228 = vld [vmem:[%s1 + $0x2c] sm:$0xf]
      %v229 = vld [vmem:[%s1 + $0x30] sm:$0xf]
      %v230 = vld [vmem:[%s1 + $0x34] sm:$0xf]
      %v231 = vld [vmem:[%s1 + $0x38] sm:$0xf]
      %v232 = vld [vmem:[%s1 + $0x3c] sm:$0xf]
      %v233 = vld [vmem:[%s200 + $0x10] sm:$0x1]
      %v234 = vld [vmem:[%s200 + $0x24] sm:$0x1]
      %v235 = vld [vmem:[%s200 + $0x38] sm:$0x1]
      %v236 = vld [vmem:[%s200 + $0x4c] sm:$0x1]
      %vm237 = vsmask.f32 3328
      %vm238 = vsmask.f32 7440
      %vm239 = vmor %vm237, %vm238
      %v241 = vshrl.u32 %v201, 16
      %v243 = vrot.slane %v241, 4
      %v244 = vshll.u32 %v201, 16
      %v246 = vrot.slane %v244, 5
      %v247 = vor.u32 %v243, %v246
      %v248 = vrot.slane %v247, 4
      %v250 = vshll.u32 %v202, 16
      %v252 = vrot.slane %v250, 5
      %v253 = vsel %vm239, %v248, %v252
      %v254 = vshrl.u32 %v202, 16
      %v256 = vrot.slane %v254, 4
      %v257 = vor.u32 %v256, %v252
      %v258 = vrot.slane %v257, 4
      %v260 = vshll.u32 %v203, 16
      %v262 = vrot.slane %v260, 5
      %v263 = vsel %vm239, %v258, %v262
      %v264 = vshrl.u32 %v203, 16
      %v266 = vrot.slane %v264, 4
      %v267 = vor.u32 %v266, %v262
      %v268 = vrot.slane %v267, 4
      %v270 = vshll.u32 %v204, 16
      %v272 = vrot.slane %v270, 5
      %v273 = vsel %vm239, %v268, %v272
      %v274 = vshrl.u32 %v204, 16
      %v276 = vrot.slane %v274, 4
      %v277 = vor.u32 %v276, %v272
      %v278 = vrot.slane %v277, 4
      %v280 = vshll.u32 %v233, 16
      %v282 = vrot.slane %v280, 5
      %v283 = vsel %vm239, %v278, %v282
      %v285 = vshrl.u32 %v205, 16
      %v287 = vrot.slane %v285, 4
      %v288 = vshll.u32 %v205, 16
      %v290 = vrot.slane %v288, 5
      %v291 = vor.u32 %v287, %v290
      %v292 = vrot.slane %v291, 4
      %v294 = vshll.u32 %v206, 16
      %v296 = vrot.slane %v294, 5
      %v297 = vsel %vm239, %v292, %v296
      %v298 = vshrl.u32 %v206, 16
      %v300 = vrot.slane %v298, 4
      %v301 = vor.u32 %v300, %v296
      %v302 = vrot.slane %v301, 4
      %v304 = vshll.u32 %v207, 16
      %v306 = vrot.slane %v304, 5
      %v307 = vsel %vm239, %v302, %v306
      %v308 = vshrl.u32 %v207, 16
      %v310 = vrot.slane %v308, 4
      %v311 = vor.u32 %v310, %v306
      %v312 = vrot.slane %v311, 4
      %v314 = vshll.u32 %v208, 16
      %v316 = vrot.slane %v314, 5
      %v317 = vsel %vm239, %v312, %v316
      %v318 = vshrl.u32 %v208, 16
      %v320 = vrot.slane %v318, 4
      %v321 = vor.u32 %v320, %v316
      %v322 = vrot.slane %v321, 4
      %v324 = vshll.u32 %v234, 16
      %v326 = vrot.slane %v324, 5
      %v327 = vsel %vm239, %v322, %v326
      %v329 = vshrl.u32 %v209, 16
      %v331 = vrot.slane %v329, 4
      %v332 = vshll.u32 %v209, 16
      %v334 = vrot.slane %v332, 5
      %v335 = vor.u32 %v331, %v334
      %v336 = vrot.slane %v335, 4
      %v338 = vshll.u32 %v210, 16
      %v340 = vrot.slane %v338, 5
      %v341 = vsel %vm239, %v336, %v340
      %v342 = vshrl.u32 %v210, 16
      %v344 = vrot.slane %v342, 4
      %v345 = vor.u32 %v344, %v340
      %v346 = vrot.slane %v345, 4
      %v348 = vshll.u32 %v211, 16
      %v350 = vrot.slane %v348, 5
      %v351 = vsel %vm239, %v346, %v350
      %v352 = vshrl.u32 %v211, 16
      %v354 = vrot.slane %v352, 4
      %v355 = vor.u32 %v354, %v350
      %v356 = vrot.slane %v355, 4
      %v358 = vshll.u32 %v212, 16
      %v360 = vrot.slane %v358, 5
      %v361 = vsel %vm239, %v356, %v360
      %v362 = vshrl.u32 %v212, 16
      %v364 = vrot.slane %v362, 4
      %v365 = vor.u32 %v364, %v360
      %v366 = vrot.slane %v365, 4
      %v368 = vshll.u32 %v235, 16
      %v370 = vrot.slane %v368, 5
      %v371 = vsel %vm239, %v366, %v370
      %v373 = vshrl.u32 %v213, 16
      %v375 = vrot.slane %v373, 4
      %v376 = vshll.u32 %v213, 16
      %v378 = vrot.slane %v376, 5
      %v379 = vor.u32 %v375, %v378
      %v380 = vrot.slane %v379, 4
      %v382 = vshll.u32 %v214, 16
      %v384 = vrot.slane %v382, 5
      %v385 = vsel %vm239, %v380, %v384
      %v386 = vshrl.u32 %v214, 16
      %v388 = vrot.slane %v386, 4
      %v389 = vor.u32 %v388, %v384
      %v390 = vrot.slane %v389, 4
      %v392 = vshll.u32 %v215, 16
      %v394 = vrot.slane %v392, 5
      %v395 = vsel %vm239, %v390, %v394
      %v396 = vshrl.u32 %v215, 16
      %v398 = vrot.slane %v396, 4
      %v399 = vor.u32 %v398, %v394
      %v400 = vrot.slane %v399, 4
      %v402 = vshll.u32 %v216, 16
      %v404 = vrot.slane %v402, 5
      %v405 = vsel %vm239, %v400, %v404
      %v406 = vshrl.u32 %v216, 16
      %v408 = vrot.slane %v406, 4
      %v409 = vor.u32 %v408, %v404
      %v410 = vrot.slane %v409, 4
      %v412 = vshll.u32 %v236, 16
      %v414 = vrot.slane %v412, 5
      %v415 = vsel %vm239, %v410, %v414
      %s416 = scalar_lea.vmem %s1, 64
      %v417 = vld [vmem:[%s416] sm:$0xf]
      %v418 = vld [vmem:[%s416 + $0x4] sm:$0xf]
      %v419 = vld [vmem:[%s416 + $0x8] sm:$0xf]
      %v420 = vld [vmem:[%s416 + $0xc] sm:$0xf]
      %v421 = vld [vmem:[%s416 + $0x10] sm:$0xf]
      %v422 = vld [vmem:[%s416 + $0x14] sm:$0xf]
      %v423 = vld [vmem:[%s416 + $0x18] sm:$0xf]
      %v424 = vld [vmem:[%s416 + $0x1c] sm:$0xf]
      %v425 = vld [vmem:[%s416 + $0x20] sm:$0xf]
      %v426 = vld [vmem:[%s416 + $0x24] sm:$0xf]
      %v427 = vld [vmem:[%s416 + $0x28] sm:$0xf]
      %v428 = vld [vmem:[%s416 + $0x2c] sm:$0xf]
      %v429 = vld [vmem:[%s416 + $0x30] sm:$0xf]
      %v430 = vld [vmem:[%s416 + $0x34] sm:$0xf]
      %v431 = vld [vmem:[%s416 + $0x38] sm:$0xf]
      %v432 = vld [vmem:[%s416 + $0x3c] sm:$0xf]
      %v433 = vunpack.c.l.b16 %v253
      %v434 = vunpack.c.l.b16 %v263
      %v435 = vunpack.c.l.b16 %v273
      %v436 = vunpack.c.l.b16 %v283
      %v437 = vunpack.c.l.b16 %v297
      %v438 = vunpack.c.l.b16 %v307
      %v439 = vunpack.c.l.b16 %v317
      %v440 = vunpack.c.l.b16 %v327
      %v441 = vunpack.c.l.b16 %v341
      %v442 = vunpack.c.l.b16 %v351
      %v443 = vunpack.c.l.b16 %v361
      %v444 = vunpack.c.l.b16 %v371
      %v445 = vunpack.c.l.b16 %v385
      %v446 = vunpack.c.l.b16 %v395
      %v447 = vunpack.c.l.b16 %v405
      %v448 = vunpack.c.l.b16 %v415
      %v449 = vpack.c.b16 %v434, %v433
      %v450 = vpack.c.b16 %v436, %v435
      %v451 = vpack.c.b16 %v438, %v437
      %v452 = vpack.c.b16 %v440, %v439
      %v453 = vpack.c.b16 %v442, %v441
      %v454 = vpack.c.b16 %v444, %v443
      %v455 = vpack.c.b16 %v446, %v445
      %v456 = vpack.c.b16 %v448, %v447
      %v481 = vunpack.c.l.b16 %v417
      %v482 = vunpack.c.l.b16 %v418
      %v483 = vunpack.c.l.b16 %v419
      %v484 = vunpack.c.l.b16 %v420
      %v485 = vunpack.c.l.b16 %v421
      %v486 = vunpack.c.l.b16 %v422
      %v487 = vunpack.c.l.b16 %v423
      %v488 = vunpack.c.l.b16 %v424
      %v489 = vunpack.c.l.b16 %v425
      %v490 = vunpack.c.l.b16 %v426
      %v491 = vunpack.c.l.b16 %v427
      %v492 = vunpack.c.l.b16 %v428
      %v493 = vunpack.c.l.b16 %v429
      %v494 = vunpack.c.l.b16 %v430
      %v495 = vunpack.c.l.b16 %v431
      %v496 = vunpack.c.l.b16 %v432
      %v497 = vpack.c.b16 %v482, %v481
      %v498 = vpack.c.b16 %v484, %v483
      %v499 = vpack.c.b16 %v486, %v485
      %v500 = vpack.c.b16 %v488, %v487
      %v501 = vpack.c.b16 %v490, %v489
      %v502 = vpack.c.b16 %v492, %v491
      %v503 = vpack.c.b16 %v494, %v493
      %v504 = vpack.c.b16 %v496, %v495
      %513 = vmatprep.subr.bf16.mxu0 0
      %514 = vmatpush1.bf16.msra.mxu0 %v504
      %515 = vmatprep.subr.bf16.mxu0 0
      %516 = vmatpush1.bf16.msra.mxu0 %v503
      %517 = vmatprep.subr.bf16.mxu0 0
      %518 = vmatpush1.bf16.msra.mxu0 %v502
      %519 = vmatprep.subr.bf16.mxu0 0
      %520 = vmatpush1.bf16.msra.mxu0 %v501
      %521 = vmatprep.subr.bf16.mxu0 0
      %522 = vmatpush1.bf16.msra.mxu0 %v500
      %523 = vmatprep.subr.bf16.mxu0 0
      %524 = vmatpush1.bf16.msra.mxu0 %v499
      %525 = vmatprep.subr.bf16.mxu0 0
      %526 = vmatpush1.bf16.msra.mxu0 %v498
      %527 = vmatprep.subr.bf16.mxu0 0
      %528 = vmatpush1.bf16.msra.mxu0 %v497
      %529 = vmatprep.subr.bf16.mxu0 0
      %530 = vmatpush2.bf16.msra.mxu0 0
      %531 = vmatprep.subr.bf16.mxu0 0
      %532 = vmatpush2.bf16.msra.mxu0 0
      %533 = vmatprep.subr.bf16.mxu0 0
      %534 = vmatpush2.bf16.msra.mxu0 0
      %535 = vmatprep.subr.bf16.mxu0 0
      %536 = vmatpush2.bf16.msra.mxu0 0
      %537 = vmatprep.subr.bf16.mxu0 0
      %538 = vmatpush2.bf16.msra.mxu0 0
      %539 = vmatprep.subr.bf16.mxu0 0
      %540 = vmatpush2.bf16.msra.mxu0 0
      %541 = vmatprep.subr.bf16.mxu0 0
      %542 = vmatpush2.bf16.msra.mxu0 0
      %543 = vmatprep.subr.bf16.mxu0 0
      %544 = vmatpush2.bf16.msra.mxu0 0
      %545 = vmatprep.mubr.bf16.mxu0 0
      %546 = vmatmul.mubr.bf16.gmra.mxu0 %v449
      %v547 = vpop.f32.mrf.mxu0
      %v548 = vadd.f32 0.0, %v547
      %v549 = vpop.f32.mrf.mxu0
      %v550 = vpop.f32.mrf.mxu0
      %v551 = vadd.f32 0.0, %v550
      %v552 = vpop.f32.mrf.mxu0
      %553 = vmatprep.mubr.bf16.mxu0 0
      %554 = vmatmul.mubr.bf16.gmra.mxu0 %v450
      %v555 = vpop.f32.mrf.mxu0
      %v556 = vadd.f32 0.0, %v555
      %v557 = vpop.f32.mrf.mxu0
      %v558 = vpop.f32.mrf.mxu0
      %v559 = vadd.f32 0.0, %v558
      %v560 = vpop.f32.mrf.mxu0
      %561 = vmatprep.mubr.bf16.mxu0 0
      %562 = vmatmul.mubr.bf16.gmra.mxu0 %v451
      %v563 = vpop.f32.mrf.mxu0
      %v564 = vadd.f32 0.0, %v563
      %v565 = vpop.f32.mrf.mxu0
      %v566 = vpop.f32.mrf.mxu0
      %v567 = vadd.f32 0.0, %v566
      %v568 = vpop.f32.mrf.mxu0
      %569 = vmatprep.mubr.bf16.mxu0 0
      %570 = vmatmul.mubr.bf16.gmra.mxu0 %v452
      %v571 = vpop.f32.mrf.mxu0
      %v572 = vadd.f32 0.0, %v571
      %v573 = vpop.f32.mrf.mxu0
      %v574 = vpop.f32.mrf.mxu0
      %v575 = vadd.f32 0.0, %v574
      %v576 = vpop.f32.mrf.mxu0
      %577 = vmatprep.mubr.bf16.mxu0 0
      %578 = vmatmul.mubr.bf16.gmra.mxu0 %v453
      %v579 = vpop.f32.mrf.mxu0
      %v580 = vadd.f32 0.0, %v579
      %v581 = vpop.f32.mrf.mxu0
      %v582 = vpop.f32.mrf.mxu0
      %v583 = vadd.f32 0.0, %v582
      %v584 = vpop.f32.mrf.mxu0
      %585 = vmatprep.mubr.bf16.mxu0 0
      %586 = vmatmul.mubr.bf16.gmra.mxu0 %v454
      %v587 = vpop.f32.mrf.mxu0
      %v588 = vadd.f32 0.0, %v587
      %v589 = vpop.f32.mrf.mxu0
      %v590 = vpop.f32.mrf.mxu0
      %v591 = vadd.f32 0.0, %v590
      %v592 = vpop.f32.mrf.mxu0
      %593 = vmatprep.mubr.bf16.mxu0 0
      %594 = vmatmul.mubr.bf16.gmra.mxu0 %v455
      %v595 = vpop.f32.mrf.mxu0
      %v596 = vadd.f32 0.0, %v595
      %v597 = vpop.f32.mrf.mxu0
      %v598 = vpop.f32.mrf.mxu0
      %v599 = vadd.f32 0.0, %v598
      %v600 = vpop.f32.mrf.mxu0
      %601 = vmatprep.mubr.bf16.mxu0 0
      %602 = vmatmul.mubr.bf16.gmra.mxu0 %v456
      %v603 = vpop.f32.mrf.mxu0
      %v604 = vadd.f32 0.0, %v603
      %v605 = vpop.f32.mrf.mxu0
      %v606 = vpop.f32.mrf.mxu0
      %v607 = vadd.f32 0.0, %v606
      %v608 = vpop.f32.mrf.mxu0
      %609 = vdwg.mxu0
      %v626 = vunpack.c.l.b16 %v201
      %v627 = vunpack.c.l.b16 %v202
      %v628 = vunpack.c.l.b16 %v203
      %v629 = vunpack.c.l.b16 %v204
      %v630 = vunpack.c.l.b16 %v205
      %v631 = vunpack.c.l.b16 %v206
      %v632 = vunpack.c.l.b16 %v207
      %v633 = vunpack.c.l.b16 %v208
      %v634 = vunpack.c.l.b16 %v209
      %v635 = vunpack.c.l.b16 %v210
      %v636 = vunpack.c.l.b16 %v211
      %v637 = vunpack.c.l.b16 %v212
      %v638 = vunpack.c.l.b16 %v213
      %v639 = vunpack.c.l.b16 %v214
      %v640 = vunpack.c.l.b16 %v215
      %v641 = vunpack.c.l.b16 %v216
      %v642 = vpack.c.b16 %v627, %v626
      %v643 = vpack.c.b16 %v629, %v628
      %v644 = vpack.c.b16 %v631, %v630
      %v645 = vpack.c.b16 %v633, %v632
      %v646 = vpack.c.b16 %v635, %v634
      %v647 = vpack.c.b16 %v637, %v636
      %v648 = vpack.c.b16 %v639, %v638
      %v649 = vpack.c.b16 %v641, %v640
      %v674 = vunpack.c.l.b16 %v217
      %v675 = vunpack.c.l.b16 %v218
      %v676 = vunpack.c.l.b16 %v219
      %v677 = vunpack.c.l.b16 %v220
      %v678 = vunpack.c.l.b16 %v221
      %v679 = vunpack.c.l.b16 %v222
      %v680 = vunpack.c.l.b16 %v223
      %v681 = vunpack.c.l.b16 %v224
      %v682 = vunpack.c.l.b16 %v225
      %v683 = vunpack.c.l.b16 %v226
      %v684 = vunpack.c.l.b16 %v227
      %v685 = vunpack.c.l.b16 %v228
      %v686 = vunpack.c.l.b16 %v229
      %v687 = vunpack.c.l.b16 %v230
      %v688 = vunpack.c.l.b16 %v231
      %v689 = vunpack.c.l.b16 %v232
      %v690 = vpack.c.b16 %v675, %v674
      %v691 = vpack.c.b16 %v677, %v676
      %v692 = vpack.c.b16 %v679, %v678
      %v693 = vpack.c.b16 %v681, %v680
      %v694 = vpack.c.b16 %v683, %v682
      %v695 = vpack.c.b16 %v685, %v684
      %v696 = vpack.c.b16 %v687, %v686
      %v697 = vpack.c.b16 %v689, %v688
      %706 = vmatprep.subr.bf16.mxu0 0
      %707 = vmatpush1.bf16.msra.mxu0 %v697
      %708 = vmatprep.subr.bf16.mxu0 0
      %709 = vmatpush1.bf16.msra.mxu0 %v696
      %710 = vmatprep.subr.bf16.mxu0 0
      %711 = vmatpush1.bf16.msra.mxu0 %v695
      %712 = vmatprep.subr.bf16.mxu0 0
      %713 = vmatpush1.bf16.msra.mxu0 %v694
      %714 = vmatprep.subr.bf16.mxu0 0
      %715 = vmatpush1.bf16.msra.mxu0 %v693
      %716 = vmatprep.subr.bf16.mxu0 0
      %717 = vmatpush1.bf16.msra.mxu0 %v692
      %718 = vmatprep.subr.bf16.mxu0 0
      %719 = vmatpush1.bf16.msra.mxu0 %v691
      %720 = vmatprep.subr.bf16.mxu0 0
      %721 = vmatpush1.bf16.msra.mxu0 %v690
      %722 = vmatprep.subr.bf16.mxu0 0
      %723 = vmatpush2.bf16.msra.mxu0 0
      %724 = vmatprep.subr.bf16.mxu0 0
      %725 = vmatpush2.bf16.msra.mxu0 0
      %726 = vmatprep.subr.bf16.mxu0 0
      %727 = vmatpush2.bf16.msra.mxu0 0
      %728 = vmatprep.subr.bf16.mxu0 0
      %729 = vmatpush2.bf16.msra.mxu0 0
      %730 = vmatprep.subr.bf16.mxu0 0
      %731 = vmatpush2.bf16.msra.mxu0 0
      %732 = vmatprep.subr.bf16.mxu0 0
      %733 = vmatpush2.bf16.msra.mxu0 0
      %734 = vmatprep.subr.bf16.mxu0 0
      %735 = vmatpush2.bf16.msra.mxu0 0
      %736 = vmatprep.subr.bf16.mxu0 0
      %737 = vmatpush2.bf16.msra.mxu0 0
      %738 = vmatprep.mubr.bf16.mxu0 0
      %739 = vmatmul.mubr.bf16.gmra.mxu0 %v642
      %v740 = vpop.f32.mrf.mxu0
      %v741 = vadd.f32 %v548, %v740
      %v742 = vpop.f32.mrf.mxu0
      %v743 = vpop.f32.mrf.mxu0
      %v744 = vadd.f32 %v551, %v743
      %v745 = vpop.f32.mrf.mxu0
      %746 = vmatprep.mubr.bf16.mxu0 0
      %747 = vmatmul.mubr.bf16.gmra.mxu0 %v643
      %v748 = vpop.f32.mrf.mxu0
      %v749 = vadd.f32 %v556, %v748
      %v750 = vpop.f32.mrf.mxu0
      %v751 = vpop.f32.mrf.mxu0
      %v752 = vadd.f32 %v559, %v751
      %v753 = vpop.f32.mrf.mxu0
      %754 = vmatprep.mubr.bf16.mxu0 0
      %755 = vmatmul.mubr.bf16.gmra.mxu0 %v644
      %v756 = vpop.f32.mrf.mxu0
      %v757 = vadd.f32 %v564, %v756
      %v758 = vpop.f32.mrf.mxu0
      %v759 = vpop.f32.mrf.mxu0
      %v760 = vadd.f32 %v567, %v759
      %v761 = vpop.f32.mrf.mxu0
      %762 = vmatprep.mubr.bf16.mxu0 0
      %763 = vmatmul.mubr.bf16.gmra.mxu0 %v645
      %v764 = vpop.f32.mrf.mxu0
      %v765 = vadd.f32 %v572, %v764
      %v766 = vpop.f32.mrf.mxu0
      %v767 = vpop.f32.mrf.mxu0
      %v768 = vadd.f32 %v575, %v767
      %v769 = vpop.f32.mrf.mxu0
      %770 = vmatprep.mubr.bf16.mxu0 0
      %771 = vmatmul.mubr.bf16.gmra.mxu0 %v646
      %v772 = vpop.f32.mrf.mxu0
      %v773 = vadd.f32 %v580, %v772
      %v774 = vpop.f32.mrf.mxu0
      %v775 = vpop.f32.mrf.mxu0
      %v776 = vadd.f32 %v583, %v775
      %v777 = vpop.f32.mrf.mxu0
      %778 = vmatprep.mubr.bf16.mxu0 0
      %779 = vmatmul.mubr.bf16.gmra.mxu0 %v647
      %v780 = vpop.f32.mrf.mxu0
      %v781 = vadd.f32 %v588, %v780
      %v782 = vpop.f32.mrf.mxu0
      %v783 = vpop.f32.mrf.mxu0
      %v784 = vadd.f32 %v591, %v783
      %v785 = vpop.f32.mrf.mxu0
      %786 = vmatprep.mubr.bf16.mxu0 0
      %787 = vmatmul.mubr.bf16.gmra.mxu0 %v648
      %v788 = vpop.f32.mrf.mxu0
      %v789 = vadd.f32 %v596, %v788
      %v790 = vpop.f32.mrf.mxu0
      %v791 = vpop.f32.mrf.mxu0
      %v792 = vadd.f32 %v599, %v791
      %v793 = vpop.f32.mrf.mxu0
      %794 = vmatprep.mubr.bf16.mxu0 0
      %795 = vmatmul.mubr.bf16.gmra.mxu0 %v649
      %v796 = vpop.f32.mrf.mxu0
      %v797 = vadd.f32 %v604, %v796
      %v798 = vpop.f32.mrf.mxu0
      %v799 = vpop.f32.mrf.mxu0
      %v800 = vadd.f32 %v607, %v799
      %v801 = vpop.f32.mrf.mxu0
      %802 = vdwg.mxu0
      %v803 = vld [vmem:[%s200] sm:$0xe]
      %v804 = vld [vmem:[%s200 + $0x14] sm:$0xe]
      %v805 = vld [vmem:[%s200 + $0x28] sm:$0xe]
      %v806 = vld [vmem:[%s200 + $0x3c] sm:$0xe]
      %vm815 = vcmask 1042432
      %vm816 = vcmask 1046532
      %vm817 = vmor %vm815, %vm816
      %v818 = vrot.slane %v803, 5
      %v819 = vrot.slane %v818, 4
      %v820 = vrot.slane %v202, 5
      %v821 = vsel %vm817, %v819, %v820
      %v822 = vrot.slane %v820, 4
      %v823 = vrot.slane %v203, 5
      %v824 = vsel %vm817, %v822, %v823
      %v825 = vrot.slane %v823, 4
      %v826 = vrot.slane %v204, 5
      %v827 = vsel %vm817, %v825, %v826
      %v828 = vrot.slane %v826, 4
      %v829 = vrot.slane %v233, 5
      %v830 = vsel %vm817, %v828, %v829
      %v831 = vrot.slane %v804, 5
      %v832 = vrot.slane %v831, 4
      %v833 = vrot.slane %v206, 5
      %v834 = vsel %vm817, %v832, %v833
      %v835 = vrot.slane %v833, 4
      %v836 = vrot.slane %v207, 5
      %v837 = vsel %vm817, %v835, %v836
      %v838 = vrot.slane %v836, 4
      %v839 = vrot.slane %v208, 5
      %v840 = vsel %vm817, %v838, %v839
      %v841 = vrot.slane %v839, 4
      %v842 = vrot.slane %v234, 5
      %v843 = vsel %vm817, %v841, %v842
      %v844 = vrot.slane %v805, 5
      %v845 = vrot.slane %v844, 4
      %v846 = vrot.slane %v210, 5
      %v847 = vsel %vm817, %v845, %v846
      %v848 = vrot.slane %v846, 4
      %v849 = vrot.slane %v211, 5
      %v850 = vsel %vm817, %v848, %v849
      %v851 = vrot.slane %v849, 4
      %v852 = vrot.slane %v212, 5
      %v853 = vsel %vm817, %v851, %v852
      %v854 = vrot.slane %v852, 4
      %v855 = vrot.slane %v235, 5
      %v856 = vsel %vm817, %v854, %v855
      %v857 = vrot.slane %v806, 5
      %v858 = vrot.slane %v857, 4
      %v859 = vrot.slane %v214, 5
      %v860 = vsel %vm817, %v858, %v859
      %v861 = vrot.slane %v859, 4
      %v862 = vrot.slane %v215, 5
      %v863 = vsel %vm817, %v861, %v862
      %v864 = vrot.slane %v862, 4
      %v865 = vrot.slane %v216, 5
      %v866 = vsel %vm817, %v864, %v865
      %v867 = vrot.slane %v865, 4
      %v868 = vrot.slane %v236, 5
      %v869 = vsel %vm817, %v867, %v868
      %s870 = scalar_lea.vmem %s1, 128
      %v871 = vld [vmem:[%s870] sm:$0xf]
      %v872 = vld [vmem:[%s870 + $0x4] sm:$0xf]
      %v873 = vld [vmem:[%s870 + $0x8] sm:$0xf]
      %v874 = vld [vmem:[%s870 + $0xc] sm:$0xf]
      %v875 = vld [vmem:[%s870 + $0x10] sm:$0xf]
      %v876 = vld [vmem:[%s870 + $0x14] sm:$0xf]
      %v877 = vld [vmem:[%s870 + $0x18] sm:$0xf]
      %v878 = vld [vmem:[%s870 + $0x1c] sm:$0xf]
      %v879 = vld [vmem:[%s870 + $0x20] sm:$0xf]
      %v880 = vld [vmem:[%s870 + $0x24] sm:$0xf]
      %v881 = vld [vmem:[%s870 + $0x28] sm:$0xf]
      %v882 = vld [vmem:[%s870 + $0x2c] sm:$0xf]
      %v883 = vld [vmem:[%s870 + $0x30] sm:$0xf]
      %v884 = vld [vmem:[%s870 + $0x34] sm:$0xf]
      %v885 = vld [vmem:[%s870 + $0x38] sm:$0xf]
      %v886 = vld [vmem:[%s870 + $0x3c] sm:$0xf]
      %v887 = vunpack.c.l.b16 %v821
      %v888 = vunpack.c.l.b16 %v824
      %v889 = vunpack.c.l.b16 %v827
      %v890 = vunpack.c.l.b16 %v830
      %v891 = vunpack.c.l.b16 %v834
      %v892 = vunpack.c.l.b16 %v837
      %v893 = vunpack.c.l.b16 %v840
      %v894 = vunpack.c.l.b16 %v843
      %v895 = vunpack.c.l.b16 %v847
      %v896 = vunpack.c.l.b16 %v850
      %v897 = vunpack.c.l.b16 %v853
      %v898 = vunpack.c.l.b16 %v856
      %v899 = vunpack.c.l.b16 %v860
      %v900 = vunpack.c.l.b16 %v863
      %v901 = vunpack.c.l.b16 %v866
      %v902 = vunpack.c.l.b16 %v869
      %v903 = vpack.c.b16 %v888, %v887
      %v904 = vpack.c.b16 %v890, %v889
      %v905 = vpack.c.b16 %v892, %v891
      %v906 = vpack.c.b16 %v894, %v893
      %v907 = vpack.c.b16 %v896, %v895
      %v908 = vpack.c.b16 %v898, %v897
      %v909 = vpack.c.b16 %v900, %v899
      %v910 = vpack.c.b16 %v902, %v901
      %v935 = vunpack.c.l.b16 %v871
      %v936 = vunpack.c.l.b16 %v872
      %v937 = vunpack.c.l.b16 %v873
      %v938 = vunpack.c.l.b16 %v874
      %v939 = vunpack.c.l.b16 %v875
      %v940 = vunpack.c.l.b16 %v876
      %v941 = vunpack.c.l.b16 %v877
      %v942 = vunpack.c.l.b16 %v878
      %v943 = vunpack.c.l.b16 %v879
      %v944 = vunpack.c.l.b16 %v880
      %v945 = vunpack.c.l.b16 %v881
      %v946 = vunpack.c.l.b16 %v882
      %v947 = vunpack.c.l.b16 %v883
      %v948 = vunpack.c.l.b16 %v884
      %v949 = vunpack.c.l.b16 %v885
      %v950 = vunpack.c.l.b16 %v886
      %v951 = vpack.c.b16 %v936, %v935
      %v952 = vpack.c.b16 %v938, %v937
      %v953 = vpack.c.b16 %v940, %v939
      %v954 = vpack.c.b16 %v942, %v941
      %v955 = vpack.c.b16 %v944, %v943
      %v956 = vpack.c.b16 %v946, %v945
      %v957 = vpack.c.b16 %v948, %v947
      %v958 = vpack.c.b16 %v950, %v949
      %967 = vmatprep.subr.bf16.mxu0 0
      %968 = vmatpush1.bf16.msra.mxu0 %v958
      %969 = vmatprep.subr.bf16.mxu0 0
      %970 = vmatpush1.bf16.msra.mxu0 %v957
      %971 = vmatprep.subr.bf16.mxu0 0
      %972 = vmatpush1.bf16.msra.mxu0 %v956
      %973 = vmatprep.subr.bf16.mxu0 0
      %974 = vmatpush1.bf16.msra.mxu0 %v955
      %975 = vmatprep.subr.bf16.mxu0 0
      %976 = vmatpush1.bf16.msra.mxu0 %v954
      %977 = vmatprep.subr.bf16.mxu0 0
      %978 = vmatpush1.bf16.msra.mxu0 %v953
      %979 = vmatprep.subr.bf16.mxu0 0
      %980 = vmatpush1.bf16.msra.mxu0 %v952
      %981 = vmatprep.subr.bf16.mxu0 0
      %982 = vmatpush1.bf16.msra.mxu0 %v951
      %983 = vmatprep.subr.bf16.mxu0 0
      %984 = vmatpush2.bf16.msra.mxu0 0
      %985 = vmatprep.subr.bf16.mxu0 0
      %986 = vmatpush2.bf16.msra.mxu0 0
      %987 = vmatprep.subr.bf16.mxu0 0
      %988 = vmatpush2.bf16.msra.mxu0 0
      %989 = vmatprep.subr.bf16.mxu0 0
      %990 = vmatpush2.bf16.msra.mxu0 0
      %991 = vmatprep.subr.bf16.mxu0 0
      %992 = vmatpush2.bf16.msra.mxu0 0
      %993 = vmatprep.subr.bf16.mxu0 0
      %994 = vmatpush2.bf16.msra.mxu0 0
      %995 = vmatprep.subr.bf16.mxu0 0
      %996 = vmatpush2.bf16.msra.mxu0 0
      %997 = vmatprep.subr.bf16.mxu0 0
      %998 = vmatpush2.bf16.msra.mxu0 0
      %999 = vmatprep.mubr.bf16.mxu0 0
      %1000 = vmatmul.mubr.bf16.gmra.mxu0 %v903
      %v1001 = vpop.f32.mrf.mxu0
      %v1002 = vadd.f32 0.0, %v1001
      %v1003 = vpop.f32.mrf.mxu0
      %v1004 = vpop.f32.mrf.mxu0
      %v1005 = vadd.f32 0.0, %v1004
      %v1006 = vpop.f32.mrf.mxu0
      %1007 = vmatprep.mubr.bf16.mxu0 0
      %1008 = vmatmul.mubr.bf16.gmra.mxu0 %v904
      %v1009 = vpop.f32.mrf.mxu0
      %v1010 = vadd.f32 0.0, %v1009
      %v1011 = vpop.f32.mrf.mxu0
      %v1012 = vpop.f32.mrf.mxu0
      %v1013 = vadd.f32 0.0, %v1012
      %v1014 = vpop.f32.mrf.mxu0
      %1015 = vmatprep.mubr.bf16.mxu0 0
      %1016 = vmatmul.mubr.bf16.gmra.mxu0 %v905
      %v1017 = vpop.f32.mrf.mxu0
      %v1018 = vadd.f32 0.0, %v1017
      %v1019 = vpop.f32.mrf.mxu0
      %v1020 = vpop.f32.mrf.mxu0
      %v1021 = vadd.f32 0.0, %v1020
      %v1022 = vpop.f32.mrf.mxu0
      %1023 = vmatprep.mubr.bf16.mxu0 0
      %1024 = vmatmul.mubr.bf16.gmra.mxu0 %v906
      %v1025 = vpop.f32.mrf.mxu0
      %v1026 = vadd.f32 0.0, %v1025
      %v1027 = vpop.f32.mrf.mxu0
      %v1028 = vpop.f32.mrf.mxu0
      %v1029 = vadd.f32 0.0, %v1028
      %v1030 = vpop.f32.mrf.mxu0
      %1031 = vmatprep.mubr.bf16.mxu0 0
      %1032 = vmatmul.mubr.bf16.gmra.mxu0 %v907
      %v1033 = vpop.f32.mrf.mxu0
      %v1034 = vadd.f32 0.0, %v1033
      %v1035 = vpop.f32.mrf.mxu0
      %v1036 = vpop.f32.mrf.mxu0
      %v1037 = vadd.f32 0.0, %v1036
      %v1038 = vpop.f32.mrf.mxu0
      %1039 = vmatprep.mubr.bf16.mxu0 0
      %1040 = vmatmul.mubr.bf16.gmra.mxu0 %v908
      %v1041 = vpop.f32.mrf.mxu0
      %v1042 = vadd.f32 0.0, %v1041
      %v1043 = vpop.f32.mrf.mxu0
      %v1044 = vpop.f32.mrf.mxu0
      %v1045 = vadd.f32 0.0, %v1044
      %v1046 = vpop.f32.mrf.mxu0
      %1047 = vmatprep.mubr.bf16.mxu0 0
      %1048 = vmatmul.mubr.bf16.gmra.mxu0 %v909
      %v1049 = vpop.f32.mrf.mxu0
      %v1050 = vadd.f32 0.0, %v1049
      %v1051 = vpop.f32.mrf.mxu0
      %v1052 = vpop.f32.mrf.mxu0
      %v1053 = vadd.f32 0.0, %v1052
      %v1054 = vpop.f32.mrf.mxu0
      %1055 = vmatprep.mubr.bf16.mxu0 0
      %1056 = vmatmul.mubr.bf16.gmra.mxu0 %v910
      %v1057 = vpop.f32.mrf.mxu0
      %v1058 = vadd.f32 0.0, %v1057
      %v1059 = vpop.f32.mrf.mxu0
      %v1060 = vpop.f32.mrf.mxu0
      %v1061 = vadd.f32 0.0, %v1060
      %v1062 = vpop.f32.mrf.mxu0
      %1063 = vdwg.mxu0
      %v1064 = vadd.f32 %v741, %v1002
      %v1065 = vadd.f32 %v744, %v1005
      %v1066 = vadd.f32 %v749, %v1010
      %v1067 = vadd.f32 %v752, %v1013
      %v1068 = vadd.f32 %v757, %v1018
      %v1069 = vadd.f32 %v760, %v1021
      %v1070 = vadd.f32 %v765, %v1026
      %v1071 = vadd.f32 %v768, %v1029
      %v1072 = vadd.f32 %v773, %v1034
      %v1073 = vadd.f32 %v776, %v1037
      %v1074 = vadd.f32 %v781, %v1042
      %v1075 = vadd.f32 %v784, %v1045
      %v1076 = vadd.f32 %v789, %v1050
      %v1077 = vadd.f32 %v792, %v1053
      %v1078 = vadd.f32 %v797, %v1058
      %v1079 = vadd.f32 %v800, %v1061
      %s1080 = sadd.s32 %s197, 1
      %s1081 = smul.u32 %s1080, 5
      %s1082 = smul.addr %s1081, 4
      %s1083 = scalar_lea.vmem %s184, %s1082
      %v1084 = vld [vmem:[%s1083] sm:$0xf]
      %v1085 = vld [vmem:[%s1083 + $0x4] sm:$0xf]
      %v1086 = vld [vmem:[%s1083 + $0x8] sm:$0xf]
      %v1087 = vld [vmem:[%s1083 + $0xc] sm:$0xf]
      %v1088 = vld [vmem:[%s1083 + $0x14] sm:$0xf]
      %v1089 = vld [vmem:[%s1083 + $0x18] sm:$0xf]
      %v1090 = vld [vmem:[%s1083 + $0x1c] sm:$0xf]
      %v1091 = vld [vmem:[%s1083 + $0x20] sm:$0xf]
      %v1092 = vld [vmem:[%s1083 + $0x28] sm:$0xf]
      %v1093 = vld [vmem:[%s1083 + $0x2c] sm:$0xf]
      %v1094 = vld [vmem:[%s1083 + $0x30] sm:$0xf]
      %v1095 = vld [vmem:[%s1083 + $0x34] sm:$0xf]
      %v1096 = vld [vmem:[%s1083 + $0x3c] sm:$0xf]
      %v1097 = vld [vmem:[%s1083 + $0x40] sm:$0xf]
      %v1098 = vld [vmem:[%s1083 + $0x44] sm:$0xf]
      %v1099 = vld [vmem:[%s1083 + $0x48] sm:$0xf]
      %s1100 = scalar_lea.vmem %s1, 192
      %v1101 = vld [vmem:[%s1100] sm:$0xf]
      %v1102 = vld [vmem:[%s1100 + $0x4] sm:$0xf]
      %v1103 = vld [vmem:[%s1100 + $0x8] sm:$0xf]
      %v1104 = vld [vmem:[%s1100 + $0xc] sm:$0xf]
      %v1105 = vld [vmem:[%s1100 + $0x10] sm:$0xf]
      %v1106 = vld [vmem:[%s1100 + $0x14] sm:$0xf]
      %v1107 = vld [vmem:[%s1100 + $0x18] sm:$0xf]
      %v1108 = vld [vmem:[%s1100 + $0x1c] sm:$0xf]
      %v1109 = vld [vmem:[%s1100 + $0x20] sm:$0xf]
      %v1110 = vld [vmem:[%s1100 + $0x24] sm:$0xf]
      %v1111 = vld [vmem:[%s1100 + $0x28] sm:$0xf]
      %v1112 = vld [vmem:[%s1100 + $0x2c] sm:$0xf]
      %v1113 = vld [vmem:[%s1100 + $0x30] sm:$0xf]
      %v1114 = vld [vmem:[%s1100 + $0x34] sm:$0xf]
      %v1115 = vld [vmem:[%s1100 + $0x38] sm:$0xf]
      %v1116 = vld [vmem:[%s1100 + $0x3c] sm:$0xf]
      %v1133 = vunpack.c.l.b16 %v1084
      %v1134 = vunpack.c.l.b16 %v1085
      %v1135 = vunpack.c.l.b16 %v1086
      %v1136 = vunpack.c.l.b16 %v1087
      %v1137 = vunpack.c.l.b16 %v1088
      %v1138 = vunpack.c.l.b16 %v1089
      %v1139 = vunpack.c.l.b16 %v1090
      %v1140 = vunpack.c.l.b16 %v1091
      %v1141 = vunpack.c.l.b16 %v1092
      %v1142 = vunpack.c.l.b16 %v1093
      %v1143 = vunpack.c.l.b16 %v1094
      %v1144 = vunpack.c.l.b16 %v1095
      %v1145 = vunpack.c.l.b16 %v1096
      %v1146 = vunpack.c.l.b16 %v1097
      %v1147 = vunpack.c.l.b16 %v1098
      %v1148 = vunpack.c.l.b16 %v1099
      %v1149 = vpack.c.b16 %v1134, %v1133
      %v1150 = vpack.c.b16 %v1136, %v1135
      %v1151 = vpack.c.b16 %v1138, %v1137
      %v1152 = vpack.c.b16 %v1140, %v1139
      %v1153 = vpack.c.b16 %v1142, %v1141
      %v1154 = vpack.c.b16 %v1144, %v1143
      %v1155 = vpack.c.b16 %v1146, %v1145
      %v1156 = vpack.c.b16 %v1148, %v1147
      %v1181 = vunpack.c.l.b16 %v1101
      %v1182 = vunpack.c.l.b16 %v1102
      %v1183 = vunpack.c.l.b16 %v1103
      %v1184 = vunpack.c.l.b16 %v1104
      %v1185 = vunpack.c.l.b16 %v1105
      %v1186 = vunpack.c.l.b16 %v1106
      %v1187 = vunpack.c.l.b16 %v1107
      %v1188 = vunpack.c.l.b16 %v1108
      %v1189 = vunpack.c.l.b16 %v1109
      %v1190 = vunpack.c.l.b16 %v1110
      %v1191 = vunpack.c.l.b16 %v1111
      %v1192 = vunpack.c.l.b16 %v1112
      %v1193 = vunpack.c.l.b16 %v1113
      %v1194 = vunpack.c.l.b16 %v1114
      %v1195 = vunpack.c.l.b16 %v1115
      %v1196 = vunpack.c.l.b16 %v1116
      %v1197 = vpack.c.b16 %v1182, %v1181
      %v1198 = vpack.c.b16 %v1184, %v1183
      %v1199 = vpack.c.b16 %v1186, %v1185
      %v1200 = vpack.c.b16 %v1188, %v1187
      %v1201 = vpack.c.b16 %v1190, %v1189
      %v1202 = vpack.c.b16 %v1192, %v1191
      %v1203 = vpack.c.b16 %v1194, %v1193
      %v1204 = vpack.c.b16 %v1196, %v1195
      %1213 = vmatprep.subr.bf16.mxu0 0
      %1214 = vmatpush1.bf16.msra.mxu0 %v1204
      %1215 = vmatprep.subr.bf16.mxu0 0
      %1216 = vmatpush1.bf16.msra.mxu0 %v1203
      %1217 = vmatprep.subr.bf16.mxu0 0
      %1218 = vmatpush1.bf16.msra.mxu0 %v1202
      %1219 = vmatprep.subr.bf16.mxu0 0
      %1220 = vmatpush1.bf16.msra.mxu0 %v1201
      %1221 = vmatprep.subr.bf16.mxu0 0
      %1222 = vmatpush1.bf16.msra.mxu0 %v1200
      %1223 = vmatprep.subr.bf16.mxu0 0
      %1224 = vmatpush1.bf16.msra.mxu0 %v1199
      %1225 = vmatprep.subr.bf16.mxu0 0
      %1226 = vmatpush1.bf16.msra.mxu0 %v1198
      %1227 = vmatprep.subr.bf16.mxu0 0
      %1228 = vmatpush1.bf16.msra.mxu0 %v1197
      %1229 = vmatprep.subr.bf16.mxu0 0
      %1230 = vmatpush2.bf16.msra.mxu0 0
      %1231 = vmatprep.subr.bf16.mxu0 0
      %1232 = vmatpush2.bf16.msra.mxu0 0
      %1233 = vmatprep.subr.bf16.mxu0 0
      %1234 = vmatpush2.bf16.msra.mxu0 0
      %1235 = vmatprep.subr.bf16.mxu0 0
      %1236 = vmatpush2.bf16.msra.mxu0 0
      %1237 = vmatprep.subr.bf16.mxu0 0
      %1238 = vmatpush2.bf16.msra.mxu0 0
      %1239 = vmatprep.subr.bf16.mxu0 0
      %1240 = vmatpush2.bf16.msra.mxu0 0
      %1241 = vmatprep.subr.bf16.mxu0 0
      %1242 = vmatpush2.bf16.msra.mxu0 0
      %1243 = vmatprep.subr.bf16.mxu0 0
      %1244 = vmatpush2.bf16.msra.mxu0 0
      %1245 = vmatprep.mubr.bf16.mxu0 0
      %1246 = vmatmul.mubr.bf16.gmra.mxu0 %v1149
      %v1247 = vpop.f32.mrf.mxu0
      %v1248 = vadd.f32 0.0, %v1247
      %v1249 = vpop.f32.mrf.mxu0
      %v1250 = vpop.f32.mrf.mxu0
      %v1251 = vadd.f32 0.0, %v1250
      %v1252 = vpop.f32.mrf.mxu0
      %1253 = vmatprep.mubr.bf16.mxu0 0
      %1254 = vmatmul.mubr.bf16.gmra.mxu0 %v1150
      %v1255 = vpop.f32.mrf.mxu0
      %v1256 = vadd.f32 0.0, %v1255
      %v1257 = vpop.f32.mrf.mxu0
      %v1258 = vpop.f32.mrf.mxu0
      %v1259 = vadd.f32 0.0, %v1258
      %v1260 = vpop.f32.mrf.mxu0
      %1261 = vmatprep.mubr.bf16.mxu0 0
      %1262 = vmatmul.mubr.bf16.gmra.mxu0 %v1151
      %v1263 = vpop.f32.mrf.mxu0
      %v1264 = vadd.f32 0.0, %v1263
      %v1265 = vpop.f32.mrf.mxu0
      %v1266 = vpop.f32.mrf.mxu0
      %v1267 = vadd.f32 0.0, %v1266
      %v1268 = vpop.f32.mrf.mxu0
      %1269 = vmatprep.mubr.bf16.mxu0 0
      %1270 = vmatmul.mubr.bf16.gmra.mxu0 %v1152
      %v1271 = vpop.f32.mrf.mxu0
      %v1272 = vadd.f32 0.0, %v1271
      %v1273 = vpop.f32.mrf.mxu0
      %v1274 = vpop.f32.mrf.mxu0
      %v1275 = vadd.f32 0.0, %v1274
      %v1276 = vpop.f32.mrf.mxu0
      %1277 = vmatprep.mubr.bf16.mxu0 0
      %1278 = vmatmul.mubr.bf16.gmra.mxu0 %v1153
      %v1279 = vpop.f32.mrf.mxu0
      %v1280 = vadd.f32 0.0, %v1279
      %v1281 = vpop.f32.mrf.mxu0
      %v1282 = vpop.f32.mrf.mxu0
      %v1283 = vadd.f32 0.0, %v1282
      %v1284 = vpop.f32.mrf.mxu0
      %1285 = vmatprep.mubr.bf16.mxu0 0
      %1286 = vmatmul.mubr.bf16.gmra.mxu0 %v1154
      %v1287 = vpop.f32.mrf.mxu0
      %v1288 = vadd.f32 0.0, %v1287
      %v1289 = vpop.f32.mrf.mxu0
      %v1290 = vpop.f32.mrf.mxu0
      %v1291 = vadd.f32 0.0, %v1290
      %v1292 = vpop.f32.mrf.mxu0
      %1293 = vmatprep.mubr.bf16.mxu0 0
      %1294 = vmatmul.mubr.bf16.gmra.mxu0 %v1155
      %v1295 = vpop.f32.mrf.mxu0
      %v1296 = vadd.f32 0.0, %v1295
      %v1297 = vpop.f32.mrf.mxu0
      %v1298 = vpop.f32.mrf.mxu0
      %v1299 = vadd.f32 0.0, %v1298
      %v1300 = vpop.f32.mrf.mxu0
      %1301 = vmatprep.mubr.bf16.mxu0 0
      %1302 = vmatmul.mubr.bf16.gmra.mxu0 %v1156
      %v1303 = vpop.f32.mrf.mxu0
      %v1304 = vadd.f32 0.0, %v1303
      %v1305 = vpop.f32.mrf.mxu0
      %v1306 = vpop.f32.mrf.mxu0
      %v1307 = vadd.f32 0.0, %v1306
      %v1308 = vpop.f32.mrf.mxu0
      %1309 = vdwg.mxu0
      %v1310 = vadd.f32 %v1064, %v1248
      %v1311 = vadd.f32 %v1065, %v1251
      %v1312 = vadd.f32 %v1066, %v1256
      %v1313 = vadd.f32 %v1067, %v1259
      %v1314 = vadd.f32 %v1068, %v1264
      %v1315 = vadd.f32 %v1069, %v1267
      %v1316 = vadd.f32 %v1070, %v1272
      %v1317 = vadd.f32 %v1071, %v1275
      %v1318 = vadd.f32 %v1072, %v1280
      %v1319 = vadd.f32 %v1073, %v1283
      %v1320 = vadd.f32 %v1074, %v1288
      %v1321 = vadd.f32 %v1075, %v1291
      %v1322 = vadd.f32 %v1076, %v1296
      %v1323 = vadd.f32 %v1077, %v1299
      %v1324 = vadd.f32 %v1078, %v1304
      %v1325 = vadd.f32 %v1079, %v1307
      %v1326 = vld [vmem:[%s1083] sm:$0xf]
      %v1327 = vld [vmem:[%s1083 + $0x4] sm:$0xf]
      %v1328 = vld [vmem:[%s1083 + $0x8] sm:$0xf]
      %v1329 = vld [vmem:[%s1083 + $0xc] sm:$0xf]
      %v1330 = vld [vmem:[%s1083 + $0x10] sm:$0x1]
      %v1331 = vld [vmem:[%s1083 + $0x14] sm:$0xf]
      %v1332 = vld [vmem:[%s1083 + $0x18] sm:$0xf]
      %v1333 = vld [vmem:[%s1083 + $0x1c] sm:$0xf]
      %v1334 = vld [vmem:[%s1083 + $0x20] sm:$0xf]
      %v1335 = vld [vmem:[%s1083 + $0x24] sm:$0x1]
      %v1336 = vld [vmem:[%s1083 + $0x28] sm:$0xf]
      %v1337 = vld [vmem:[%s1083 + $0x2c] sm:$0xf]
      %v1338 = vld [vmem:[%s1083 + $0x30] sm:$0xf]
      %v1339 = vld [vmem:[%s1083 + $0x34] sm:$0xf]
      %v1340 = vld [vmem:[%s1083 + $0x38] sm:$0x1]
      %v1341 = vld [vmem:[%s1083 + $0x3c] sm:$0xf]
      %v1342 = vld [vmem:[%s1083 + $0x40] sm:$0xf]
      %v1343 = vld [vmem:[%s1083 + $0x44] sm:$0xf]
      %v1344 = vld [vmem:[%s1083 + $0x48] sm:$0xf]
      %v1345 = vld [vmem:[%s1083 + $0x4c] sm:$0x1]
      %v1347 = vshrl.u32 %v1326, 16
      %v1349 = vrot.slane %v1347, 4
      %v1350 = vshll.u32 %v1326, 16
      %v1352 = vrot.slane %v1350, 5
      %v1353 = vor.u32 %v1349, %v1352
      %v1354 = vrot.slane %v1353, 4
      %v1356 = vshll.u32 %v1327, 16
      %v1358 = vrot.slane %v1356, 5
      %v1359 = vsel %vm239, %v1354, %v1358
      %v1360 = vshrl.u32 %v1327, 16
      %v1362 = vrot.slane %v1360, 4
      %v1363 = vor.u32 %v1362, %v1358
      %v1364 = vrot.slane %v1363, 4
      %v1366 = vshll.u32 %v1328, 16
      %v1368 = vrot.slane %v1366, 5
      %v1369 = vsel %vm239, %v1364, %v1368
      %v1370 = vshrl.u32 %v1328, 16
      %v1372 = vrot.slane %v1370, 4
      %v1373 = vor.u32 %v1372, %v1368
      %v1374 = vrot.slane %v1373, 4
      %v1376 = vshll.u32 %v1329, 16
      %v1378 = vrot.slane %v1376, 5
      %v1379 = vsel %vm239, %v1374, %v1378
      %v1380 = vshrl.u32 %v1329, 16
      %v1382 = vrot.slane %v1380, 4
      %v1383 = vor.u32 %v1382, %v1378
      %v1384 = vrot.slane %v1383, 4
      %v1386 = vshll.u32 %v1330, 16
      %v1388 = vrot.slane %v1386, 5
      %v1389 = vsel %vm239, %v1384, %v1388
      %v1391 = vshrl.u32 %v1331, 16
      %v1393 = vrot.slane %v1391, 4
      %v1394 = vshll.u32 %v1331, 16
      %v1396 = vrot.slane %v1394, 5
      %v1397 = vor.u32 %v1393, %v1396
      %v1398 = vrot.slane %v1397, 4
      %v1400 = vshll.u32 %v1332, 16
      %v1402 = vrot.slane %v1400, 5
      %v1403 = vsel %vm239, %v1398, %v1402
      %v1404 = vshrl.u32 %v1332, 16
      %v1406 = vrot.slane %v1404, 4
      %v1407 = vor.u32 %v1406, %v1402
      %v1408 = vrot.slane %v1407, 4
      %v1410 = vshll.u32 %v1333, 16
      %v1412 = vrot.slane %v1410, 5
      %v1413 = vsel %vm239, %v1408, %v1412
      %v1414 = vshrl.u32 %v1333, 16
      %v1416 = vrot.slane %v1414, 4
      %v1417 = vor.u32 %v1416, %v1412
      %v1418 = vrot.slane %v1417, 4
      %v1420 = vshll.u32 %v1334, 16
      %v1422 = vrot.slane %v1420, 5
      %v1423 = vsel %vm239, %v1418, %v1422
      %v1424 = vshrl.u32 %v1334, 16
      %v1426 = vrot.slane %v1424, 4
      %v1427 = vor.u32 %v1426, %v1422
      %v1428 = vrot.slane %v1427, 4
      %v1430 = vshll.u32 %v1335, 16
      %v1432 = vrot.slane %v1430, 5
      %v1433 = vsel %vm239, %v1428, %v1432
      %v1435 = vshrl.u32 %v1336, 16
      %v1437 = vrot.slane %v1435, 4
      %v1438 = vshll.u32 %v1336, 16
      %v1440 = vrot.slane %v1438, 5
      %v1441 = vor.u32 %v1437, %v1440
      %v1442 = vrot.slane %v1441, 4
      %v1444 = vshll.u32 %v1337, 16
      %v1446 = vrot.slane %v1444, 5
      %v1447 = vsel %vm239, %v1442, %v1446
      %v1448 = vshrl.u32 %v1337, 16
      %v1450 = vrot.slane %v1448, 4
      %v1451 = vor.u32 %v1450, %v1446
      %v1452 = vrot.slane %v1451, 4
      %v1454 = vshll.u32 %v1338, 16
      %v1456 = vrot.slane %v1454, 5
      %v1457 = vsel %vm239, %v1452, %v1456
      %v1458 = vshrl.u32 %v1338, 16
      %v1460 = vrot.slane %v1458, 4
      %v1461 = vor.u32 %v1460, %v1456
      %v1462 = vrot.slane %v1461, 4
      %v1464 = vshll.u32 %v1339, 16
      %v1466 = vrot.slane %v1464, 5
      %v1467 = vsel %vm239, %v1462, %v1466
      %v1468 = vshrl.u32 %v1339, 16
      %v1470 = vrot.slane %v1468, 4
      %v1471 = vor.u32 %v1470, %v1466
      %v1472 = vrot.slane %v1471, 4
      %v1474 = vshll.u32 %v1340, 16
      %v1476 = vrot.slane %v1474, 5
      %v1477 = vsel %vm239, %v1472, %v1476
      %v1479 = vshrl.u32 %v1341, 16
      %v1481 = vrot.slane %v1479, 4
      %v1482 = vshll.u32 %v1341, 16
      %v1484 = vrot.slane %v1482, 5
      %v1485 = vor.u32 %v1481, %v1484
      %v1486 = vrot.slane %v1485, 4
      %v1488 = vshll.u32 %v1342, 16
      %v1490 = vrot.slane %v1488, 5
      %v1491 = vsel %vm239, %v1486, %v1490
      %v1492 = vshrl.u32 %v1342, 16
      %v1494 = vrot.slane %v1492, 4
      %v1495 = vor.u32 %v1494, %v1490
      %v1496 = vrot.slane %v1495, 4
      %v1498 = vshll.u32 %v1343, 16
      %v1500 = vrot.slane %v1498, 5
      %v1501 = vsel %vm239, %v1496, %v1500
      %v1502 = vshrl.u32 %v1343, 16
      %v1504 = vrot.slane %v1502, 4
      %v1505 = vor.u32 %v1504, %v1500
      %v1506 = vrot.slane %v1505, 4
      %v1508 = vshll.u32 %v1344, 16
      %v1510 = vrot.slane %v1508, 5
      %v1511 = vsel %vm239, %v1506, %v1510
      %v1512 = vshrl.u32 %v1344, 16
      %v1514 = vrot.slane %v1512, 4
      %v1515 = vor.u32 %v1514, %v1510
      %v1516 = vrot.slane %v1515, 4
      %v1518 = vshll.u32 %v1345, 16
      %v1520 = vrot.slane %v1518, 5
      %v1521 = vsel %vm239, %v1516, %v1520
      %s1522 = scalar_lea.vmem %s1, 256
      %v1523 = vld [vmem:[%s1522] sm:$0xf]
      %v1524 = vld [vmem:[%s1522 + $0x4] sm:$0xf]
      %v1525 = vld [vmem:[%s1522 + $0x8] sm:$0xf]
      %v1526 = vld [vmem:[%s1522 + $0xc] sm:$0xf]
      %v1527 = vld [vmem:[%s1522 + $0x10] sm:$0xf]
      %v1528 = vld [vmem:[%s1522 + $0x14] sm:$0xf]
      %v1529 = vld [vmem:[%s1522 + $0x18] sm:$0xf]
      %v1530 = vld [vmem:[%s1522 + $0x1c] sm:$0xf]
      %v1531 = vld [vmem:[%s1522 + $0x20] sm:$0xf]
      %v1532 = vld [vmem:[%s1522 + $0x24] sm:$0xf]
      %v1533 = vld [vmem:[%s1522 + $0x28] sm:$0xf]
      %v1534 = vld [vmem:[%s1522 + $0x2c] sm:$0xf]
      %v1535 = vld [vmem:[%s1522 + $0x30] sm:$0xf]
      %v1536 = vld [vmem:[%s1522 + $0x34] sm:$0xf]
      %v1537 = vld [vmem:[%s1522 + $0x38] sm:$0xf]
      %v1538 = vld [vmem:[%s1522 + $0x3c] sm:$0xf]
      %v1539 = vunpack.c.l.b16 %v1359
      %v1540 = vunpack.c.l.b16 %v1369
      %v1541 = vunpack.c.l.b16 %v1379
      %v1542 = vunpack.c.l.b16 %v1389
      %v1543 = vunpack.c.l.b16 %v1403
      %v1544 = vunpack.c.l.b16 %v1413
      %v1545 = vunpack.c.l.b16 %v1423
      %v1546 = vunpack.c.l.b16 %v1433
      %v1547 = vunpack.c.l.b16 %v1447
      %v1548 = vunpack.c.l.b16 %v1457
      %v1549 = vunpack.c.l.b16 %v1467
      %v1550 = vunpack.c.l.b16 %v1477
      %v1551 = vunpack.c.l.b16 %v1491
      %v1552 = vunpack.c.l.b16 %v1501
      %v1553 = vunpack.c.l.b16 %v1511
      %v1554 = vunpack.c.l.b16 %v1521
      %v1555 = vpack.c.b16 %v1540, %v1539
      %v1556 = vpack.c.b16 %v1542, %v1541
      %v1557 = vpack.c.b16 %v1544, %v1543
      %v1558 = vpack.c.b16 %v1546, %v1545
      %v1559 = vpack.c.b16 %v1548, %v1547
      %v1560 = vpack.c.b16 %v1550, %v1549
      %v1561 = vpack.c.b16 %v1552, %v1551
      %v1562 = vpack.c.b16 %v1554, %v1553
      %v1587 = vunpack.c.l.b16 %v1523
      %v1588 = vunpack.c.l.b16 %v1524
      %v1589 = vunpack.c.l.b16 %v1525
      %v1590 = vunpack.c.l.b16 %v1526
      %v1591 = vunpack.c.l.b16 %v1527
      %v1592 = vunpack.c.l.b16 %v1528
      %v1593 = vunpack.c.l.b16 %v1529
      %v1594 = vunpack.c.l.b16 %v1530
      %v1595 = vunpack.c.l.b16 %v1531
      %v1596 = vunpack.c.l.b16 %v1532
      %v1597 = vunpack.c.l.b16 %v1533
      %v1598 = vunpack.c.l.b16 %v1534
      %v1599 = vunpack.c.l.b16 %v1535
      %v1600 = vunpack.c.l.b16 %v1536
      %v1601 = vunpack.c.l.b16 %v1537
      %v1602 = vunpack.c.l.b16 %v1538
      %v1603 = vpack.c.b16 %v1588, %v1587
      %v1604 = vpack.c.b16 %v1590, %v1589
      %v1605 = vpack.c.b16 %v1592, %v1591
      %v1606 = vpack.c.b16 %v1594, %v1593
      %v1607 = vpack.c.b16 %v1596, %v1595
      %v1608 = vpack.c.b16 %v1598, %v1597
      %v1609 = vpack.c.b16 %v1600, %v1599
      %v1610 = vpack.c.b16 %v1602, %v1601
      %1619 = vmatprep.subr.bf16.mxu0 0
      %1620 = vmatpush1.bf16.msra.mxu0 %v1610
      %1621 = vmatprep.subr.bf16.mxu0 0
      %1622 = vmatpush1.bf16.msra.mxu0 %v1609
      %1623 = vmatprep.subr.bf16.mxu0 0
      %1624 = vmatpush1.bf16.msra.mxu0 %v1608
      %1625 = vmatprep.subr.bf16.mxu0 0
      %1626 = vmatpush1.bf16.msra.mxu0 %v1607
      %1627 = vmatprep.subr.bf16.mxu0 0
      %1628 = vmatpush1.bf16.msra.mxu0 %v1606
      %1629 = vmatprep.subr.bf16.mxu0 0
      %1630 = vmatpush1.bf16.msra.mxu0 %v1605
      %1631 = vmatprep.subr.bf16.mxu0 0
      %1632 = vmatpush1.bf16.msra.mxu0 %v1604
      %1633 = vmatprep.subr.bf16.mxu0 0
      %1634 = vmatpush1.bf16.msra.mxu0 %v1603
      %1635 = vmatprep.subr.bf16.mxu0 0
      %1636 = vmatpush2.bf16.msra.mxu0 0
      %1637 = vmatprep.subr.bf16.mxu0 0
      %1638 = vmatpush2.bf16.msra.mxu0 0
      %1639 = vmatprep.subr.bf16.mxu0 0
      %1640 = vmatpush2.bf16.msra.mxu0 0
      %1641 = vmatprep.subr.bf16.mxu0 0
      %1642 = vmatpush2.bf16.msra.mxu0 0
      %1643 = vmatprep.subr.bf16.mxu0 0
      %1644 = vmatpush2.bf16.msra.mxu0 0
      %1645 = vmatprep.subr.bf16.mxu0 0
      %1646 = vmatpush2.bf16.msra.mxu0 0
      %1647 = vmatprep.subr.bf16.mxu0 0
      %1648 = vmatpush2.bf16.msra.mxu0 0
      %1649 = vmatprep.subr.bf16.mxu0 0
      %1650 = vmatpush2.bf16.msra.mxu0 0
      %1651 = vmatprep.mubr.bf16.mxu0 0
      %1652 = vmatmul.mubr.bf16.gmra.mxu0 %v1555
      %v1653 = vpop.f32.mrf.mxu0
      %v1654 = vadd.f32 0.0, %v1653
      %v1655 = vpop.f32.mrf.mxu0
      %v1656 = vpop.f32.mrf.mxu0
      %v1657 = vadd.f32 0.0, %v1656
      %v1658 = vpop.f32.mrf.mxu0
      %1659 = vmatprep.mubr.bf16.mxu0 0
      %1660 = vmatmul.mubr.bf16.gmra.mxu0 %v1556
      %v1661 = vpop.f32.mrf.mxu0
      %v1662 = vadd.f32 0.0, %v1661
      %v1663 = vpop.f32.mrf.mxu0
      %v1664 = vpop.f32.mrf.mxu0
      %v1665 = vadd.f32 0.0, %v1664
      %v1666 = vpop.f32.mrf.mxu0
      %1667 = vmatprep.mubr.bf16.mxu0 0
      %1668 = vmatmul.mubr.bf16.gmra.mxu0 %v1557
      %v1669 = vpop.f32.mrf.mxu0
      %v1670 = vadd.f32 0.0, %v1669
      %v1671 = vpop.f32.mrf.mxu0
      %v1672 = vpop.f32.mrf.mxu0
      %v1673 = vadd.f32 0.0, %v1672
      %v1674 = vpop.f32.mrf.mxu0
      %1675 = vmatprep.mubr.bf16.mxu0 0
      %1676 = vmatmul.mubr.bf16.gmra.mxu0 %v1558
      %v1677 = vpop.f32.mrf.mxu0
      %v1678 = vadd.f32 0.0, %v1677
      %v1679 = vpop.f32.mrf.mxu0
      %v1680 = vpop.f32.mrf.mxu0
      %v1681 = vadd.f32 0.0, %v1680
      %v1682 = vpop.f32.mrf.mxu0
      %1683 = vmatprep.mubr.bf16.mxu0 0
      %1684 = vmatmul.mubr.bf16.gmra.mxu0 %v1559
      %v1685 = vpop.f32.mrf.mxu0
      %v1686 = vadd.f32 0.0, %v1685
      %v1687 = vpop.f32.mrf.mxu0
      %v1688 = vpop.f32.mrf.mxu0
      %v1689 = vadd.f32 0.0, %v1688
      %v1690 = vpop.f32.mrf.mxu0
      %1691 = vmatprep.mubr.bf16.mxu0 0
      %1692 = vmatmul.mubr.bf16.gmra.mxu0 %v1560
      %v1693 = vpop.f32.mrf.mxu0
      %v1694 = vadd.f32 0.0, %v1693
      %v1695 = vpop.f32.mrf.mxu0
      %v1696 = vpop.f32.mrf.mxu0
      %v1697 = vadd.f32 0.0, %v1696
      %v1698 = vpop.f32.mrf.mxu0
      %1699 = vmatprep.mubr.bf16.mxu0 0
      %1700 = vmatmul.mubr.bf16.gmra.mxu0 %v1561
      %v1701 = vpop.f32.mrf.mxu0
      %v1702 = vadd.f32 0.0, %v1701
      %v1703 = vpop.f32.mrf.mxu0
      %v1704 = vpop.f32.mrf.mxu0
      %v1705 = vadd.f32 0.0, %v1704
      %v1706 = vpop.f32.mrf.mxu0
      %1707 = vmatprep.mubr.bf16.mxu0 0
      %1708 = vmatmul.mubr.bf16.gmra.mxu0 %v1562
      %v1709 = vpop.f32.mrf.mxu0
      %v1710 = vadd.f32 0.0, %v1709
      %v1711 = vpop.f32.mrf.mxu0
      %v1712 = vpop.f32.mrf.mxu0
      %v1713 = vadd.f32 0.0, %v1712
      %v1714 = vpop.f32.mrf.mxu0
      %1715 = vdwg.mxu0
      %v1716 = vadd.f32 %v1310, %v1654
      %v1717 = vadd.f32 %v1311, %v1657
      %v1718 = vadd.f32 %v1312, %v1662
      %v1719 = vadd.f32 %v1313, %v1665
      %v1720 = vadd.f32 %v1314, %v1670
      %v1721 = vadd.f32 %v1315, %v1673
      %v1722 = vadd.f32 %v1316, %v1678
      %v1723 = vadd.f32 %v1317, %v1681
      %v1724 = vadd.f32 %v1318, %v1686
      %v1725 = vadd.f32 %v1319, %v1689
      %v1726 = vadd.f32 %v1320, %v1694
      %v1727 = vadd.f32 %v1321, %v1697
      %v1728 = vadd.f32 %v1322, %v1702
      %v1729 = vadd.f32 %v1323, %v1705
      %v1730 = vadd.f32 %v1324, %v1710
      %v1731 = vadd.f32 %v1325, %v1713
      %v1732 = vld [vmem:[%s1083] sm:$0xe]
      %v1733 = vld [vmem:[%s1083 + $0x14] sm:$0xe]
      %v1734 = vld [vmem:[%s1083 + $0x28] sm:$0xe]
      %v1735 = vld [vmem:[%s1083 + $0x3c] sm:$0xe]
      %v1756 = vrot.slane %v1732, 5
      %v1757 = vrot.slane %v1756, 4
      %v1758 = vrot.slane %v1327, 5
      %v1759 = vsel %vm817, %v1757, %v1758
      %v1760 = vrot.slane %v1758, 4
      %v1761 = vrot.slane %v1328, 5
      %v1762 = vsel %vm817, %v1760, %v1761
      %v1763 = vrot.slane %v1761, 4
      %v1764 = vrot.slane %v1329, 5
      %v1765 = vsel %vm817, %v1763, %v1764
      %v1766 = vrot.slane %v1764, 4
      %v1767 = vrot.slane %v1330, 5
      %v1768 = vsel %vm817, %v1766, %v1767
      %v1769 = vrot.slane %v1733, 5
      %v1770 = vrot.slane %v1769, 4
      %v1771 = vrot.slane %v1332, 5
      %v1772 = vsel %vm817, %v1770, %v1771
      %v1773 = vrot.slane %v1771, 4
      %v1774 = vrot.slane %v1333, 5
      %v1775 = vsel %vm817, %v1773, %v1774
      %v1776 = vrot.slane %v1774, 4
      %v1777 = vrot.slane %v1334, 5
      %v1778 = vsel %vm817, %v1776, %v1777
      %v1779 = vrot.slane %v1777, 4
      %v1780 = vrot.slane %v1335, 5
      %v1781 = vsel %vm817, %v1779, %v1780
      %v1782 = vrot.slane %v1734, 5
      %v1783 = vrot.slane %v1782, 4
      %v1784 = vrot.slane %v1337, 5
      %v1785 = vsel %vm817, %v1783, %v1784
      %v1786 = vrot.slane %v1784, 4
      %v1787 = vrot.slane %v1338, 5
      %v1788 = vsel %vm817, %v1786, %v1787
      %v1789 = vrot.slane %v1787, 4
      %v1790 = vrot.slane %v1339, 5
      %v1791 = vsel %vm817, %v1789, %v1790
      %v1792 = vrot.slane %v1790, 4
      %v1793 = vrot.slane %v1340, 5
      %v1794 = vsel %vm817, %v1792, %v1793
      %v1795 = vrot.slane %v1735, 5
      %v1796 = vrot.slane %v1795, 4
      %v1797 = vrot.slane %v1342, 5
      %v1798 = vsel %vm817, %v1796, %v1797
      %v1799 = vrot.slane %v1797, 4
      %v1800 = vrot.slane %v1343, 5
      %v1801 = vsel %vm817, %v1799, %v1800
      %v1802 = vrot.slane %v1800, 4
      %v1803 = vrot.slane %v1344, 5
      %v1804 = vsel %vm817, %v1802, %v1803
      %v1805 = vrot.slane %v1803, 4
      %v1806 = vrot.slane %v1345, 5
      %v1807 = vsel %vm817, %v1805, %v1806
      %s1808 = scalar_lea.vmem %s1, 320
      %v1809 = vld [vmem:[%s1808] sm:$0xf]
      %v1810 = vld [vmem:[%s1808 + $0x4] sm:$0xf]
      %v1811 = vld [vmem:[%s1808 + $0x8] sm:$0xf]
      %v1812 = vld [vmem:[%s1808 + $0xc] sm:$0xf]
      %v1813 = vld [vmem:[%s1808 + $0x10] sm:$0xf]
      %v1814 = vld [vmem:[%s1808 + $0x14] sm:$0xf]
      %v1815 = vld [vmem:[%s1808 + $0x18] sm:$0xf]
      %v1816 = vld [vmem:[%s1808 + $0x1c] sm:$0xf]
      %v1817 = vld [vmem:[%s1808 + $0x20] sm:$0xf]
      %v1818 = vld [vmem:[%s1808 + $0x24] sm:$0xf]
      %v1819 = vld [vmem:[%s1808 + $0x28] sm:$0xf]
      %v1820 = vld [vmem:[%s1808 + $0x2c] sm:$0xf]
      %v1821 = vld [vmem:[%s1808 + $0x30] sm:$0xf]
      %v1822 = vld [vmem:[%s1808 + $0x34] sm:$0xf]
      %v1823 = vld [vmem:[%s1808 + $0x38] sm:$0xf]
      %v1824 = vld [vmem:[%s1808 + $0x3c] sm:$0xf]
      %v1825 = vunpack.c.l.b16 %v1759
      %v1826 = vunpack.c.l.b16 %v1762
      %v1827 = vunpack.c.l.b16 %v1765
      %v1828 = vunpack.c.l.b16 %v1768
      %v1829 = vunpack.c.l.b16 %v1772
      %v1830 = vunpack.c.l.b16 %v1775
      %v1831 = vunpack.c.l.b16 %v1778
      %v1832 = vunpack.c.l.b16 %v1781
      %v1833 = vunpack.c.l.b16 %v1785
      %v1834 = vunpack.c.l.b16 %v1788
      %v1835 = vunpack.c.l.b16 %v1791
      %v1836 = vunpack.c.l.b16 %v1794
      %v1837 = vunpack.c.l.b16 %v1798
      %v1838 = vunpack.c.l.b16 %v1801
      %v1839 = vunpack.c.l.b16 %v1804
      %v1840 = vunpack.c.l.b16 %v1807
      %v1841 = vpack.c.b16 %v1826, %v1825
      %v1842 = vpack.c.b16 %v1828, %v1827
      %v1843 = vpack.c.b16 %v1830, %v1829
      %v1844 = vpack.c.b16 %v1832, %v1831
      %v1845 = vpack.c.b16 %v1834, %v1833
      %v1846 = vpack.c.b16 %v1836, %v1835
      %v1847 = vpack.c.b16 %v1838, %v1837
      %v1848 = vpack.c.b16 %v1840, %v1839
      %v1873 = vunpack.c.l.b16 %v1809
      %v1874 = vunpack.c.l.b16 %v1810
      %v1875 = vunpack.c.l.b16 %v1811
      %v1876 = vunpack.c.l.b16 %v1812
      %v1877 = vunpack.c.l.b16 %v1813
      %v1878 = vunpack.c.l.b16 %v1814
      %v1879 = vunpack.c.l.b16 %v1815
      %v1880 = vunpack.c.l.b16 %v1816
      %v1881 = vunpack.c.l.b16 %v1817
      %v1882 = vunpack.c.l.b16 %v1818
      %v1883 = vunpack.c.l.b16 %v1819
      %v1884 = vunpack.c.l.b16 %v1820
      %v1885 = vunpack.c.l.b16 %v1821
      %v1886 = vunpack.c.l.b16 %v1822
      %v1887 = vunpack.c.l.b16 %v1823
      %v1888 = vunpack.c.l.b16 %v1824
      %v1889 = vpack.c.b16 %v1874, %v1873
      %v1890 = vpack.c.b16 %v1876, %v1875
      %v1891 = vpack.c.b16 %v1878, %v1877
      %v1892 = vpack.c.b16 %v1880, %v1879
      %v1893 = vpack.c.b16 %v1882, %v1881
      %v1894 = vpack.c.b16 %v1884, %v1883
      %v1895 = vpack.c.b16 %v1886, %v1885
      %v1896 = vpack.c.b16 %v1888, %v1887
      %1905 = vmatprep.subr.bf16.mxu0 0
      %1906 = vmatpush1.bf16.msra.mxu0 %v1896
      %1907 = vmatprep.subr.bf16.mxu0 0
      %1908 = vmatpush1.bf16.msra.mxu0 %v1895
      %1909 = vmatprep.subr.bf16.mxu0 0
      %1910 = vmatpush1.bf16.msra.mxu0 %v1894
      %1911 = vmatprep.subr.bf16.mxu0 0
      %1912 = vmatpush1.bf16.msra.mxu0 %v1893
      %1913 = vmatprep.subr.bf16.mxu0 0
      %1914 = vmatpush1.bf16.msra.mxu0 %v1892
      %1915 = vmatprep.subr.bf16.mxu0 0
      %1916 = vmatpush1.bf16.msra.mxu0 %v1891
      %1917 = vmatprep.subr.bf16.mxu0 0
      %1918 = vmatpush1.bf16.msra.mxu0 %v1890
      %1919 = vmatprep.subr.bf16.mxu0 0
      %1920 = vmatpush1.bf16.msra.mxu0 %v1889
      %1921 = vmatprep.subr.bf16.mxu0 0
      %1922 = vmatpush2.bf16.msra.mxu0 0
      %1923 = vmatprep.subr.bf16.mxu0 0
      %1924 = vmatpush2.bf16.msra.mxu0 0
      %1925 = vmatprep.subr.bf16.mxu0 0
      %1926 = vmatpush2.bf16.msra.mxu0 0
      %1927 = vmatprep.subr.bf16.mxu0 0
      %1928 = vmatpush2.bf16.msra.mxu0 0
      %1929 = vmatprep.subr.bf16.mxu0 0
      %1930 = vmatpush2.bf16.msra.mxu0 0
      %1931 = vmatprep.subr.bf16.mxu0 0
      %1932 = vmatpush2.bf16.msra.mxu0 0
      %1933 = vmatprep.subr.bf16.mxu0 0
      %1934 = vmatpush2.bf16.msra.mxu0 0
      %1935 = vmatprep.subr.bf16.mxu0 0
      %1936 = vmatpush2.bf16.msra.mxu0 0
      %1937 = vmatprep.mubr.bf16.mxu0 0
      %1938 = vmatmul.mubr.bf16.gmra.mxu0 %v1841
      %v1939 = vpop.f32.mrf.mxu0
      %v1940 = vadd.f32 0.0, %v1939
      %v1941 = vpop.f32.mrf.mxu0
      %v1942 = vpop.f32.mrf.mxu0
      %v1943 = vadd.f32 0.0, %v1942
      %v1944 = vpop.f32.mrf.mxu0
      %1945 = vmatprep.mubr.bf16.mxu0 0
      %1946 = vmatmul.mubr.bf16.gmra.mxu0 %v1842
      %v1947 = vpop.f32.mrf.mxu0
      %v1948 = vadd.f32 0.0, %v1947
      %v1949 = vpop.f32.mrf.mxu0
      %v1950 = vpop.f32.mrf.mxu0
      %v1951 = vadd.f32 0.0, %v1950
      %v1952 = vpop.f32.mrf.mxu0
      %1953 = vmatprep.mubr.bf16.mxu0 0
      %1954 = vmatmul.mubr.bf16.gmra.mxu0 %v1843
      %v1955 = vpop.f32.mrf.mxu0
      %v1956 = vadd.f32 0.0, %v1955
      %v1957 = vpop.f32.mrf.mxu0
      %v1958 = vpop.f32.mrf.mxu0
      %v1959 = vadd.f32 0.0, %v1958
      %v1960 = vpop.f32.mrf.mxu0
      %1961 = vmatprep.mubr.bf16.mxu0 0
      %1962 = vmatmul.mubr.bf16.gmra.mxu0 %v1844
      %v1963 = vpop.f32.mrf.mxu0
      %v1964 = vadd.f32 0.0, %v1963
      %v1965 = vpop.f32.mrf.mxu0
      %v1966 = vpop.f32.mrf.mxu0
      %v1967 = vadd.f32 0.0, %v1966
      %v1968 = vpop.f32.mrf.mxu0
      %1969 = vmatprep.mubr.bf16.mxu0 0
      %1970 = vmatmul.mubr.bf16.gmra.mxu0 %v1845
      %v1971 = vpop.f32.mrf.mxu0
      %v1972 = vadd.f32 0.0, %v1971
      %v1973 = vpop.f32.mrf.mxu0
      %v1974 = vpop.f32.mrf.mxu0
      %v1975 = vadd.f32 0.0, %v1974
      %v1976 = vpop.f32.mrf.mxu0
      %1977 = vmatprep.mubr.bf16.mxu0 0
      %1978 = vmatmul.mubr.bf16.gmra.mxu0 %v1846
      %v1979 = vpop.f32.mrf.mxu0
      %v1980 = vadd.f32 0.0, %v1979
      %v1981 = vpop.f32.mrf.mxu0
      %v1982 = vpop.f32.mrf.mxu0
      %v1983 = vadd.f32 0.0, %v1982
      %v1984 = vpop.f32.mrf.mxu0
      %1985 = vmatprep.mubr.bf16.mxu0 0
      %1986 = vmatmul.mubr.bf16.gmra.mxu0 %v1847
      %v1987 = vpop.f32.mrf.mxu0
      %v1988 = vadd.f32 0.0, %v1987
      %v1989 = vpop.f32.mrf.mxu0
      %v1990 = vpop.f32.mrf.mxu0
      %v1991 = vadd.f32 0.0, %v1990
      %v1992 = vpop.f32.mrf.mxu0
      %1993 = vmatprep.mubr.bf16.mxu0 0
      %1994 = vmatmul.mubr.bf16.gmra.mxu0 %v1848
      %v1995 = vpop.f32.mrf.mxu0
      %v1996 = vadd.f32 0.0, %v1995
      %v1997 = vpop.f32.mrf.mxu0
      %v1998 = vpop.f32.mrf.mxu0
      %v1999 = vadd.f32 0.0, %v1998
      %v2000 = vpop.f32.mrf.mxu0
      %2001 = vdwg.mxu0
      %v2002 = vadd.f32 %v1716, %v1940
      %v2003 = vadd.f32 %v1717, %v1943
      %v2004 = vadd.f32 %v1718, %v1948
      %v2005 = vadd.f32 %v1719, %v1951
      %v2006 = vadd.f32 %v1720, %v1956
      %v2007 = vadd.f32 %v1721, %v1959
      %v2008 = vadd.f32 %v1722, %v1964
      %v2009 = vadd.f32 %v1723, %v1967
      %v2010 = vadd.f32 %v1724, %v1972
      %v2011 = vadd.f32 %v1725, %v1975
      %v2012 = vadd.f32 %v1726, %v1980
      %v2013 = vadd.f32 %v1727, %v1983
      %v2014 = vadd.f32 %v1728, %v1988
      %v2015 = vadd.f32 %v1729, %v1991
      %v2016 = vadd.f32 %v1730, %v1996
      %v2017 = vadd.f32 %v1731, %v1999
      %s2018 = sadd.s32 %s197, 2
      %s2019 = smul.u32 %s2018, 5
      %s2020 = smul.addr %s2019, 4
      %s2021 = scalar_lea.vmem %s184, %s2020
      %v2022 = vld [vmem:[%s2021] sm:$0xf]
      %v2023 = vld [vmem:[%s2021 + $0x4] sm:$0xf]
      %v2024 = vld [vmem:[%s2021 + $0x8] sm:$0xf]
      %v2025 = vld [vmem:[%s2021 + $0xc] sm:$0xf]
      %v2026 = vld [vmem:[%s2021 + $0x14] sm:$0xf]
      %v2027 = vld [vmem:[%s2021 + $0x18] sm:$0xf]
      %v2028 = vld [vmem:[%s2021 + $0x1c] sm:$0xf]
      %v2029 = vld [vmem:[%s2021 + $0x20] sm:$0xf]
      %v2030 = vld [vmem:[%s2021 + $0x28] sm:$0xf]
      %v2031 = vld [vmem:[%s2021 + $0x2c] sm:$0xf]
      %v2032 = vld [vmem:[%s2021 + $0x30] sm:$0xf]
      %v2033 = vld [vmem:[%s2021 + $0x34] sm:$0xf]
      %v2034 = vld [vmem:[%s2021 + $0x3c] sm:$0xf]
      %v2035 = vld [vmem:[%s2021 + $0x40] sm:$0xf]
      %v2036 = vld [vmem:[%s2021 + $0x44] sm:$0xf]
      %v2037 = vld [vmem:[%s2021 + $0x48] sm:$0xf]
      %s2038 = scalar_lea.vmem %s1, 384
      %v2039 = vld [vmem:[%s2038] sm:$0xf]
      %v2040 = vld [vmem:[%s2038 + $0x4] sm:$0xf]
      %v2041 = vld [vmem:[%s2038 + $0x8] sm:$0xf]
      %v2042 = vld [vmem:[%s2038 + $0xc] sm:$0xf]
      %v2043 = vld [vmem:[%s2038 + $0x10] sm:$0xf]
      %v2044 = vld [vmem:[%s2038 + $0x14] sm:$0xf]
      %v2045 = vld [vmem:[%s2038 + $0x18] sm:$0xf]
      %v2046 = vld [vmem:[%s2038 + $0x1c] sm:$0xf]
      %v2047 = vld [vmem:[%s2038 + $0x20] sm:$0xf]
      %v2048 = vld [vmem:[%s2038 + $0x24] sm:$0xf]
      %v2049 = vld [vmem:[%s2038 + $0x28] sm:$0xf]
      %v2050 = vld [vmem:[%s2038 + $0x2c] sm:$0xf]
      %v2051 = vld [vmem:[%s2038 + $0x30] sm:$0xf]
      %v2052 = vld [vmem:[%s2038 + $0x34] sm:$0xf]
      %v2053 = vld [vmem:[%s2038 + $0x38] sm:$0xf]
      %v2054 = vld [vmem:[%s2038 + $0x3c] sm:$0xf]
      %v2071 = vunpack.c.l.b16 %v2022
      %v2072 = vunpack.c.l.b16 %v2023
      %v2073 = vunpack.c.l.b16 %v2024
      %v2074 = vunpack.c.l.b16 %v2025
      %v2075 = vunpack.c.l.b16 %v2026
      %v2076 = vunpack.c.l.b16 %v2027
      %v2077 = vunpack.c.l.b16 %v2028
      %v2078 = vunpack.c.l.b16 %v2029
      %v2079 = vunpack.c.l.b16 %v2030
      %v2080 = vunpack.c.l.b16 %v2031
      %v2081 = vunpack.c.l.b16 %v2032
      %v2082 = vunpack.c.l.b16 %v2033
      %v2083 = vunpack.c.l.b16 %v2034
      %v2084 = vunpack.c.l.b16 %v2035
      %v2085 = vunpack.c.l.b16 %v2036
      %v2086 = vunpack.c.l.b16 %v2037
      %v2087 = vpack.c.b16 %v2072, %v2071
      %v2088 = vpack.c.b16 %v2074, %v2073
      %v2089 = vpack.c.b16 %v2076, %v2075
      %v2090 = vpack.c.b16 %v2078, %v2077
      %v2091 = vpack.c.b16 %v2080, %v2079
      %v2092 = vpack.c.b16 %v2082, %v2081
      %v2093 = vpack.c.b16 %v2084, %v2083
      %v2094 = vpack.c.b16 %v2086, %v2085
      %v2119 = vunpack.c.l.b16 %v2039
      %v2120 = vunpack.c.l.b16 %v2040
      %v2121 = vunpack.c.l.b16 %v2041
      %v2122 = vunpack.c.l.b16 %v2042
      %v2123 = vunpack.c.l.b16 %v2043
      %v2124 = vunpack.c.l.b16 %v2044
      %v2125 = vunpack.c.l.b16 %v2045
      %v2126 = vunpack.c.l.b16 %v2046
      %v2127 = vunpack.c.l.b16 %v2047
      %v2128 = vunpack.c.l.b16 %v2048
      %v2129 = vunpack.c.l.b16 %v2049
      %v2130 = vunpack.c.l.b16 %v2050
      %v2131 = vunpack.c.l.b16 %v2051
      %v2132 = vunpack.c.l.b16 %v2052
      %v2133 = vunpack.c.l.b16 %v2053
      %v2134 = vunpack.c.l.b16 %v2054
      %v2135 = vpack.c.b16 %v2120, %v2119
      %v2136 = vpack.c.b16 %v2122, %v2121
      %v2137 = vpack.c.b16 %v2124, %v2123
      %v2138 = vpack.c.b16 %v2126, %v2125
      %v2139 = vpack.c.b16 %v2128, %v2127
      %v2140 = vpack.c.b16 %v2130, %v2129
      %v2141 = vpack.c.b16 %v2132, %v2131
      %v2142 = vpack.c.b16 %v2134, %v2133
      %2151 = vmatprep.subr.bf16.mxu0 0
      %2152 = vmatpush1.bf16.msra.mxu0 %v2142
      %2153 = vmatprep.subr.bf16.mxu0 0
      %2154 = vmatpush1.bf16.msra.mxu0 %v2141
      %2155 = vmatprep.subr.bf16.mxu0 0
      %2156 = vmatpush1.bf16.msra.mxu0 %v2140
      %2157 = vmatprep.subr.bf16.mxu0 0
      %2158 = vmatpush1.bf16.msra.mxu0 %v2139
      %2159 = vmatprep.subr.bf16.mxu0 0
      %2160 = vmatpush1.bf16.msra.mxu0 %v2138
      %2161 = vmatprep.subr.bf16.mxu0 0
      %2162 = vmatpush1.bf16.msra.mxu0 %v2137
      %2163 = vmatprep.subr.bf16.mxu0 0
      %2164 = vmatpush1.bf16.msra.mxu0 %v2136
      %2165 = vmatprep.subr.bf16.mxu0 0
      %2166 = vmatpush1.bf16.msra.mxu0 %v2135
      %2167 = vmatprep.subr.bf16.mxu0 0
      %2168 = vmatpush2.bf16.msra.mxu0 0
      %2169 = vmatprep.subr.bf16.mxu0 0
      %2170 = vmatpush2.bf16.msra.mxu0 0
      %2171 = vmatprep.subr.bf16.mxu0 0
      %2172 = vmatpush2.bf16.msra.mxu0 0
      %2173 = vmatprep.subr.bf16.mxu0 0
      %2174 = vmatpush2.bf16.msra.mxu0 0
      %2175 = vmatprep.subr.bf16.mxu0 0
      %2176 = vmatpush2.bf16.msra.mxu0 0
      %2177 = vmatprep.subr.bf16.mxu0 0
      %2178 = vmatpush2.bf16.msra.mxu0 0
      %2179 = vmatprep.subr.bf16.mxu0 0
      %2180 = vmatpush2.bf16.msra.mxu0 0
      %2181 = vmatprep.subr.bf16.mxu0 0
      %2182 = vmatpush2.bf16.msra.mxu0 0
      %2183 = vmatprep.mubr.bf16.mxu0 0
      %2184 = vmatmul.mubr.bf16.gmra.mxu0 %v2087
      %v2185 = vpop.f32.mrf.mxu0
      %v2186 = vadd.f32 0.0, %v2185
      %v2187 = vpop.f32.mrf.mxu0
      %v2188 = vpop.f32.mrf.mxu0
      %v2189 = vadd.f32 0.0, %v2188
      %v2190 = vpop.f32.mrf.mxu0
      %2191 = vmatprep.mubr.bf16.mxu0 0
      %2192 = vmatmul.mubr.bf16.gmra.mxu0 %v2088
      %v2193 = vpop.f32.mrf.mxu0
      %v2194 = vadd.f32 0.0, %v2193
      %v2195 = vpop.f32.mrf.mxu0
      %v2196 = vpop.f32.mrf.mxu0
      %v2197 = vadd.f32 0.0, %v2196
      %v2198 = vpop.f32.mrf.mxu0
      %2199 = vmatprep.mubr.bf16.mxu0 0
      %2200 = vmatmul.mubr.bf16.gmra.mxu0 %v2089
      %v2201 = vpop.f32.mrf.mxu0
      %v2202 = vadd.f32 0.0, %v2201
      %v2203 = vpop.f32.mrf.mxu0
      %v2204 = vpop.f32.mrf.mxu0
      %v2205 = vadd.f32 0.0, %v2204
      %v2206 = vpop.f32.mrf.mxu0
      %2207 = vmatprep.mubr.bf16.mxu0 0
      %2208 = vmatmul.mubr.bf16.gmra.mxu0 %v2090
      %v2209 = vpop.f32.mrf.mxu0
      %v2210 = vadd.f32 0.0, %v2209
      %v2211 = vpop.f32.mrf.mxu0
      %v2212 = vpop.f32.mrf.mxu0
      %v2213 = vadd.f32 0.0, %v2212
      %v2214 = vpop.f32.mrf.mxu0
      %2215 = vmatprep.mubr.bf16.mxu0 0
      %2216 = vmatmul.mubr.bf16.gmra.mxu0 %v2091
      %v2217 = vpop.f32.mrf.mxu0
      %v2218 = vadd.f32 0.0, %v2217
      %v2219 = vpop.f32.mrf.mxu0
      %v2220 = vpop.f32.mrf.mxu0
      %v2221 = vadd.f32 0.0, %v2220
      %v2222 = vpop.f32.mrf.mxu0
      %2223 = vmatprep.mubr.bf16.mxu0 0
      %2224 = vmatmul.mubr.bf16.gmra.mxu0 %v2092
      %v2225 = vpop.f32.mrf.mxu0
      %v2226 = vadd.f32 0.0, %v2225
      %v2227 = vpop.f32.mrf.mxu0
      %v2228 = vpop.f32.mrf.mxu0
      %v2229 = vadd.f32 0.0, %v2228
      %v2230 = vpop.f32.mrf.mxu0
      %2231 = vmatprep.mubr.bf16.mxu0 0
      %2232 = vmatmul.mubr.bf16.gmra.mxu0 %v2093
      %v2233 = vpop.f32.mrf.mxu0
      %v2234 = vadd.f32 0.0, %v2233
      %v2235 = vpop.f32.mrf.mxu0
      %v2236 = vpop.f32.mrf.mxu0
      %v2237 = vadd.f32 0.0, %v2236
      %v2238 = vpop.f32.mrf.mxu0
      %2239 = vmatprep.mubr.bf16.mxu0 0
      %2240 = vmatmul.mubr.bf16.gmra.mxu0 %v2094
      %v2241 = vpop.f32.mrf.mxu0
      %v2242 = vadd.f32 0.0, %v2241
      %v2243 = vpop.f32.mrf.mxu0
      %v2244 = vpop.f32.mrf.mxu0
      %v2245 = vadd.f32 0.0, %v2244
      %v2246 = vpop.f32.mrf.mxu0
      %2247 = vdwg.mxu0
      %v2248 = vadd.f32 %v2002, %v2186
      %v2249 = vadd.f32 %v2003, %v2189
      %v2250 = vadd.f32 %v2004, %v2194
      %v2251 = vadd.f32 %v2005, %v2197
      %v2252 = vadd.f32 %v2006, %v2202
      %v2253 = vadd.f32 %v2007, %v2205
      %v2254 = vadd.f32 %v2008, %v2210
      %v2255 = vadd.f32 %v2009, %v2213
      %v2256 = vadd.f32 %v2010, %v2218
      %v2257 = vadd.f32 %v2011, %v2221
      %v2258 = vadd.f32 %v2012, %v2226
      %v2259 = vadd.f32 %v2013, %v2229
      %v2260 = vadd.f32 %v2014, %v2234
      %v2261 = vadd.f32 %v2015, %v2237
      %v2262 = vadd.f32 %v2016, %v2242
      %v2263 = vadd.f32 %v2017, %v2245
      %v2264 = vld [vmem:[%s2021] sm:$0xf]
      %v2265 = vld [vmem:[%s2021 + $0x4] sm:$0xf]
      %v2266 = vld [vmem:[%s2021 + $0x8] sm:$0xf]
      %v2267 = vld [vmem:[%s2021 + $0xc] sm:$0xf]
      %v2268 = vld [vmem:[%s2021 + $0x10] sm:$0x1]
      %v2269 = vld [vmem:[%s2021 + $0x14] sm:$0xf]
      %v2270 = vld [vmem:[%s2021 + $0x18] sm:$0xf]
      %v2271 = vld [vmem:[%s2021 + $0x1c] sm:$0xf]
      %v2272 = vld [vmem:[%s2021 + $0x20] sm:$0xf]
      %v2273 = vld [vmem:[%s2021 + $0x24] sm:$0x1]
      %v2274 = vld [vmem:[%s2021 + $0x28] sm:$0xf]
      %v2275 = vld [vmem:[%s2021 + $0x2c] sm:$0xf]
      %v2276 = vld [vmem:[%s2021 + $0x30] sm:$0xf]
      %v2277 = vld [vmem:[%s2021 + $0x34] sm:$0xf]
      %v2278 = vld [vmem:[%s2021 + $0x38] sm:$0x1]
      %v2279 = vld [vmem:[%s2021 + $0x3c] sm:$0xf]
      %v2280 = vld [vmem:[%s2021 + $0x40] sm:$0xf]
      %v2281 = vld [vmem:[%s2021 + $0x44] sm:$0xf]
      %v2282 = vld [vmem:[%s2021 + $0x48] sm:$0xf]
      %v2283 = vld [vmem:[%s2021 + $0x4c] sm:$0x1]
      %v2285 = vshrl.u32 %v2264, 16
      %v2287 = vrot.slane %v2285, 4
      %v2288 = vshll.u32 %v2264, 16
      %v2290 = vrot.slane %v2288, 5
      %v2291 = vor.u32 %v2287, %v2290
      %v2292 = vrot.slane %v2291, 4
      %v2294 = vshll.u32 %v2265, 16
      %v2296 = vrot.slane %v2294, 5
      %v2297 = vsel %vm239, %v2292, %v2296
      %v2298 = vshrl.u32 %v2265, 16
      %v2300 = vrot.slane %v2298, 4
      %v2301 = vor.u32 %v2300, %v2296
      %v2302 = vrot.slane %v2301, 4
      %v2304 = vshll.u32 %v2266, 16
      %v2306 = vrot.slane %v2304, 5
      %v2307 = vsel %vm239, %v2302, %v2306
      %v2308 = vshrl.u32 %v2266, 16
      %v2310 = vrot.slane %v2308, 4
      %v2311 = vor.u32 %v2310, %v2306
      %v2312 = vrot.slane %v2311, 4
      %v2314 = vshll.u32 %v2267, 16
      %v2316 = vrot.slane %v2314, 5
      %v2317 = vsel %vm239, %v2312, %v2316
      %v2318 = vshrl.u32 %v2267, 16
      %v2320 = vrot.slane %v2318, 4
      %v2321 = vor.u32 %v2320, %v2316
      %v2322 = vrot.slane %v2321, 4
      %v2324 = vshll.u32 %v2268, 16
      %v2326 = vrot.slane %v2324, 5
      %v2327 = vsel %vm239, %v2322, %v2326
      %v2329 = vshrl.u32 %v2269, 16
      %v2331 = vrot.slane %v2329, 4
      %v2332 = vshll.u32 %v2269, 16
      %v2334 = vrot.slane %v2332, 5
      %v2335 = vor.u32 %v2331, %v2334
      %v2336 = vrot.slane %v2335, 4
      %v2338 = vshll.u32 %v2270, 16
      %v2340 = vrot.slane %v2338, 5
      %v2341 = vsel %vm239, %v2336, %v2340
      %v2342 = vshrl.u32 %v2270, 16
      %v2344 = vrot.slane %v2342, 4
      %v2345 = vor.u32 %v2344, %v2340
      %v2346 = vrot.slane %v2345, 4
      %v2348 = vshll.u32 %v2271, 16
      %v2350 = vrot.slane %v2348, 5
      %v2351 = vsel %vm239, %v2346, %v2350
      %v2352 = vshrl.u32 %v2271, 16
      %v2354 = vrot.slane %v2352, 4
      %v2355 = vor.u32 %v2354, %v2350
      %v2356 = vrot.slane %v2355, 4
      %v2358 = vshll.u32 %v2272, 16
      %v2360 = vrot.slane %v2358, 5
      %v2361 = vsel %vm239, %v2356, %v2360
      %v2362 = vshrl.u32 %v2272, 16
      %v2364 = vrot.slane %v2362, 4
      %v2365 = vor.u32 %v2364, %v2360
      %v2366 = vrot.slane %v2365, 4
      %v2368 = vshll.u32 %v2273, 16
      %v2370 = vrot.slane %v2368, 5
      %v2371 = vsel %vm239, %v2366, %v2370
      %v2373 = vshrl.u32 %v2274, 16
      %v2375 = vrot.slane %v2373, 4
      %v2376 = vshll.u32 %v2274, 16
      %v2378 = vrot.slane %v2376, 5
      %v2379 = vor.u32 %v2375, %v2378
      %v2380 = vrot.slane %v2379, 4
      %v2382 = vshll.u32 %v2275, 16
      %v2384 = vrot.slane %v2382, 5
      %v2385 = vsel %vm239, %v2380, %v2384
      %v2386 = vshrl.u32 %v2275, 16
      %v2388 = vrot.slane %v2386, 4
      %v2389 = vor.u32 %v2388, %v2384
      %v2390 = vrot.slane %v2389, 4
      %v2392 = vshll.u32 %v2276, 16
      %v2394 = vrot.slane %v2392, 5
      %v2395 = vsel %vm239, %v2390, %v2394
      %v2396 = vshrl.u32 %v2276, 16
      %v2398 = vrot.slane %v2396, 4
      %v2399 = vor.u32 %v2398, %v2394
      %v2400 = vrot.slane %v2399, 4
      %v2402 = vshll.u32 %v2277, 16
      %v2404 = vrot.slane %v2402, 5
      %v2405 = vsel %vm239, %v2400, %v2404
      %v2406 = vshrl.u32 %v2277, 16
      %v2408 = vrot.slane %v2406, 4
      %v2409 = vor.u32 %v2408, %v2404
      %v2410 = vrot.slane %v2409, 4
      %v2412 = vshll.u32 %v2278, 16
      %v2414 = vrot.slane %v2412, 5
      %v2415 = vsel %vm239, %v2410, %v2414
      %v2417 = vshrl.u32 %v2279, 16
      %v2419 = vrot.slane %v2417, 4
      %v2420 = vshll.u32 %v2279, 16
      %v2422 = vrot.slane %v2420, 5
      %v2423 = vor.u32 %v2419, %v2422
      %v2424 = vrot.slane %v2423, 4
      %v2426 = vshll.u32 %v2280, 16
      %v2428 = vrot.slane %v2426, 5
      %v2429 = vsel %vm239, %v2424, %v2428
      %v2430 = vshrl.u32 %v2280, 16
      %v2432 = vrot.slane %v2430, 4
      %v2433 = vor.u32 %v2432, %v2428
      %v2434 = vrot.slane %v2433, 4
      %v2436 = vshll.u32 %v2281, 16
      %v2438 = vrot.slane %v2436, 5
      %v2439 = vsel %vm239, %v2434, %v2438
      %v2440 = vshrl.u32 %v2281, 16
      %v2442 = vrot.slane %v2440, 4
      %v2443 = vor.u32 %v2442, %v2438
      %v2444 = vrot.slane %v2443, 4
      %v2446 = vshll.u32 %v2282, 16
      %v2448 = vrot.slane %v2446, 5
      %v2449 = vsel %vm239, %v2444, %v2448
      %v2450 = vshrl.u32 %v2282, 16
      %v2452 = vrot.slane %v2450, 4
      %v2453 = vor.u32 %v2452, %v2448
      %v2454 = vrot.slane %v2453, 4
      %v2456 = vshll.u32 %v2283, 16
      %v2458 = vrot.slane %v2456, 5
      %v2459 = vsel %vm239, %v2454, %v2458
      %s2460 = scalar_lea.vmem %s1, 448
      %v2461 = vld [vmem:[%s2460] sm:$0xf]
      %v2462 = vld [vmem:[%s2460 + $0x4] sm:$0xf]
      %v2463 = vld [vmem:[%s2460 + $0x8] sm:$0xf]
      %v2464 = vld [vmem:[%s2460 + $0xc] sm:$0xf]
      %v2465 = vld [vmem:[%s2460 + $0x10] sm:$0xf]
      %v2466 = vld [vmem:[%s2460 + $0x14] sm:$0xf]
      %v2467 = vld [vmem:[%s2460 + $0x18] sm:$0xf]
      %v2468 = vld [vmem:[%s2460 + $0x1c] sm:$0xf]
      %v2469 = vld [vmem:[%s2460 + $0x20] sm:$0xf]
      %v2470 = vld [vmem:[%s2460 + $0x24] sm:$0xf]
      %v2471 = vld [vmem:[%s2460 + $0x28] sm:$0xf]
      %v2472 = vld [vmem:[%s2460 + $0x2c] sm:$0xf]
      %v2473 = vld [vmem:[%s2460 + $0x30] sm:$0xf]
      %v2474 = vld [vmem:[%s2460 + $0x34] sm:$0xf]
      %v2475 = vld [vmem:[%s2460 + $0x38] sm:$0xf]
      %v2476 = vld [vmem:[%s2460 + $0x3c] sm:$0xf]
      %v2477 = vunpack.c.l.b16 %v2297
      %v2478 = vunpack.c.l.b16 %v2307
      %v2479 = vunpack.c.l.b16 %v2317
      %v2480 = vunpack.c.l.b16 %v2327
      %v2481 = vunpack.c.l.b16 %v2341
      %v2482 = vunpack.c.l.b16 %v2351
      %v2483 = vunpack.c.l.b16 %v2361
      %v2484 = vunpack.c.l.b16 %v2371
      %v2485 = vunpack.c.l.b16 %v2385
      %v2486 = vunpack.c.l.b16 %v2395
      %v2487 = vunpack.c.l.b16 %v2405
      %v2488 = vunpack.c.l.b16 %v2415
      %v2489 = vunpack.c.l.b16 %v2429
      %v2490 = vunpack.c.l.b16 %v2439
      %v2491 = vunpack.c.l.b16 %v2449
      %v2492 = vunpack.c.l.b16 %v2459
      %v2493 = vpack.c.b16 %v2478, %v2477
      %v2494 = vpack.c.b16 %v2480, %v2479
      %v2495 = vpack.c.b16 %v2482, %v2481
      %v2496 = vpack.c.b16 %v2484, %v2483
      %v2497 = vpack.c.b16 %v2486, %v2485
      %v2498 = vpack.c.b16 %v2488, %v2487
      %v2499 = vpack.c.b16 %v2490, %v2489
      %v2500 = vpack.c.b16 %v2492, %v2491
      %v2525 = vunpack.c.l.b16 %v2461
      %v2526 = vunpack.c.l.b16 %v2462
      %v2527 = vunpack.c.l.b16 %v2463
      %v2528 = vunpack.c.l.b16 %v2464
      %v2529 = vunpack.c.l.b16 %v2465
      %v2530 = vunpack.c.l.b16 %v2466
      %v2531 = vunpack.c.l.b16 %v2467
      %v2532 = vunpack.c.l.b16 %v2468
      %v2533 = vunpack.c.l.b16 %v2469
      %v2534 = vunpack.c.l.b16 %v2470
      %v2535 = vunpack.c.l.b16 %v2471
      %v2536 = vunpack.c.l.b16 %v2472
      %v2537 = vunpack.c.l.b16 %v2473
      %v2538 = vunpack.c.l.b16 %v2474
      %v2539 = vunpack.c.l.b16 %v2475
      %v2540 = vunpack.c.l.b16 %v2476
      %v2541 = vpack.c.b16 %v2526, %v2525
      %v2542 = vpack.c.b16 %v2528, %v2527
      %v2543 = vpack.c.b16 %v2530, %v2529
      %v2544 = vpack.c.b16 %v2532, %v2531
      %v2545 = vpack.c.b16 %v2534, %v2533
      %v2546 = vpack.c.b16 %v2536, %v2535
      %v2547 = vpack.c.b16 %v2538, %v2537
      %v2548 = vpack.c.b16 %v2540, %v2539
      %2557 = vmatprep.subr.bf16.mxu0 0
      %2558 = vmatpush1.bf16.msra.mxu0 %v2548
      %2559 = vmatprep.subr.bf16.mxu0 0
      %2560 = vmatpush1.bf16.msra.mxu0 %v2547
      %2561 = vmatprep.subr.bf16.mxu0 0
      %2562 = vmatpush1.bf16.msra.mxu0 %v2546
      %2563 = vmatprep.subr.bf16.mxu0 0
      %2564 = vmatpush1.bf16.msra.mxu0 %v2545
      %2565 = vmatprep.subr.bf16.mxu0 0
      %2566 = vmatpush1.bf16.msra.mxu0 %v2544
      %2567 = vmatprep.subr.bf16.mxu0 0
      %2568 = vmatpush1.bf16.msra.mxu0 %v2543
      %2569 = vmatprep.subr.bf16.mxu0 0
      %2570 = vmatpush1.bf16.msra.mxu0 %v2542
      %2571 = vmatprep.subr.bf16.mxu0 0
      %2572 = vmatpush1.bf16.msra.mxu0 %v2541
      %2573 = vmatprep.subr.bf16.mxu0 0
      %2574 = vmatpush2.bf16.msra.mxu0 0
      %2575 = vmatprep.subr.bf16.mxu0 0
      %2576 = vmatpush2.bf16.msra.mxu0 0
      %2577 = vmatprep.subr.bf16.mxu0 0
      %2578 = vmatpush2.bf16.msra.mxu0 0
      %2579 = vmatprep.subr.bf16.mxu0 0
      %2580 = vmatpush2.bf16.msra.mxu0 0
      %2581 = vmatprep.subr.bf16.mxu0 0
      %2582 = vmatpush2.bf16.msra.mxu0 0
      %2583 = vmatprep.subr.bf16.mxu0 0
      %2584 = vmatpush2.bf16.msra.mxu0 0
      %2585 = vmatprep.subr.bf16.mxu0 0
      %2586 = vmatpush2.bf16.msra.mxu0 0
      %2587 = vmatprep.subr.bf16.mxu0 0
      %2588 = vmatpush2.bf16.msra.mxu0 0
      %2589 = vmatprep.mubr.bf16.mxu0 0
      %2590 = vmatmul.mubr.bf16.gmra.mxu0 %v2493
      %v2591 = vpop.f32.mrf.mxu0
      %v2592 = vadd.f32 0.0, %v2591
      %v2593 = vpop.f32.mrf.mxu0
      %v2594 = vpop.f32.mrf.mxu0
      %v2595 = vadd.f32 0.0, %v2594
      %v2596 = vpop.f32.mrf.mxu0
      %2597 = vmatprep.mubr.bf16.mxu0 0
      %2598 = vmatmul.mubr.bf16.gmra.mxu0 %v2494
      %v2599 = vpop.f32.mrf.mxu0
      %v2600 = vadd.f32 0.0, %v2599
      %v2601 = vpop.f32.mrf.mxu0
      %v2602 = vpop.f32.mrf.mxu0
      %v2603 = vadd.f32 0.0, %v2602
      %v2604 = vpop.f32.mrf.mxu0
      %2605 = vmatprep.mubr.bf16.mxu0 0
      %2606 = vmatmul.mubr.bf16.gmra.mxu0 %v2495
      %v2607 = vpop.f32.mrf.mxu0
      %v2608 = vadd.f32 0.0, %v2607
      %v2609 = vpop.f32.mrf.mxu0
      %v2610 = vpop.f32.mrf.mxu0
      %v2611 = vadd.f32 0.0, %v2610
      %v2612 = vpop.f32.mrf.mxu0
      %2613 = vmatprep.mubr.bf16.mxu0 0
      %2614 = vmatmul.mubr.bf16.gmra.mxu0 %v2496
      %v2615 = vpop.f32.mrf.mxu0
      %v2616 = vadd.f32 0.0, %v2615
      %v2617 = vpop.f32.mrf.mxu0
      %v2618 = vpop.f32.mrf.mxu0
      %v2619 = vadd.f32 0.0, %v2618
      %v2620 = vpop.f32.mrf.mxu0
      %2621 = vmatprep.mubr.bf16.mxu0 0
      %2622 = vmatmul.mubr.bf16.gmra.mxu0 %v2497
      %v2623 = vpop.f32.mrf.mxu0
      %v2624 = vadd.f32 0.0, %v2623
      %v2625 = vpop.f32.mrf.mxu0
      %v2626 = vpop.f32.mrf.mxu0
      %v2627 = vadd.f32 0.0, %v2626
      %v2628 = vpop.f32.mrf.mxu0
      %2629 = vmatprep.mubr.bf16.mxu0 0
      %2630 = vmatmul.mubr.bf16.gmra.mxu0 %v2498
      %v2631 = vpop.f32.mrf.mxu0
      %v2632 = vadd.f32 0.0, %v2631
      %v2633 = vpop.f32.mrf.mxu0
      %v2634 = vpop.f32.mrf.mxu0
      %v2635 = vadd.f32 0.0, %v2634
      %v2636 = vpop.f32.mrf.mxu0
      %2637 = vmatprep.mubr.bf16.mxu0 0
      %2638 = vmatmul.mubr.bf16.gmra.mxu0 %v2499
      %v2639 = vpop.f32.mrf.mxu0
      %v2640 = vadd.f32 0.0, %v2639
      %v2641 = vpop.f32.mrf.mxu0
      %v2642 = vpop.f32.mrf.mxu0
      %v2643 = vadd.f32 0.0, %v2642
      %v2644 = vpop.f32.mrf.mxu0
      %2645 = vmatprep.mubr.bf16.mxu0 0
      %2646 = vmatmul.mubr.bf16.gmra.mxu0 %v2500
      %v2647 = vpop.f32.mrf.mxu0
      %v2648 = vadd.f32 0.0, %v2647
      %v2649 = vpop.f32.mrf.mxu0
      %v2650 = vpop.f32.mrf.mxu0
      %v2651 = vadd.f32 0.0, %v2650
      %v2652 = vpop.f32.mrf.mxu0
      %2653 = vdwg.mxu0
      %v2654 = vadd.f32 %v2248, %v2592
      %v2655 = vadd.f32 %v2249, %v2595
      %v2656 = vadd.f32 %v2250, %v2600
      %v2657 = vadd.f32 %v2251, %v2603
      %v2658 = vadd.f32 %v2252, %v2608
      %v2659 = vadd.f32 %v2253, %v2611
      %v2660 = vadd.f32 %v2254, %v2616
      %v2661 = vadd.f32 %v2255, %v2619
      %v2662 = vadd.f32 %v2256, %v2624
      %v2663 = vadd.f32 %v2257, %v2627
      %v2664 = vadd.f32 %v2258, %v2632
      %v2665 = vadd.f32 %v2259, %v2635
      %v2666 = vadd.f32 %v2260, %v2640
      %v2667 = vadd.f32 %v2261, %v2643
      %v2668 = vadd.f32 %v2262, %v2648
      %v2669 = vadd.f32 %v2263, %v2651
      %v2670 = vld [vmem:[%s2021] sm:$0xe]
      %v2671 = vld [vmem:[%s2021 + $0x14] sm:$0xe]
      %v2672 = vld [vmem:[%s2021 + $0x28] sm:$0xe]
      %v2673 = vld [vmem:[%s2021 + $0x3c] sm:$0xe]
      %v2694 = vrot.slane %v2670, 5
      %v2695 = vrot.slane %v2694, 4
      %v2696 = vrot.slane %v2265, 5
      %v2697 = vsel %vm817, %v2695, %v2696
      %v2698 = vrot.slane %v2696, 4
      %v2699 = vrot.slane %v2266, 5
      %v2700 = vsel %vm817, %v2698, %v2699
      %v2701 = vrot.slane %v2699, 4
      %v2702 = vrot.slane %v2267, 5
      %v2703 = vsel %vm817, %v2701, %v2702
      %v2704 = vrot.slane %v2702, 4
      %v2705 = vrot.slane %v2268, 5
      %v2706 = vsel %vm817, %v2704, %v2705
      %v2707 = vrot.slane %v2671, 5
      %v2708 = vrot.slane %v2707, 4
      %v2709 = vrot.slane %v2270, 5
      %v2710 = vsel %vm817, %v2708, %v2709
      %v2711 = vrot.slane %v2709, 4
      %v2712 = vrot.slane %v2271, 5
      %v2713 = vsel %vm817, %v2711, %v2712
      %v2714 = vrot.slane %v2712, 4
      %v2715 = vrot.slane %v2272, 5
      %v2716 = vsel %vm817, %v2714, %v2715
      %v2717 = vrot.slane %v2715, 4
      %v2718 = vrot.slane %v2273, 5
      %v2719 = vsel %vm817, %v2717, %v2718
      %v2720 = vrot.slane %v2672, 5
      %v2721 = vrot.slane %v2720, 4
      %v2722 = vrot.slane %v2275, 5
      %v2723 = vsel %vm817, %v2721, %v2722
      %v2724 = vrot.slane %v2722, 4
      %v2725 = vrot.slane %v2276, 5
      %v2726 = vsel %vm817, %v2724, %v2725
      %v2727 = vrot.slane %v2725, 4
      %v2728 = vrot.slane %v2277, 5
      %v2729 = vsel %vm817, %v2727, %v2728
      %v2730 = vrot.slane %v2728, 4
      %v2731 = vrot.slane %v2278, 5
      %v2732 = vsel %vm817, %v2730, %v2731
      %v2733 = vrot.slane %v2673, 5
      %v2734 = vrot.slane %v2733, 4
      %v2735 = vrot.slane %v2280, 5
      %v2736 = vsel %vm817, %v2734, %v2735
      %v2737 = vrot.slane %v2735, 4
      %v2738 = vrot.slane %v2281, 5
      %v2739 = vsel %vm817, %v2737, %v2738
      %v2740 = vrot.slane %v2738, 4
      %v2741 = vrot.slane %v2282, 5
      %v2742 = vsel %vm817, %v2740, %v2741
      %v2743 = vrot.slane %v2741, 4
      %v2744 = vrot.slane %v2283, 5
      %v2745 = vsel %vm817, %v2743, %v2744
      %s2746 = scalar_lea.vmem %s1, 512
      %v2747 = vld [vmem:[%s2746] sm:$0xf]
      %v2748 = vld [vmem:[%s2746 + $0x4] sm:$0xf]
      %v2749 = vld [vmem:[%s2746 + $0x8] sm:$0xf]
      %v2750 = vld [vmem:[%s2746 + $0xc] sm:$0xf]
      %v2751 = vld [vmem:[%s2746 + $0x10] sm:$0xf]
      %v2752 = vld [vmem:[%s2746 + $0x14] sm:$0xf]
      %v2753 = vld [vmem:[%s2746 + $0x18] sm:$0xf]
      %v2754 = vld [vmem:[%s2746 + $0x1c] sm:$0xf]
      %v2755 = vld [vmem:[%s2746 + $0x20] sm:$0xf]
      %v2756 = vld [vmem:[%s2746 + $0x24] sm:$0xf]
      %v2757 = vld [vmem:[%s2746 + $0x28] sm:$0xf]
      %v2758 = vld [vmem:[%s2746 + $0x2c] sm:$0xf]
      %v2759 = vld [vmem:[%s2746 + $0x30] sm:$0xf]
      %v2760 = vld [vmem:[%s2746 + $0x34] sm:$0xf]
      %v2761 = vld [vmem:[%s2746 + $0x38] sm:$0xf]
      %v2762 = vld [vmem:[%s2746 + $0x3c] sm:$0xf]
      %v2763 = vunpack.c.l.b16 %v2697
      %v2764 = vunpack.c.l.b16 %v2700
      %v2765 = vunpack.c.l.b16 %v2703
      %v2766 = vunpack.c.l.b16 %v2706
      %v2767 = vunpack.c.l.b16 %v2710
      %v2768 = vunpack.c.l.b16 %v2713
      %v2769 = vunpack.c.l.b16 %v2716
      %v2770 = vunpack.c.l.b16 %v2719
      %v2771 = vunpack.c.l.b16 %v2723
      %v2772 = vunpack.c.l.b16 %v2726
      %v2773 = vunpack.c.l.b16 %v2729
      %v2774 = vunpack.c.l.b16 %v2732
      %v2775 = vunpack.c.l.b16 %v2736
      %v2776 = vunpack.c.l.b16 %v2739
      %v2777 = vunpack.c.l.b16 %v2742
      %v2778 = vunpack.c.l.b16 %v2745
      %v2779 = vpack.c.b16 %v2764, %v2763
      %v2780 = vpack.c.b16 %v2766, %v2765
      %v2781 = vpack.c.b16 %v2768, %v2767
      %v2782 = vpack.c.b16 %v2770, %v2769
      %v2783 = vpack.c.b16 %v2772, %v2771
      %v2784 = vpack.c.b16 %v2774, %v2773
      %v2785 = vpack.c.b16 %v2776, %v2775
      %v2786 = vpack.c.b16 %v2778, %v2777
      %v2811 = vunpack.c.l.b16 %v2747
      %v2812 = vunpack.c.l.b16 %v2748
      %v2813 = vunpack.c.l.b16 %v2749
      %v2814 = vunpack.c.l.b16 %v2750
      %v2815 = vunpack.c.l.b16 %v2751
      %v2816 = vunpack.c.l.b16 %v2752
      %v2817 = vunpack.c.l.b16 %v2753
      %v2818 = vunpack.c.l.b16 %v2754
      %v2819 = vunpack.c.l.b16 %v2755
      %v2820 = vunpack.c.l.b16 %v2756
      %v2821 = vunpack.c.l.b16 %v2757
      %v2822 = vunpack.c.l.b16 %v2758
      %v2823 = vunpack.c.l.b16 %v2759
      %v2824 = vunpack.c.l.b16 %v2760
      %v2825 = vunpack.c.l.b16 %v2761
      %v2826 = vunpack.c.l.b16 %v2762
      %v2827 = vpack.c.b16 %v2812, %v2811
      %v2828 = vpack.c.b16 %v2814, %v2813
      %v2829 = vpack.c.b16 %v2816, %v2815
      %v2830 = vpack.c.b16 %v2818, %v2817
      %v2831 = vpack.c.b16 %v2820, %v2819
      %v2832 = vpack.c.b16 %v2822, %v2821
      %v2833 = vpack.c.b16 %v2824, %v2823
      %v2834 = vpack.c.b16 %v2826, %v2825
      %2843 = vmatprep.subr.bf16.mxu0 0
      %2844 = vmatpush1.bf16.msra.mxu0 %v2834
      %2845 = vmatprep.subr.bf16.mxu0 0
      %2846 = vmatpush1.bf16.msra.mxu0 %v2833
      %2847 = vmatprep.subr.bf16.mxu0 0
      %2848 = vmatpush1.bf16.msra.mxu0 %v2832
      %2849 = vmatprep.subr.bf16.mxu0 0
      %2850 = vmatpush1.bf16.msra.mxu0 %v2831
      %2851 = vmatprep.subr.bf16.mxu0 0
      %2852 = vmatpush1.bf16.msra.mxu0 %v2830
      %2853 = vmatprep.subr.bf16.mxu0 0
      %2854 = vmatpush1.bf16.msra.mxu0 %v2829
      %2855 = vmatprep.subr.bf16.mxu0 0
      %2856 = vmatpush1.bf16.msra.mxu0 %v2828
      %2857 = vmatprep.subr.bf16.mxu0 0
      %2858 = vmatpush1.bf16.msra.mxu0 %v2827
      %2859 = vmatprep.subr.bf16.mxu0 0
      %2860 = vmatpush2.bf16.msra.mxu0 0
      %2861 = vmatprep.subr.bf16.mxu0 0
      %2862 = vmatpush2.bf16.msra.mxu0 0
      %2863 = vmatprep.subr.bf16.mxu0 0
      %2864 = vmatpush2.bf16.msra.mxu0 0
      %2865 = vmatprep.subr.bf16.mxu0 0
      %2866 = vmatpush2.bf16.msra.mxu0 0
      %2867 = vmatprep.subr.bf16.mxu0 0
      %2868 = vmatpush2.bf16.msra.mxu0 0
      %2869 = vmatprep.subr.bf16.mxu0 0
      %2870 = vmatpush2.bf16.msra.mxu0 0
      %2871 = vmatprep.subr.bf16.mxu0 0
      %2872 = vmatpush2.bf16.msra.mxu0 0
      %2873 = vmatprep.subr.bf16.mxu0 0
      %2874 = vmatpush2.bf16.msra.mxu0 0
      %2875 = vmatprep.mubr.bf16.mxu0 0
      %2876 = vmatmul.mubr.bf16.gmra.mxu0 %v2779
      %v2877 = vpop.f32.mrf.mxu0
      %v2878 = vadd.f32 0.0, %v2877
      %v2879 = vpop.f32.mrf.mxu0
      %v2880 = vpop.f32.mrf.mxu0
      %v2881 = vadd.f32 0.0, %v2880
      %v2882 = vpop.f32.mrf.mxu0
      %2883 = vmatprep.mubr.bf16.mxu0 0
      %2884 = vmatmul.mubr.bf16.gmra.mxu0 %v2780
      %v2885 = vpop.f32.mrf.mxu0
      %v2886 = vadd.f32 0.0, %v2885
      %v2887 = vpop.f32.mrf.mxu0
      %v2888 = vpop.f32.mrf.mxu0
      %v2889 = vadd.f32 0.0, %v2888
      %v2890 = vpop.f32.mrf.mxu0
      %2891 = vmatprep.mubr.bf16.mxu0 0
      %2892 = vmatmul.mubr.bf16.gmra.mxu0 %v2781
      %v2893 = vpop.f32.mrf.mxu0
      %v2894 = vadd.f32 0.0, %v2893
      %v2895 = vpop.f32.mrf.mxu0
      %v2896 = vpop.f32.mrf.mxu0
      %v2897 = vadd.f32 0.0, %v2896
      %v2898 = vpop.f32.mrf.mxu0
      %2899 = vmatprep.mubr.bf16.mxu0 0
      %2900 = vmatmul.mubr.bf16.gmra.mxu0 %v2782
      %v2901 = vpop.f32.mrf.mxu0
      %v2902 = vadd.f32 0.0, %v2901
      %v2903 = vpop.f32.mrf.mxu0
      %v2904 = vpop.f32.mrf.mxu0
      %v2905 = vadd.f32 0.0, %v2904
      %v2906 = vpop.f32.mrf.mxu0
      %2907 = vmatprep.mubr.bf16.mxu0 0
      %2908 = vmatmul.mubr.bf16.gmra.mxu0 %v2783
      %v2909 = vpop.f32.mrf.mxu0
      %v2910 = vadd.f32 0.0, %v2909
      %v2911 = vpop.f32.mrf.mxu0
      %v2912 = vpop.f32.mrf.mxu0
      %v2913 = vadd.f32 0.0, %v2912
      %v2914 = vpop.f32.mrf.mxu0
      %2915 = vmatprep.mubr.bf16.mxu0 0
      %2916 = vmatmul.mubr.bf16.gmra.mxu0 %v2784
      %v2917 = vpop.f32.mrf.mxu0
      %v2918 = vadd.f32 0.0, %v2917
      %v2919 = vpop.f32.mrf.mxu0
      %v2920 = vpop.f32.mrf.mxu0
      %v2921 = vadd.f32 0.0, %v2920
      %v2922 = vpop.f32.mrf.mxu0
      %2923 = vmatprep.mubr.bf16.mxu0 0
      %2924 = vmatmul.mubr.bf16.gmra.mxu0 %v2785
      %v2925 = vpop.f32.mrf.mxu0
      %v2926 = vadd.f32 0.0, %v2925
      %v2927 = vpop.f32.mrf.mxu0
      %v2928 = vpop.f32.mrf.mxu0
      %v2929 = vadd.f32 0.0, %v2928
      %v2930 = vpop.f32.mrf.mxu0
      %2931 = vmatprep.mubr.bf16.mxu0 0
      %2932 = vmatmul.mubr.bf16.gmra.mxu0 %v2786
      %v2933 = vpop.f32.mrf.mxu0
      %v2934 = vadd.f32 0.0, %v2933
      %v2935 = vpop.f32.mrf.mxu0
      %v2936 = vpop.f32.mrf.mxu0
      %v2937 = vadd.f32 0.0, %v2936
      %v2938 = vpop.f32.mrf.mxu0
      %2939 = vdwg.mxu0
      %v2940 = vadd.f32 %v2654, %v2878
      %v2941 = vadd.f32 %v2655, %v2881
      %v2942 = vadd.f32 %v2656, %v2886
      %v2943 = vadd.f32 %v2657, %v2889
      %v2944 = vadd.f32 %v2658, %v2894
      %v2945 = vadd.f32 %v2659, %v2897
      %v2946 = vadd.f32 %v2660, %v2902
      %v2947 = vadd.f32 %v2661, %v2905
      %v2948 = vadd.f32 %v2662, %v2910
      %v2949 = vadd.f32 %v2663, %v2913
      %v2950 = vadd.f32 %v2664, %v2918
      %v2951 = vadd.f32 %v2665, %v2921
      %v2952 = vadd.f32 %v2666, %v2926
      %v2953 = vadd.f32 %v2667, %v2929
      %v2954 = vadd.f32 %v2668, %v2934
      %v2955 = vadd.f32 %v2669, %v2937
      %v2956 = vld [vmem:[%s2] sm:$0x1]
      %v2958 = vlaneseq
      %v2959 = vshrl.u32 %v2958, 7
      %v2960 = vsub.s32 0, %v2959
      %v2961 = vrot.slane %v2956, %v2960
      %v2963 = vadd.f32 %v2940, %v2961
      %v2964 = vadd.f32 %v2941, %v2961
      %v2965 = vadd.f32 %v2942, %v2961
      %v2966 = vadd.f32 %v2943, %v2961
      %v2967 = vadd.f32 %v2944, %v2961
      %v2968 = vadd.f32 %v2945, %v2961
      %v2969 = vadd.f32 %v2946, %v2961
      %v2970 = vadd.f32 %v2947, %v2961
      %v2971 = vadd.f32 %v2948, %v2961
      %v2972 = vadd.f32 %v2949, %v2961
      %v2973 = vadd.f32 %v2950, %v2961
      %v2974 = vadd.f32 %v2951, %v2961
      %v2975 = vadd.f32 %v2952, %v2961
      %v2976 = vadd.f32 %v2953, %v2961
      %v2977 = vadd.f32 %v2954, %v2961
      %v2978 = vadd.f32 %v2955, %v2961
      %v2979 = vmax.f32 %v2963, 0.0
      %v2980 = vmax.f32 %v2964, 0.0
      %v2981 = vmax.f32 %v2965, 0.0
      %v2982 = vmax.f32 %v2966, 0.0
      %v2983 = vmax.f32 %v2967, 0.0
      %v2984 = vmax.f32 %v2968, 0.0
      %v2985 = vmax.f32 %v2969, 0.0
      %v2986 = vmax.f32 %v2970, 0.0
      %v2987 = vmax.f32 %v2971, 0.0
      %v2988 = vmax.f32 %v2972, 0.0
      %v2989 = vmax.f32 %v2973, 0.0
      %v2990 = vmax.f32 %v2974, 0.0
      %v2991 = vmax.f32 %v2975, 0.0
      %v2992 = vmax.f32 %v2976, 0.0
      %v2993 = vmax.f32 %v2977, 0.0
      %v2994 = vmax.f32 %v2978, 0.0
      %v2995 = vpack.c.bf16 %v2980, %v2979
      %v2996 = vpack.c.bf16 %v2982, %v2981
      %v2997 = vpack.c.bf16 %v2984, %v2983
      %v2998 = vpack.c.bf16 %v2986, %v2985
      %v2999 = vpack.c.bf16 %v2988, %v2987
      %v3000 = vpack.c.bf16 %v2990, %v2989
      %v3001 = vpack.c.bf16 %v2992, %v2991
      %v3002 = vpack.c.bf16 %v2994, %v2993
      %v3011 = vunpack.c.l.b16 %v2995
      %v3012 = vunpack.c.h.b16 %v2995
      %v3013 = vunpack.c.l.b16 %v2996
      %v3014 = vunpack.c.h.b16 %v2996
      %v3015 = vunpack.c.l.b16 %v2997
      %v3016 = vunpack.c.h.b16 %v2997
      %v3017 = vunpack.c.l.b16 %v2998
      %v3018 = vunpack.c.h.b16 %v2998
      %v3019 = vunpack.c.l.b16 %v2999
      %v3020 = vunpack.c.h.b16 %v2999
      %v3021 = vunpack.c.l.b16 %v3000
      %v3022 = vunpack.c.h.b16 %v3000
      %v3023 = vunpack.c.l.b16 %v3001
      %v3024 = vunpack.c.h.b16 %v3001
      %v3025 = vunpack.c.l.b16 %v3002
      %v3026 = vunpack.c.h.b16 %v3002
      %v3027 = vpack.c.b16 %v3011, %v3011
      %v3028 = vpack.c.b16 %v3012, %v3012
      %v3029 = vpack.c.b16 %v3013, %v3013
      %v3030 = vpack.c.b16 %v3014, %v3014
      %v3031 = vpack.c.b16 %v3015, %v3015
      %v3032 = vpack.c.b16 %v3016, %v3016
      %v3033 = vpack.c.b16 %v3017, %v3017
      %v3034 = vpack.c.b16 %v3018, %v3018
      %v3035 = vpack.c.b16 %v3019, %v3019
      %v3036 = vpack.c.b16 %v3020, %v3020
      %v3037 = vpack.c.b16 %v3021, %v3021
      %v3038 = vpack.c.b16 %v3022, %v3022
      %v3039 = vpack.c.b16 %v3023, %v3023
      %v3040 = vpack.c.b16 %v3024, %v3024
      %v3041 = vpack.c.b16 %v3025, %v3025
      %v3042 = vpack.c.b16 %v3026, %v3026
      %3059 = vst [vmem:[%s194] sm:$0xf] %v3027
      %3060 = vst [vmem:[%s194 + $0x4] sm:$0xf] %v3028
      %3061 = vst [vmem:[%s194 + $0x8] sm:$0xf] %v3029
      %3062 = vst [vmem:[%s194 + $0xc] sm:$0xf] %v3030
      %3063 = vst [vmem:[%s194 + $0x10] sm:$0xf] %v3031
      %3064 = vst [vmem:[%s194 + $0x14] sm:$0xf] %v3032
      %3065 = vst [vmem:[%s194 + $0x18] sm:$0xf] %v3033
      %3066 = vst [vmem:[%s194 + $0x1c] sm:$0xf] %v3034
      %3067 = vst [vmem:[%s194 + $0x20] sm:$0xf] %v3035
      %3068 = vst [vmem:[%s194 + $0x24] sm:$0xf] %v3036
      %3069 = vst [vmem:[%s194 + $0x28] sm:$0xf] %v3037
      %3070 = vst [vmem:[%s194 + $0x2c] sm:$0xf] %v3038
      %3071 = vst [vmem:[%s194 + $0x30] sm:$0xf] %v3039
      %3072 = vst [vmem:[%s194 + $0x34] sm:$0xf] %v3040
      %3073 = vst [vmem:[%s194 + $0x38] sm:$0xf] %v3041
      %3074 = vst [vmem:[%s194 + $0x3c] sm:$0xf] %v3042
      %s3075 = smul.u32 4, %s19
      %p3076 = scmp.lt.s32.totalorder %s18, 1
      %s3077 = scalar_select %p3076, %s18, 1
      %p3078 = scmp.lt.s32.totalorder %s3075, 31
      %s3079 = scalar_select %p3078, %s3075, 31
      %s3080 = smul.addr %s3079, 4
      %s3081 = smul.addr %s3077, 128
      %s3082 = sadd.s32 %s3080, %s3081
      %s3083 = smul.addr %s3082, 4
      %s3084 = scalar_lea.vmem %s3, %s3083
      // Predicated region
      $region33: #{unet_up_block_forward.5} parent=31 // pred_check
        %p3085 = pneg %p114
      $region34: #{unet_up_block_forward.5} parent=31 // pred_check_branch
        %3087 = sbr.rel (%p3085) target = $region36
      $region35: #{unet_up_block_forward.5} parent=31 // pred_region
        %s3088 = smul.u32 4, %s19
      $region36: #{unet_up_block_forward.5} parent=31 // pred_fallthru
        _
    $region32: #{unet_up_block_forward.5} parent=5 // pred_fallthru
      _
    %p3089 = scmp.le.s32.totalorder 2, %s9
    // Predicated region
    $region37: #{unet_up_block_forward.5} parent=5 // pred_check
      %p3090 = pneg %p3089
    $region38: #{unet_up_block_forward.5} parent=5 // pred_check_branch
      %3092 = sbr.rel (%p3090) target = $region40
    $region39: #{unet_up_block_forward.5} parent=5 // pred_region
      %s3093 = ssub.s32 %s9, 2
      // Predicated region
      $region41: #{unet_up_block_forward.5} parent=39 // pred_check
        %p3094 = pneg %p120
      $region42: #{unet_up_block_forward.5} parent=39 // pred_check_branch
        %3096 = sbr.rel (%p3094) target = $region44
      $region43: #{unet_up_block_forward.5} parent=39 // pred_region
        %s3097 = smul.u32 4, %s21
        %p3098 = scmp.lt.s32.totalorder %s20, 1
        %s3099 = scalar_select %p3098, %s20, 1
        %p3100 = scmp.lt.s32.totalorder %s3097, 31
        %s3101 = scalar_select %p3100, %s3097, 31
        %s3102 = smul.addr %s3101, 4
        %s3103 = smul.addr %s3099, 128
        %s3104 = sadd.s32 %s3102, %s3103
        %s3105 = smul.addr %s3104, 4
        %s3106 = scalar_lea.vmem %s3, %s3105
      $region44: #{unet_up_block_forward.5} parent=39 // pred_fallthru
        _
    $region40: #{unet_up_block_forward.5} parent=5 // pred_fallthru
      _
  $region6: #{unet_up_block_forward.5} parent=0 // loop_footer
    %s13 = sadd.s32 1, %s9
  $region7: #{unet_up_block_forward.5} parent=0 // loop_footer_branch
    %8 = sbr.rel target = $region3
  $region8: #{unet_up_block_forward.5} parent=0 // loop_exit
    _

</llo_original>
